<compile_context>
chip_gen: v6e
topology: v6e:2x2x1
jax: 0.10.0
libtpu: 0.0.40
codegen_flags: <defaults>
</compile_context>

<pallas_src>
import jax
import jax.numpy as jnp
from jax.experimental import pallas as pl
from jax.experimental.pallas import tpu as pltpu

H1 = 1000   # enc1 output width (logical)
H2 = 300    # enc2 output width (logical)

_LANE = 128
_SUBLANE = 16   # bf16 matmul operands pack 16 sublanes per vreg


def _round_up(n, m):
    return ((n + m - 1) // m) * m


def _pad2d(a, rows, cols, dtype):
    a = jnp.asarray(a, dtype)
    return jnp.pad(a, ((0, rows - a.shape[0]), (0, cols - a.shape[1])))


def _sigmoid_tanh(v):
    """sigmoid(v) = 0.5 * (tanh(0.5 * v) + 1) -- one EUP op, not exp + recip."""
    half = jnp.asarray(0.5, v.dtype)
    one = jnp.asarray(1.0, v.dtype)
    return half * (jnp.tanh(half * v) + one)


def _chip_config():
    """Returns (activation dtype, default max batch tile, VMEM budget bytes)."""
    try:
        kind = jax.devices()[0].device_kind.lower()
    except Exception:
        kind = ""
    if "v5" in kind:   # v5e/v5p: no bf16 VPU/EUP -> f32 activations, 128 MiB VMEM
        return jnp.float32, 512, 128 << 20
    if "v6" in kind:   # v6e: bf16 VPU/EUP, 128 MiB VMEM
        return jnp.bfloat16, 1024, 128 << 20
    if "v7" in kind:   # v7x: bf16 units but only 64 MiB VMEM per TensorCore
        return jnp.bfloat16, 256, 64 << 20
    return jnp.float32, 256, 64 << 20       # unknown chip: conservative


def _choose_batch_tile(B16, max_batch_tile):
    """Balanced, sublane-dense (multiple-of-16) batch tile.

    Guarantees >= 2 grid steps whenever the padded batch holds two 16-row
    tiles (so dimension_semantics=("parallel",) can engage both v7x
    TensorCores) and picks tiles that divide the batch evenly so no
    near-full ragged tile of redundant 3-layer compute is added.
    """
    n_tiles = pl.cdiv(B16, max_batch_tile)
    if B16 >= 2 * _SUBLANE:
        n_tiles = max(n_tiles, 2)
    return _round_up(pl.cdiv(B16, n_tiles), _SUBLANE)


def _make_kernel(act_dtype):
    def kernel(x_ref, w1_ref, b1_ref, w2_ref, b2_ref, wo_ref, bo_ref, out_ref):
        # enc1 + sigmoid: bf16 MXU operands, f32 accumulation; bias add,
        # nonlinearity and the cast to the next matmul-operand dtype are one
        # fused expression (no f32 intermediate round-trips through refs).
        h1 = jnp.dot(x_ref[...], w1_ref[...], preferred_element_type=jnp.float32)
        h1 = _sigmoid_tanh((h1 + b1_ref[...]).astype(act_dtype))
        # enc2 + sigmoid
        z = jnp.dot(h1.astype(jnp.bfloat16), w2_ref[...],
                    preferred_element_type=jnp.float32)
        z = _sigmoid_tanh((z + b2_ref[...]).astype(act_dtype))
        # out (no activation)
        y = jnp.dot(z.astype(jnp.bfloat16), wo_ref[...],
                    preferred_element_type=jnp.float32)
        out_ref[...] = y + bo_ref[...]
    return kernel


def daenet_forward(x, params, *, max_batch_tile=None, act_dtype=None):
    """x: (B, C, H, W) or (B, D).  Returns (B, C_out) float32."""
    B = x.shape[0]
    x2d = x.reshape(B, -1)                      # torch: x.view(B, -1)
    D = x2d.shape[1]
    w1, b1, w2, b2, wo, bo = params
    C_out = wo.shape[1]

    cfg_act, cfg_tile, vmem_budget = _chip_config()
    if act_dtype is None:
        act_dtype = cfg_act
    if max_batch_tile is None:
        max_batch_tile = cfg_tile

    # Lane-/sublane-dense padded dimensions.
    Dp  = _round_up(D, _LANE)
    H1p = _round_up(H1, _LANE)                  # 1000 -> 1024
    H2p = _round_up(H2, _LANE)                  # 300  -> 384
    Cp  = _round_up(C_out, _LANE)               # e.g. 10 -> 128
    B16 = _round_up(B, _SUBLANE)
    TB  = _choose_batch_tile(B16, max_batch_tile)
    Bp  = _round_up(B16, TB)

    # VMEM footprint: weights single-buffered (Buffered(1)), x/out tiles
    # double-buffered, rough allowance for per-tile f32/act intermediates.
    act_bytes = jnp.dtype(act_dtype).itemsize
    wt_bytes  = (Dp * H1p + H1p * H2p + H2p * Cp) * 2 + (H1p + H2p + Cp) * 4
    io_bytes  = 2 * TB * Dp * 2 + 2 * TB * Cp * 4
    tmp_bytes = TB * (H1p + H2p) * (4 + act_bytes)
    footprint = wt_bytes + io_bytes + tmp_bytes
    # TODO(synk): add a K-tiled fallback (second grid axis over Dp with an
    # f32 VMEM accumulator + pl.when init/finalize) for D large enough that
    # w1 cannot stay VMEM-resident (mainly v7x's 64 MiB budget).
    assert footprint + (8 << 20) <= vmem_budget, (
        f"DAENet weights/tiles ({footprint / 2**20:.1f} MiB) exceed the "
        f"{vmem_budget >> 20} MiB VMEM budget; shrink max_batch_tile or add "
        "a K-tiled path.")
    vmem_limit = int(min(vmem_budget, max(16 << 20, footprint + (8 << 20))))

    # Pad + cast operands.  bf16 for matmul operands, f32 for biases.
    x_p  = _pad2d(x2d, Bp, Dp, jnp.bfloat16)
    w1_p = _pad2d(w1, Dp, H1p, jnp.bfloat16)
    w2_p = _pad2d(w2, H1p, H2p, jnp.bfloat16)
    wo_p = _pad2d(wo, H2p, Cp, jnp.bfloat16)
    b1_p = _pad2d(jnp.reshape(b1, (1, -1)), 1, H1p, jnp.float32)
    b2_p = _pad2d(jnp.reshape(b2, (1, -1)), 1, H2p, jnp.float32)
    bo_p = _pad2d(jnp.reshape(bo, (1, -1)), 1, Cp, jnp.float32)

    const = lambda i: (0, 0)                    # weights stay VMEM-resident
    resident = dict(pipeline_mode=pl.Buffered(1))   # constant blocks: 1 buffer

    out_p = pl.pallas_call(
        _make_kernel(act_dtype),
        out_shape=jax.ShapeDtypeStruct((Bp, Cp), jnp.float32),
        grid_spec=pltpu.PrefetchScalarGridSpec(
            num_scalar_prefetch=0,
            grid=(Bp // TB,),
            in_specs=[
                pl.BlockSpec((TB, Dp), lambda i: (i, 0)),        # x tile (pipelined)
                pl.BlockSpec((Dp, H1p), const, **resident),      # w1
                pl.BlockSpec((1, H1p), const, **resident),       # b1
                pl.BlockSpec((H1p, H2p), const, **resident),     # w2
                pl.BlockSpec((1, H2p), const, **resident),       # b2
                pl.BlockSpec((H2p, Cp), const, **resident),      # wo
                pl.BlockSpec((1, Cp), const, **resident),        # bo
            ],
            out_specs=pl.BlockSpec((TB, Cp), lambda i: (i, 0)),
        ),
        compiler_params=pltpu.CompilerParams(
            dimension_semantics=("parallel",),   # v7x: both TCs split the batch
            vmem_limit_bytes=vmem_limit,
        ),
    )(x_p, w1_p, b1_p, w2_p, b2_p, wo_p, bo_p)

    return out_p[:B, :C_out]


def init_params(key, D, C):
    """Mimics nn.Linear's U(-1/sqrt(fan_in), 1/sqrt(fan_in)) init.
    Weights are stored as (in_features, out_features) so layers are x @ W + b."""
    def linear(k, fan_in, fan_out):
        kw, kb = jax.random.split(k)
        bound = 1.0 / jnp.sqrt(fan_in)
        w = jax.random.uniform(kw, (fan_in, fan_out), jnp.float32, -bound, bound)
        b = jax.random.uniform(kb, (1, fan_out), jnp.float32, -bound, bound)
        return w, b

    k1, k2, k3 = jax.random.split(key, 3)
    w1, b1 = linear(k1, D, H1)    # enc1
    w2, b2 = linear(k2, H1, H2)   # enc2
    wo, bo = linear(k3, H2, C)    # out
    # NOTE: dec1/dec2 exist in the module but are unused by forward();
    # they are intentionally not materialized here.
    return (w1, b1, w2, b2, wo, bo)


def reference_forward(x, params):
    """Pure-JAX f32 reference (original module semantics)."""
    B = x.shape[0]
    x2d = x.reshape(B, -1).astype(jnp.float32)
    w1, b1, w2, b2, wo, bo = params
    h1 = jax.nn.sigmoid(x2d @ w1 + b1)
    z = jax.nn.sigmoid(h1 @ w2 + b2)
    return z @ wo + bo


def reference_forward_matched(x, params, act_dtype):
    """Pure-JAX reference mirroring the kernel's exact dtype/op sequence."""
    B = x.shape[0]
    x2d = x.reshape(B, -1)
    w1, b1, w2, b2, wo, bo = params
    xb = jnp.asarray(x2d, jnp.bfloat16)
    h1 = jnp.dot(xb, jnp.asarray(w1, jnp.bfloat16),
                 preferred_element_type=jnp.float32)
    h1 = _sigmoid_tanh((h1 + jnp.reshape(b1, (1, -1))).astype(act_dtype))
    z = jnp.dot(h1.astype(jnp.bfloat16), jnp.asarray(w2, jnp.bfloat16),
                preferred_element_type=jnp.float32)
    z = _sigmoid_tanh((z + jnp.reshape(b2, (1, -1))).astype(act_dtype))
    y = jnp.dot(z.astype(jnp.bfloat16), jnp.asarray(wo, jnp.bfloat16),
                preferred_element_type=jnp.float32)
    return y + jnp.reshape(bo, (1, -1))


if __name__ == "__main__":
    key = jax.random.PRNGKey(0)
    kx, kp = jax.random.split(key)

    # Small, forward-consistent shapes: NCHW input (2, 4, 16, 16) -> D = 1024.
    B, Cin, Hs, Ws = 2, 4, 16, 16
    D = Cin * Hs * Ws
    C_out = 10

    x = jax.random.normal(kx, (B, Cin, Hs, Ws), jnp.float32)
    params = init_params(kp, D, C_out)

    y = jax.block_until_ready(daenet_forward(x, params))
    assert y.shape == (B, C_out)

    # Check vs. a reference with the same bf16/f32 + tanh-sigmoid numerics.
    act_dtype, _, _ = _chip_config()
    y_matched = reference_forward_matched(x, params, act_dtype)
    assert jnp.allclose(y, y_matched, atol=1e-2, rtol=1e-2), \
        float(jnp.max(jnp.abs(y - y_matched)))

    # Loose sanity check vs. the full-f32 module semantics
    # (difference is just bf16 operand/activation quantization).
    y_f32 = reference_forward(x, params)
    assert jnp.allclose(y, y_f32, atol=8e-2, rtol=8e-2), \
        float(jnp.max(jnp.abs(y - y_f32)))

    print("KERNEL_OK")
</pallas_src>

<mosaic_0001>
module attributes {stable_mosaic.version = 11 : i64} {
  func.func @kernel(%arg0: i32, %arg1: memref<16x1024xbf16, #tpu.memory_space<vmem>>, %arg2: memref<1024x1024xbf16, #tpu.memory_space<vmem>>, %arg3: memref<1x1024xf32, #tpu.memory_space<vmem>>, %arg4: memref<1024x384xbf16, #tpu.memory_space<vmem>>, %arg5: memref<1x384xf32, #tpu.memory_space<vmem>>, %arg6: memref<384x128xbf16, #tpu.memory_space<vmem>>, %arg7: memref<1x128xf32, #tpu.memory_space<vmem>>, %arg8: memref<16x128xf32, #tpu.memory_space<vmem>>) attributes {dimension_semantics = [#tpu.dimension_semantics<parallel>], iteration_bounds = array<i64: 1>, scalar_prefetch = 0 : i64, scratch_operands = 0 : i64, tpu.core_type = #tpu.core_type<tc>, window_params = [{transform_indices = @transform_0, window_bounds = array<i64: 16, 1024>}, {pipeline_mode = #tpu.pipeline_mode<synchronous>, transform_indices = @transform_1, window_bounds = array<i64: 1024, 1024>}, {pipeline_mode = #tpu.pipeline_mode<synchronous>, transform_indices = @transform_2, window_bounds = array<i64: 1, 1024>}, {pipeline_mode = #tpu.pipeline_mode<synchronous>, transform_indices = @transform_3, window_bounds = array<i64: 1024, 384>}, {pipeline_mode = #tpu.pipeline_mode<synchronous>, transform_indices = @transform_4, window_bounds = array<i64: 1, 384>}, {pipeline_mode = #tpu.pipeline_mode<synchronous>, transform_indices = @transform_5, window_bounds = array<i64: 384, 128>}, {pipeline_mode = #tpu.pipeline_mode<synchronous>, transform_indices = @transform_6, window_bounds = array<i64: 1, 128>}, {transform_indices = @transform_7, window_bounds = array<i64: 16, 128>}]} {
    %c0 = arith.constant 0 : index
    %c0_0 = arith.constant 0 : index
    %0 = vector.load %arg1[%c0, %c0_0] : memref<16x1024xbf16, #tpu.memory_space<vmem>>, vector<16x1024xbf16>
    %c0_1 = arith.constant 0 : index
    %c0_2 = arith.constant 0 : index
    %1 = vector.load %arg2[%c0_1, %c0_2] : memref<1024x1024xbf16, #tpu.memory_space<vmem>>, vector<1024x1024xbf16>
    %cst = arith.constant dense<0.000000e+00> : vector<16x1024xf32>
    %2 = tpu.matmul %0, %1, %cst {dimension_numbers = #tpu.dot_dimension_numbers<[1], [0], [0], [1], [0, 0, 1, 1], [], []>} : vector<16x1024xbf16>, vector<1024x1024xbf16>, vector<16x1024xf32> -> vector<16x1024xf32>
    %c0_3 = arith.constant 0 : index
    %c0_4 = arith.constant 0 : index
    %3 = vector.load %arg3[%c0_3, %c0_4] : memref<1x1024xf32, #tpu.memory_space<vmem>>, vector<1x1024xf32>
    %4 = vector.broadcast %3 : vector<1x1024xf32> to vector<16x1024xf32>
    %5 = arith.addf %2, %4 : vector<16x1024xf32>
    %cst_5 = arith.constant 5.000000e-01 : f32
    %6 = vector.broadcast %cst_5 : f32 to vector<16x1024xf32>
    %7 = arith.mulf %6, %5 : vector<16x1024xf32>
    %8 = math.tanh %7 : vector<16x1024xf32>
    %cst_6 = arith.constant 1.000000e+00 : f32
    %9 = vector.broadcast %cst_6 : f32 to vector<16x1024xf32>
    %10 = arith.addf %8, %9 : vector<16x1024xf32>
    %cst_7 = arith.constant 5.000000e-01 : f32
    %11 = vector.broadcast %cst_7 : f32 to vector<16x1024xf32>
    %12 = arith.mulf %11, %10 : vector<16x1024xf32>
    %13 = arith.truncf %12 : vector<16x1024xf32> to vector<16x1024xbf16>
    %c0_8 = arith.constant 0 : index
    %c0_9 = arith.constant 0 : index
    %14 = vector.load %arg4[%c0_8, %c0_9] : memref<1024x384xbf16, #tpu.memory_space<vmem>>, vector<1024x384xbf16>
    %cst_10 = arith.constant dense<0.000000e+00> : vector<16x384xf32>
    %15 = tpu.matmul %13, %14, %cst_10 {dimension_numbers = #tpu.dot_dimension_numbers<[1], [0], [0], [1], [0, 0, 1, 1], [], []>} : vector<16x1024xbf16>, vector<1024x384xbf16>, vector<16x384xf32> -> vector<16x384xf32>
    %c0_11 = arith.constant 0 : index
    %c0_12 = arith.constant 0 : index
    %16 = vector.load %arg5[%c0_11, %c0_12] : memref<1x384xf32, #tpu.memory_space<vmem>>, vector<1x384xf32>
    %17 = vector.broadcast %16 : vector<1x384xf32> to vector<16x384xf32>
    %18 = arith.addf %15, %17 : vector<16x384xf32>
    %cst_13 = arith.constant 5.000000e-01 : f32
    %19 = vector.broadcast %cst_13 : f32 to vector<16x384xf32>
    %20 = arith.mulf %19, %18 : vector<16x384xf32>
    %21 = math.tanh %20 : vector<16x384xf32>
    %cst_14 = arith.constant 1.000000e+00 : f32
    %22 = vector.broadcast %cst_14 : f32 to vector<16x384xf32>
    %23 = arith.addf %21, %22 : vector<16x384xf32>
    %cst_15 = arith.constant 5.000000e-01 : f32
    %24 = vector.broadcast %cst_15 : f32 to vector<16x384xf32>
    %25 = arith.mulf %24, %23 : vector<16x384xf32>
    %26 = arith.truncf %25 : vector<16x384xf32> to vector<16x384xbf16>
    %c0_16 = arith.constant 0 : index
    %c0_17 = arith.constant 0 : index
    %27 = vector.load %arg6[%c0_16, %c0_17] : memref<384x128xbf16, #tpu.memory_space<vmem>>, vector<384x128xbf16>
    %cst_18 = arith.constant dense<0.000000e+00> : vector<16x128xf32>
    %28 = tpu.matmul %26, %27, %cst_18 {dimension_numbers = #tpu.dot_dimension_numbers<[1], [0], [0], [1], [0, 0, 1, 1], [], []>} : vector<16x384xbf16>, vector<384x128xbf16>, vector<16x128xf32> -> vector<16x128xf32>
    %c0_19 = arith.constant 0 : index
    %c0_20 = arith.constant 0 : index
    %29 = vector.load %arg7[%c0_19, %c0_20] : memref<1x128xf32, #tpu.memory_space<vmem>>, vector<1x128xf32>
    %30 = vector.broadcast %29 : vector<1x128xf32> to vector<16x128xf32>
    %31 = arith.addf %28, %30 : vector<16x128xf32>
    %c0_21 = arith.constant 0 : index
    %c0_22 = arith.constant 0 : index
    %32 = vector.load %arg8[%c0_21, %c0_22] : memref<16x128xf32, #tpu.memory_space<vmem>>, vector<16x128xf32>
    tpu.vector_store %arg8[%c0_21, %c0_22], %31 {strides = array<i32>} : memref<16x128xf32, #tpu.memory_space<vmem>>, vector<16x128xf32>,
    return
  }
  func.func @transform_0(%arg0: i32) -> (i32, i32) {
    %c0_i32 = arith.constant 0 : i32
    %c0_i32_0 = arith.constant 0 : i32
    return %arg0, %c0_i32 : i32, i32
  }
  func.func @transform_1(%arg0: i32) -> (i32, i32) {
    %c0_i32 = arith.constant 0 : i32
    %c0_i32_0 = arith.constant 0 : i32
    %c0_i32_1 = arith.constant 0 : i32
    return %c0_i32, %c0_i32_0 : i32, i32
  }
  func.func @transform_2(%arg0: i32) -> (i32, i32) {
    %c0_i32 = arith.constant 0 : i32
    %c0_i32_0 = arith.constant 0 : i32
    %c0_i32_1 = arith.constant 0 : i32
    return %c0_i32, %c0_i32_0 : i32, i32
  }
  func.func @transform_3(%arg0: i32) -> (i32, i32) {
    %c0_i32 = arith.constant 0 : i32
    %c0_i32_0 = arith.constant 0 : i32
    %c0_i32_1 = arith.constant 0 : i32
    return %c0_i32, %c0_i32_0 : i32, i32
  }
  func.func @transform_4(%arg0: i32) -> (i32, i32) {
    %c0_i32 = arith.constant 0 : i32
    %c0_i32_0 = arith.constant 0 : i32
    %c0_i32_1 = arith.constant 0 : i32
    return %c0_i32, %c0_i32_0 : i32, i32
  }
  func.func @transform_5(%arg0: i32) -> (i32, i32) {
    %c0_i32 = arith.constant 0 : i32
    %c0_i32_0 = arith.constant 0 : i32
    %c0_i32_1 = arith.constant 0 : i32
    return %c0_i32, %c0_i32_0 : i32, i32
  }
  func.func @transform_6(%arg0: i32) -> (i32, i32) {
    %c0_i32 = arith.constant 0 : i32
    %c0_i32_0 = arith.constant 0 : i32
    %c0_i32_1 = arith.constant 0 : i32
    return %c0_i32, %c0_i32_0 : i32, i32
  }
  func.func @transform_7(%arg0: i32) -> (i32, i32) {
    %c0_i32 = arith.constant 0 : i32
    %c0_i32_0 = arith.constant 0 : i32
    return %arg0, %c0_i32 : i32, i32
  }
}

</mosaic_0001>

<llo_original>
// kernel: tpu_custom_call.1
$region0: #{tpu_custom_call.1}
  #allocation0 [shape = 'u32[]', space=smem, size = 0x4, offset = 0x4, fixed_abs, tag = 'smem constant byte address 0x4 - core index']
  #allocation1 [shape = 'u32[144,128]{1,0:T(1,128)}', space=vmem, size = 0x12000, scoped, tag = 'internal scratch']
  %s0 = inlined_call_operand.hbm [shape: bf16[16,1024], index: 0, kind: input, shape index: {}]
  %s1 = inlined_call_operand.hbm [shape: bf16[1024,1024], index: 1, kind: input, shape index: {}]
  %s2 = inlined_call_operand.hbm [shape: f32[1,1024], index: 2, kind: input, shape index: {}]
  %s3 = inlined_call_operand.hbm [shape: bf16[1024,384], index: 3, kind: input, shape index: {}]
  %s4 = inlined_call_operand.hbm [shape: f32[1,384], index: 4, kind: input, shape index: {}]
  %s5 = inlined_call_operand.hbm [shape: bf16[384,128], index: 5, kind: input, shape index: {}]
  %s6 = inlined_call_operand.hbm [shape: f32[1,128], index: 6, kind: input, shape index: {}]
  %s7 = inlined_call_operand.hbm [shape: f32[16,128], index: 7, kind: output, shape index: {}]
  %s8 = sld [smem:[#allocation0]]
  $region66: #{tpu_custom_call.1} parent=0
    _
  %s10 = ssub.s32 1, %s8
  %s11 = scalar_select 0, %s10, %s8
  $region1: #{tpu_custom_call.1} parent=0
    #allocation2 [shape = 'u8[32768]{0}', space=vmem, size = 0x8000, scoped, tag = 'input window, operand 0, single buffered']
    #allocation3 [shape = 's32[1]{0}', space=sflag, size = 0x4, scoped, tag = 'scoped memory for tpu_custom_call.1']
    #allocation4 [shape = 's32[1]{0}', space=sflag, size = 0x4, scoped, tag = 'scoped memory for tpu_custom_call.1']
    #allocation5 [shape = 'u8[2097152]{0}', space=vmem, size = 0x200000, scoped, tag = 'input window, operand 1, single buffered']
    #allocation6 [shape = 's32[1]{0}', space=sflag, size = 0x4, scoped, tag = 'scoped memory for tpu_custom_call.1']
    #allocation7 [shape = 'u8[4096]{0}', space=vmem, size = 0x1000, scoped, tag = 'input window, operand 2, single buffered']
    #allocation8 [shape = 'u8[786432]{0}', space=vmem, size = 0xc0000, scoped, tag = 'input window, operand 3, single buffered']
    #allocation9 [shape = 's32[1]{0}', space=sflag, size = 0x4, scoped, tag = 'scoped memory for tpu_custom_call.1']
    #allocation10 [shape = 'u8[1536]{0}', space=vmem, size = 0x800, scoped, tag = 'input window, operand 4, single buffered']
    #allocation11 [shape = 'u8[98304]{0}', space=vmem, size = 0x18000, scoped, tag = 'input window, operand 5, single buffered']
    #allocation12 [shape = 's32[1]{0}', space=sflag, size = 0x4, scoped, tag = 'scoped memory for tpu_custom_call.1']
    #allocation13 [shape = 'u8[512]{0}', space=vmem, size = 0x400, scoped, tag = 'input window, operand 6, single buffered']
    #allocation14 [shape = 'u8[8192]{0}', space=vmem, size = 0x2000, scoped, tag = 'output window, operand 0, single buffered']
    %12 = vsyncpa [#allocation3], 0
    %13 = vsyncpa [#allocation6], 0
    %14 = vsyncpa [#allocation9], 0
    %15 = vsyncpa [#allocation12], 0
    %16 = vsyncpa [#allocation4], 0
    // Predicated region
    $region2: #{tpu_custom_call.1} parent=1 // pred_check
      _
    $region3: #{tpu_custom_call.1} parent=1 // pred_check_branch
      %18 = sbr.rel (0) target = $region5
    $region4: #{tpu_custom_call.1} parent=1 // pred_region
      %s20 = ssub.s32 1024, 1024
      %21 = vsyncadd [#allocation3], %s20
      %s22 = sshll.u32 [#allocation2], 4
      %s23 = int_to_ptr.vmem [resolvable:$true] %s22
      %28 = dma.hbm_to_vmem [thread:$0]  %s0, 1024, %s23, [#allocation3], 512, 512, 32
    $region5: #{tpu_custom_call.1} parent=1 // pred_fallthru
      _
    // Predicated region
    $region6: #{tpu_custom_call.1} parent=1 // pred_check
      _
    $region7: #{tpu_custom_call.1} parent=1 // pred_check_branch
      %30 = sbr.rel (0) target = $region9
    $region8: #{tpu_custom_call.1} parent=1 // pred_region
      %s32 = ssub.s32 65536, 65536
      %33 = vsyncadd [#allocation6], %s32
      %s34 = sshll.u32 [#allocation5], 4
      %s35 = int_to_ptr.vmem [resolvable:$true] %s34
      %40 = dma.hbm_to_vmem [thread:$0]  %s1, 65536, %s35, [#allocation6], 512, 512, 32
    $region9: #{tpu_custom_call.1} parent=1 // pred_fallthru
      _
    // Predicated region
    $region10: #{tpu_custom_call.1} parent=1 // pred_check
      _
    $region11: #{tpu_custom_call.1} parent=1 // pred_check_branch
      %42 = sbr.rel (0) target = $region13
    $region12: #{tpu_custom_call.1} parent=1 // pred_region
      %s44 = ssub.s32 128, 128
      %45 = vsyncadd [#allocation6], %s44
      %s47 = sshll.u32 [#allocation7], 4
      %s48 = int_to_ptr.vmem [resolvable:$true] %s47
      %50 = dma.hbm_to_vmem [thread:$0]  %s2, 128, %s48, [#allocation6]
    $region13: #{tpu_custom_call.1} parent=1 // pred_fallthru
      _
    // Predicated region
    $region14: #{tpu_custom_call.1} parent=1 // pred_check
      _
    $region15: #{tpu_custom_call.1} parent=1 // pred_check_branch
      %52 = sbr.rel (0) target = $region17
    $region16: #{tpu_custom_call.1} parent=1 // pred_region
      %s54 = ssub.s32 24576, 24576
      %55 = vsyncadd [#allocation9], %s54
      %s56 = sshll.u32 [#allocation8], 4
      %s57 = int_to_ptr.vmem [resolvable:$true] %s56
      %62 = dma.hbm_to_vmem [thread:$0]  %s3, 24576, %s57, [#allocation9], 192, 192, 12
    $region17: #{tpu_custom_call.1} parent=1 // pred_fallthru
      _
    // Predicated region
    $region18: #{tpu_custom_call.1} parent=1 // pred_check
      _
    $region19: #{tpu_custom_call.1} parent=1 // pred_check_branch
      %64 = sbr.rel (0) target = $region21
    $region20: #{tpu_custom_call.1} parent=1 // pred_region
      %s66 = ssub.s32 48, 48
      %67 = vsyncadd [#allocation9], %s66
      %s69 = sshll.u32 [#allocation10], 4
      %s70 = int_to_ptr.vmem [resolvable:$true] %s69
      %72 = dma.hbm_to_vmem [thread:$0]  %s4, 48, %s70, [#allocation9]
    $region21: #{tpu_custom_call.1} parent=1 // pred_fallthru
      _
    // Predicated region
    $region22: #{tpu_custom_call.1} parent=1 // pred_check
      _
    $region23: #{tpu_custom_call.1} parent=1 // pred_check_branch
      %74 = sbr.rel (0) target = $region25
    $region24: #{tpu_custom_call.1} parent=1 // pred_region
      %s76 = ssub.s32 3072, 3072
      %77 = vsyncadd [#allocation12], %s76
      %s78 = sshll.u32 [#allocation11], 4
      %s79 = int_to_ptr.vmem [resolvable:$true] %s78
      %84 = dma.hbm_to_vmem [thread:$0]  %s5, 3072, %s79, [#allocation12], 64, 64, 4
    $region25: #{tpu_custom_call.1} parent=1 // pred_fallthru
      _
    // Predicated region
    $region26: #{tpu_custom_call.1} parent=1 // pred_check
      _
    $region27: #{tpu_custom_call.1} parent=1 // pred_check_branch
      %86 = sbr.rel (0) target = $region29
    $region28: #{tpu_custom_call.1} parent=1 // pred_region
      %s88 = ssub.s32 16, 16
      %89 = vsyncadd [#allocation12], %s88
      %s91 = sshll.u32 [#allocation13], 4
      %s92 = int_to_ptr.vmem [resolvable:$true] %s91
      %94 = dma.hbm_to_vmem [thread:$0]  %s6, 16, %s92, [#allocation12]
    $region29: #{tpu_custom_call.1} parent=1 // pred_fallthru
      _
    // Predicated region
    $region30: #{tpu_custom_call.1} parent=1 // pred_check
      _
    $region31: #{tpu_custom_call.1} parent=1 // pred_check_branch
      %96 = sbr.rel (0) target = $region33
    $region32: #{tpu_custom_call.1} parent=1 // pred_region
      %97 = dma.done [#allocation3], 1024
    $region33: #{tpu_custom_call.1} parent=1 // pred_fallthru
      _
    // Predicated region
    $region34: #{tpu_custom_call.1} parent=1 // pred_check
      _
    $region35: #{tpu_custom_call.1} parent=1 // pred_check_branch
      %99 = sbr.rel (0) target = $region37
    $region36: #{tpu_custom_call.1} parent=1 // pred_region
      %100 = dma.done [#allocation6], 65536
    $region37: #{tpu_custom_call.1} parent=1 // pred_fallthru
      _
    // Predicated region
    $region38: #{tpu_custom_call.1} parent=1 // pred_check
      _
    $region39: #{tpu_custom_call.1} parent=1 // pred_check_branch
      %102 = sbr.rel (0) target = $region41
    $region40: #{tpu_custom_call.1} parent=1 // pred_region
      %103 = dma.done [#allocation6], 128
    $region41: #{tpu_custom_call.1} parent=1 // pred_fallthru
      _
    // Predicated region
    $region42: #{tpu_custom_call.1} parent=1 // pred_check
      _
    $region43: #{tpu_custom_call.1} parent=1 // pred_check_branch
      %105 = sbr.rel (0) target = $region45
    $region44: #{tpu_custom_call.1} parent=1 // pred_region
      %106 = dma.done [#allocation9], 24576
    $region45: #{tpu_custom_call.1} parent=1 // pred_fallthru
      _
    // Predicated region
    $region46: #{tpu_custom_call.1} parent=1 // pred_check
      _
    $region47: #{tpu_custom_call.1} parent=1 // pred_check_branch
      %108 = sbr.rel (0) target = $region49
    $region48: #{tpu_custom_call.1} parent=1 // pred_region
      %109 = dma.done [#allocation9], 48
    $region49: #{tpu_custom_call.1} parent=1 // pred_fallthru
      _
    // Predicated region
    $region50: #{tpu_custom_call.1} parent=1 // pred_check
      _
    $region51: #{tpu_custom_call.1} parent=1 // pred_check_branch
      %111 = sbr.rel (0) target = $region53
    $region52: #{tpu_custom_call.1} parent=1 // pred_region
      %112 = dma.done [#allocation12], 3072
    $region53: #{tpu_custom_call.1} parent=1 // pred_fallthru
      _
    // Predicated region
    $region54: #{tpu_custom_call.1} parent=1 // pred_check
      _
    $region55: #{tpu_custom_call.1} parent=1 // pred_check_branch
      %114 = sbr.rel (0) target = $region57
    $region56: #{tpu_custom_call.1} parent=1 // pred_region
      %115 = dma.done [#allocation12], 16
    $region57: #{tpu_custom_call.1} parent=1 // pred_fallthru
      _
    %v117 = vld [vmem:[#allocation2] sm:$0xff]
    %v118 = vld [vmem:[#allocation2 + $0x8] sm:$0xff]
    %v119 = vld [vmem:[#allocation2 + $0x10] sm:$0xff]
    %v120 = vld [vmem:[#allocation2 + $0x18] sm:$0xff]
    %v121 = vld [vmem:[#allocation2 + $0x20] sm:$0xff]
    %v122 = vld [vmem:[#allocation2 + $0x28] sm:$0xff]
    %v123 = vld [vmem:[#allocation2 + $0x30] sm:$0xff]
    %v124 = vld [vmem:[#allocation2 + $0x38] sm:$0xff]
    %v125 = vld [vmem:[#allocation5] sm:$0xff]
    %v126 = vld [vmem:[#allocation5 + $0x8] sm:$0xff]
    %v127 = vld [vmem:[#allocation5 + $0x10] sm:$0xff]
    %v128 = vld [vmem:[#allocation5 + $0x18] sm:$0xff]
    %v129 = vld [vmem:[#allocation5 + $0x20] sm:$0xff]
    %v130 = vld [vmem:[#allocation5 + $0x28] sm:$0xff]
    %v131 = vld [vmem:[#allocation5 + $0x30] sm:$0xff]
    %v132 = vld [vmem:[#allocation5 + $0x38] sm:$0xff]
    %v133 = vld [vmem:[#allocation5 + $0x40] sm:$0xff]
    %v134 = vld [vmem:[#allocation5 + $0x48] sm:$0xff]
    %v135 = vld [vmem:[#allocation5 + $0x50] sm:$0xff]
    %v136 = vld [vmem:[#allocation5 + $0x58] sm:$0xff]
    %v137 = vld [vmem:[#allocation5 + $0x60] sm:$0xff]
    %v138 = vld [vmem:[#allocation5 + $0x68] sm:$0xff]
    %v139 = vld [vmem:[#allocation5 + $0x70] sm:$0xff]
    %v140 = vld [vmem:[#allocation5 + $0x78] sm:$0xff]
    %v141 = vld [vmem:[#allocation5 + $0x80] sm:$0xff]
    %v142 = vld [vmem:[#allocation5 + $0x88] sm:$0xff]
    %v143 = vld [vmem:[#allocation5 + $0x90] sm:$0xff]
    %v144 = vld [vmem:[#allocation5 + $0x98] sm:$0xff]
    %v145 = vld [vmem:[#allocation5 + $0xa0] sm:$0xff]
    %v146 = vld [vmem:[#allocation5 + $0xa8] sm:$0xff]
    %v147 = vld [vmem:[#allocation5 + $0xb0] sm:$0xff]
    %v148 = vld [vmem:[#allocation5 + $0xb8] sm:$0xff]
    %v149 = vld [vmem:[#allocation5 + $0xc0] sm:$0xff]
    %v150 = vld [vmem:[#allocation5 + $0xc8] sm:$0xff]
    %v151 = vld [vmem:[#allocation5 + $0xd0] sm:$0xff]
    %v152 = vld [vmem:[#allocation5 + $0xd8] sm:$0xff]
    %v153 = vld [vmem:[#allocation5 + $0xe0] sm:$0xff]
    %v154 = vld [vmem:[#allocation5 + $0xe8] sm:$0xff]
    %v155 = vld [vmem:[#allocation5 + $0xf0] sm:$0xff]
    %v156 = vld [vmem:[#allocation5 + $0xf8] sm:$0xff]
    %v157 = vld [vmem:[#allocation5 + $0x100] sm:$0xff]
    %v158 = vld [vmem:[#allocation5 + $0x108] sm:$0xff]
    %v159 = vld [vmem:[#allocation5 + $0x110] sm:$0xff]
    %v160 = vld [vmem:[#allocation5 + $0x118] sm:$0xff]
    %v161 = vld [vmem:[#allocation5 + $0x120] sm:$0xff]
    %v162 = vld [vmem:[#allocation5 + $0x128] sm:$0xff]
    %v163 = vld [vmem:[#allocation5 + $0x130] sm:$0xff]
    %v164 = vld [vmem:[#allocation5 + $0x138] sm:$0xff]
    %v165 = vld [vmem:[#allocation5 + $0x140] sm:$0xff]
    %v166 = vld [vmem:[#allocation5 + $0x148] sm:$0xff]
    %v167 = vld [vmem:[#allocation5 + $0x150] sm:$0xff]
    %v168 = vld [vmem:[#allocation5 + $0x158] sm:$0xff]
    %v169 = vld [vmem:[#allocation5 + $0x160] sm:$0xff]
    %v170 = vld [vmem:[#allocation5 + $0x168] sm:$0xff]
    %v171 = vld [vmem:[#allocation5 + $0x170] sm:$0xff]
    %v172 = vld [vmem:[#allocation5 + $0x178] sm:$0xff]
    %v173 = vld [vmem:[#allocation5 + $0x180] sm:$0xff]
    %v174 = vld [vmem:[#allocation5 + $0x188] sm:$0xff]
    %v175 = vld [vmem:[#allocation5 + $0x190] sm:$0xff]
    %v176 = vld [vmem:[#allocation5 + $0x198] sm:$0xff]
    %v177 = vld [vmem:[#allocation5 + $0x1a0] sm:$0xff]
    %v178 = vld [vmem:[#allocation5 + $0x1a8] sm:$0xff]
    %v179 = vld [vmem:[#allocation5 + $0x1b0] sm:$0xff]
    %v180 = vld [vmem:[#allocation5 + $0x1b8] sm:$0xff]
    %v181 = vld [vmem:[#allocation5 + $0x1c0] sm:$0xff]
    %v182 = vld [vmem:[#allocation5 + $0x1c8] sm:$0xff]
    %v183 = vld [vmem:[#allocation5 + $0x1d0] sm:$0xff]
    %v184 = vld [vmem:[#allocation5 + $0x1d8] sm:$0xff]
    %v185 = vld [vmem:[#allocation5 + $0x1e0] sm:$0xff]
    %v186 = vld [vmem:[#allocation5 + $0x1e8] sm:$0xff]
    %v187 = vld [vmem:[#allocation5 + $0x1f0] sm:$0xff]
    %v188 = vld [vmem:[#allocation5 + $0x1f8] sm:$0xff]
    %v189 = vld [vmem:[#allocation5 + $0x200] sm:$0xff]
    %v190 = vld [vmem:[#allocation5 + $0x208] sm:$0xff]
    %v191 = vld [vmem:[#allocation5 + $0x210] sm:$0xff]
    %v192 = vld [vmem:[#allocation5 + $0x218] sm:$0xff]
    %v193 = vld [vmem:[#allocation5 + $0x220] sm:$0xff]
    %v194 = vld [vmem:[#allocation5 + $0x228] sm:$0xff]
    %v195 = vld [vmem:[#allocation5 + $0x230] sm:$0xff]
    %v196 = vld [vmem:[#allocation5 + $0x238] sm:$0xff]
    %v197 = vld [vmem:[#allocation5 + $0x240] sm:$0xff]
    %v198 = vld [vmem:[#allocation5 + $0x248] sm:$0xff]
    %v199 = vld [vmem:[#allocation5 + $0x250] sm:$0xff]
    %v200 = vld [vmem:[#allocation5 + $0x258] sm:$0xff]
    %v201 = vld [vmem:[#allocation5 + $0x260] sm:$0xff]
    %v202 = vld [vmem:[#allocation5 + $0x268] sm:$0xff]
    %v203 = vld [vmem:[#allocation5 + $0x270] sm:$0xff]
    %v204 = vld [vmem:[#allocation5 + $0x278] sm:$0xff]
    %v205 = vld [vmem:[#allocation5 + $0x280] sm:$0xff]
    %v206 = vld [vmem:[#allocation5 + $0x288] sm:$0xff]
    %v207 = vld [vmem:[#allocation5 + $0x290] sm:$0xff]
    %v208 = vld [vmem:[#allocation5 + $0x298] sm:$0xff]
    %v209 = vld [vmem:[#allocation5 + $0x2a0] sm:$0xff]
    %v210 = vld [vmem:[#allocation5 + $0x2a8] sm:$0xff]
    %v211 = vld [vmem:[#allocation5 + $0x2b0] sm:$0xff]
    %v212 = vld [vmem:[#allocation5 + $0x2b8] sm:$0xff]
    %v213 = vld [vmem:[#allocation5 + $0x2c0] sm:$0xff]
    %v214 = vld [vmem:[#allocation5 + $0x2c8] sm:$0xff]
    %v215 = vld [vmem:[#allocation5 + $0x2d0] sm:$0xff]
    %v216 = vld [vmem:[#allocation5 + $0x2d8] sm:$0xff]
    %v217 = vld [vmem:[#allocation5 + $0x2e0] sm:$0xff]
    %v218 = vld [vmem:[#allocation5 + $0x2e8] sm:$0xff]
    %v219 = vld [vmem:[#allocation5 + $0x2f0] sm:$0xff]
    %v220 = vld [vmem:[#allocation5 + $0x2f8] sm:$0xff]
    %v221 = vld [vmem:[#allocation5 + $0x300] sm:$0xff]
    %v222 = vld [vmem:[#allocation5 + $0x308] sm:$0xff]
    %v223 = vld [vmem:[#allocation5 + $0x310] sm:$0xff]
    %v224 = vld [vmem:[#allocation5 + $0x318] sm:$0xff]
    %v225 = vld [vmem:[#allocation5 + $0x320] sm:$0xff]
    %v226 = vld [vmem:[#allocation5 + $0x328] sm:$0xff]
    %v227 = vld [vmem:[#allocation5 + $0x330] sm:$0xff]
    %v228 = vld [vmem:[#allocation5 + $0x338] sm:$0xff]
    %v229 = vld [vmem:[#allocation5 + $0x340] sm:$0xff]
    %v230 = vld [vmem:[#allocation5 + $0x348] sm:$0xff]
    %v231 = vld [vmem:[#allocation5 + $0x350] sm:$0xff]
    %v232 = vld [vmem:[#allocation5 + $0x358] sm:$0xff]
    %v233 = vld [vmem:[#allocation5 + $0x360] sm:$0xff]
    %v234 = vld [vmem:[#allocation5 + $0x368] sm:$0xff]
    %v235 = vld [vmem:[#allocation5 + $0x370] sm:$0xff]
    %v236 = vld [vmem:[#allocation5 + $0x378] sm:$0xff]
    %v237 = vld [vmem:[#allocation5 + $0x380] sm:$0xff]
    %v238 = vld [vmem:[#allocation5 + $0x388] sm:$0xff]
    %v239 = vld [vmem:[#allocation5 + $0x390] sm:$0xff]
    %v240 = vld [vmem:[#allocation5 + $0x398] sm:$0xff]
    %v241 = vld [vmem:[#allocation5 + $0x3a0] sm:$0xff]
    %v242 = vld [vmem:[#allocation5 + $0x3a8] sm:$0xff]
    %v243 = vld [vmem:[#allocation5 + $0x3b0] sm:$0xff]
    %v244 = vld [vmem:[#allocation5 + $0x3b8] sm:$0xff]
    %v245 = vld [vmem:[#allocation5 + $0x3c0] sm:$0xff]
    %v246 = vld [vmem:[#allocation5 + $0x3c8] sm:$0xff]
    %v247 = vld [vmem:[#allocation5 + $0x3d0] sm:$0xff]
    %v248 = vld [vmem:[#allocation5 + $0x3d8] sm:$0xff]
    %v249 = vld [vmem:[#allocation5 + $0x3e0] sm:$0xff]
    %v250 = vld [vmem:[#allocation5 + $0x3e8] sm:$0xff]
    %v251 = vld [vmem:[#allocation5 + $0x3f0] sm:$0xff]
    %v252 = vld [vmem:[#allocation5 + $0x3f8] sm:$0xff]
    %v253 = vld [vmem:[#allocation5 + $0x400] sm:$0xff]
    %v254 = vld [vmem:[#allocation5 + $0x408] sm:$0xff]
    %v255 = vld [vmem:[#allocation5 + $0x410] sm:$0xff]
    %v256 = vld [vmem:[#allocation5 + $0x418] sm:$0xff]
    %v257 = vld [vmem:[#allocation5 + $0x420] sm:$0xff]
    %v258 = vld [vmem:[#allocation5 + $0x428] sm:$0xff]
    %v259 = vld [vmem:[#allocation5 + $0x430] sm:$0xff]
    %v260 = vld [vmem:[#allocation5 + $0x438] sm:$0xff]
    %v261 = vld [vmem:[#allocation5 + $0x440] sm:$0xff]
    %v262 = vld [vmem:[#allocation5 + $0x448] sm:$0xff]
    %v263 = vld [vmem:[#allocation5 + $0x450] sm:$0xff]
    %v264 = vld [vmem:[#allocation5 + $0x458] sm:$0xff]
    %v265 = vld [vmem:[#allocation5 + $0x460] sm:$0xff]
    %v266 = vld [vmem:[#allocation5 + $0x468] sm:$0xff]
    %v267 = vld [vmem:[#allocation5 + $0x470] sm:$0xff]
    %v268 = vld [vmem:[#allocation5 + $0x478] sm:$0xff]
    %v269 = vld [vmem:[#allocation5 + $0x480] sm:$0xff]
    %v270 = vld [vmem:[#allocation5 + $0x488] sm:$0xff]
    %v271 = vld [vmem:[#allocation5 + $0x490] sm:$0xff]
    %v272 = vld [vmem:[#allocation5 + $0x498] sm:$0xff]
    %v273 = vld [vmem:[#allocation5 + $0x4a0] sm:$0xff]
    %v274 = vld [vmem:[#allocation5 + $0x4a8] sm:$0xff]
    %v275 = vld [vmem:[#allocation5 + $0x4b0] sm:$0xff]
    %v276 = vld [vmem:[#allocation5 + $0x4b8] sm:$0xff]
    %v277 = vld [vmem:[#allocation5 + $0x4c0] sm:$0xff]
    %v278 = vld [vmem:[#allocation5 + $0x4c8] sm:$0xff]
    %v279 = vld [vmem:[#allocation5 + $0x4d0] sm:$0xff]
    %v280 = vld [vmem:[#allocation5 + $0x4d8] sm:$0xff]
    %v281 = vld [vmem:[#allocation5 + $0x4e0] sm:$0xff]
    %v282 = vld [vmem:[#allocation5 + $0x4e8] sm:$0xff]
    %v283 = vld [vmem:[#allocation5 + $0x4f0] sm:$0xff]
    %v284 = vld [vmem:[#allocation5 + $0x4f8] sm:$0xff]
    %v285 = vld [vmem:[#allocation5 + $0x500] sm:$0xff]
    %v286 = vld [vmem:[#allocation5 + $0x508] sm:$0xff]
    %v287 = vld [vmem:[#allocation5 + $0x510] sm:$0xff]
    %v288 = vld [vmem:[#allocation5 + $0x518] sm:$0xff]
    %v289 = vld [vmem:[#allocation5 + $0x520] sm:$0xff]
    %v290 = vld [vmem:[#allocation5 + $0x528] sm:$0xff]
    %v291 = vld [vmem:[#allocation5 + $0x530] sm:$0xff]
    %v292 = vld [vmem:[#allocation5 + $0x538] sm:$0xff]
    %v293 = vld [vmem:[#allocation5 + $0x540] sm:$0xff]
    %v294 = vld [vmem:[#allocation5 + $0x548] sm:$0xff]
    %v295 = vld [vmem:[#allocation5 + $0x550] sm:$0xff]
    %v296 = vld [vmem:[#allocation5 + $0x558] sm:$0xff]
    %v297 = vld [vmem:[#allocation5 + $0x560] sm:$0xff]
    %v298 = vld [vmem:[#allocation5 + $0x568] sm:$0xff]
    %v299 = vld [vmem:[#allocation5 + $0x570] sm:$0xff]
    %v300 = vld [vmem:[#allocation5 + $0x578] sm:$0xff]
    %v301 = vld [vmem:[#allocation5 + $0x580] sm:$0xff]
    %v302 = vld [vmem:[#allocation5 + $0x588] sm:$0xff]
    %v303 = vld [vmem:[#allocation5 + $0x590] sm:$0xff]
    %v304 = vld [vmem:[#allocation5 + $0x598] sm:$0xff]
    %v305 = vld [vmem:[#allocation5 + $0x5a0] sm:$0xff]
    %v306 = vld [vmem:[#allocation5 + $0x5a8] sm:$0xff]
    %v307 = vld [vmem:[#allocation5 + $0x5b0] sm:$0xff]
    %v308 = vld [vmem:[#allocation5 + $0x5b8] sm:$0xff]
    %v309 = vld [vmem:[#allocation5 + $0x5c0] sm:$0xff]
    %v310 = vld [vmem:[#allocation5 + $0x5c8] sm:$0xff]
    %v311 = vld [vmem:[#allocation5 + $0x5d0] sm:$0xff]
    %v312 = vld [vmem:[#allocation5 + $0x5d8] sm:$0xff]
    %v313 = vld [vmem:[#allocation5 + $0x5e0] sm:$0xff]
    %v314 = vld [vmem:[#allocation5 + $0x5e8] sm:$0xff]
    %v315 = vld [vmem:[#allocation5 + $0x5f0] sm:$0xff]
    %v316 = vld [vmem:[#allocation5 + $0x5f8] sm:$0xff]
    %v317 = vld [vmem:[#allocation5 + $0x600] sm:$0xff]
    %v318 = vld [vmem:[#allocation5 + $0x608] sm:$0xff]
    %v319 = vld [vmem:[#allocation5 + $0x610] sm:$0xff]
    %v320 = vld [vmem:[#allocation5 + $0x618] sm:$0xff]
    %v321 = vld [vmem:[#allocation5 + $0x620] sm:$0xff]
    %v322 = vld [vmem:[#allocation5 + $0x628] sm:$0xff]
    %v323 = vld [vmem:[#allocation5 + $0x630] sm:$0xff]
    %v324 = vld [vmem:[#allocation5 + $0x638] sm:$0xff]
    %v325 = vld [vmem:[#allocation5 + $0x640] sm:$0xff]
    %v326 = vld [vmem:[#allocation5 + $0x648] sm:$0xff]
    %v327 = vld [vmem:[#allocation5 + $0x650] sm:$0xff]
    %v328 = vld [vmem:[#allocation5 + $0x658] sm:$0xff]
    %v329 = vld [vmem:[#allocation5 + $0x660] sm:$0xff]
    %v330 = vld [vmem:[#allocation5 + $0x668] sm:$0xff]
    %v331 = vld [vmem:[#allocation5 + $0x670] sm:$0xff]
    %v332 = vld [vmem:[#allocation5 + $0x678] sm:$0xff]
    %v333 = vld [vmem:[#allocation5 + $0x680] sm:$0xff]
    %v334 = vld [vmem:[#allocation5 + $0x688] sm:$0xff]
    %v335 = vld [vmem:[#allocation5 + $0x690] sm:$0xff]
    %v336 = vld [vmem:[#allocation5 + $0x698] sm:$0xff]
    %v337 = vld [vmem:[#allocation5 + $0x6a0] sm:$0xff]
    %v338 = vld [vmem:[#allocation5 + $0x6a8] sm:$0xff]
    %v339 = vld [vmem:[#allocation5 + $0x6b0] sm:$0xff]
    %v340 = vld [vmem:[#allocation5 + $0x6b8] sm:$0xff]
    %v341 = vld [vmem:[#allocation5 + $0x6c0] sm:$0xff]
    %v342 = vld [vmem:[#allocation5 + $0x6c8] sm:$0xff]
    %v343 = vld [vmem:[#allocation5 + $0x6d0] sm:$0xff]
    %v344 = vld [vmem:[#allocation5 + $0x6d8] sm:$0xff]
    %v345 = vld [vmem:[#allocation5 + $0x6e0] sm:$0xff]
    %v346 = vld [vmem:[#allocation5 + $0x6e8] sm:$0xff]
    %v347 = vld [vmem:[#allocation5 + $0x6f0] sm:$0xff]
    %v348 = vld [vmem:[#allocation5 + $0x6f8] sm:$0xff]
    %v349 = vld [vmem:[#allocation5 + $0x700] sm:$0xff]
    %v350 = vld [vmem:[#allocation5 + $0x708] sm:$0xff]
    %v351 = vld [vmem:[#allocation5 + $0x710] sm:$0xff]
    %v352 = vld [vmem:[#allocation5 + $0x718] sm:$0xff]
    %v353 = vld [vmem:[#allocation5 + $0x720] sm:$0xff]
    %v354 = vld [vmem:[#allocation5 + $0x728] sm:$0xff]
    %v355 = vld [vmem:[#allocation5 + $0x730] sm:$0xff]
    %v356 = vld [vmem:[#allocation5 + $0x738] sm:$0xff]
    %v357 = vld [vmem:[#allocation5 + $0x740] sm:$0xff]
    %v358 = vld [vmem:[#allocation5 + $0x748] sm:$0xff]
    %v359 = vld [vmem:[#allocation5 + $0x750] sm:$0xff]
    %v360 = vld [vmem:[#allocation5 + $0x758] sm:$0xff]
    %v361 = vld [vmem:[#allocation5 + $0x760] sm:$0xff]
    %v362 = vld [vmem:[#allocation5 + $0x768] sm:$0xff]
    %v363 = vld [vmem:[#allocation5 + $0x770] sm:$0xff]
    %v364 = vld [vmem:[#allocation5 + $0x778] sm:$0xff]
    %v365 = vld [vmem:[#allocation5 + $0x780] sm:$0xff]
    %v366 = vld [vmem:[#allocation5 + $0x788] sm:$0xff]
    %v367 = vld [vmem:[#allocation5 + $0x790] sm:$0xff]
    %v368 = vld [vmem:[#allocation5 + $0x798] sm:$0xff]
    %v369 = vld [vmem:[#allocation5 + $0x7a0] sm:$0xff]
    %v370 = vld [vmem:[#allocation5 + $0x7a8] sm:$0xff]
    %v371 = vld [vmem:[#allocation5 + $0x7b0] sm:$0xff]
    %v372 = vld [vmem:[#allocation5 + $0x7b8] sm:$0xff]
    %v373 = vld [vmem:[#allocation5 + $0x7c0] sm:$0xff]
    %v374 = vld [vmem:[#allocation5 + $0x7c8] sm:$0xff]
    %v375 = vld [vmem:[#allocation5 + $0x7d0] sm:$0xff]
    %v376 = vld [vmem:[#allocation5 + $0x7d8] sm:$0xff]
    %v377 = vld [vmem:[#allocation5 + $0x7e0] sm:$0xff]
    %v378 = vld [vmem:[#allocation5 + $0x7e8] sm:$0xff]
    %v379 = vld [vmem:[#allocation5 + $0x7f0] sm:$0xff]
    %v380 = vld [vmem:[#allocation5 + $0x7f8] sm:$0xff]
    %v381 = vld [vmem:[#allocation5 + $0x800] sm:$0xff]
    %v382 = vld [vmem:[#allocation5 + $0x808] sm:$0xff]
    %v383 = vld [vmem:[#allocation5 + $0x810] sm:$0xff]
    %v384 = vld [vmem:[#allocation5 + $0x818] sm:$0xff]
    %v385 = vld [vmem:[#allocation5 + $0x820] sm:$0xff]
    %v386 = vld [vmem:[#allocation5 + $0x828] sm:$0xff]
    %v387 = vld [vmem:[#allocation5 + $0x830] sm:$0xff]
    %v388 = vld [vmem:[#allocation5 + $0x838] sm:$0xff]
    %v389 = vld [vmem:[#allocation5 + $0x840] sm:$0xff]
    %v390 = vld [vmem:[#allocation5 + $0x848] sm:$0xff]
    %v391 = vld [vmem:[#allocation5 + $0x850] sm:$0xff]
    %v392 = vld [vmem:[#allocation5 + $0x858] sm:$0xff]
    %v393 = vld [vmem:[#allocation5 + $0x860] sm:$0xff]
    %v394 = vld [vmem:[#allocation5 + $0x868] sm:$0xff]
    %v395 = vld [vmem:[#allocation5 + $0x870] sm:$0xff]
    %v396 = vld [vmem:[#allocation5 + $0x878] sm:$0xff]
    %v397 = vld [vmem:[#allocation5 + $0x880] sm:$0xff]
    %v398 = vld [vmem:[#allocation5 + $0x888] sm:$0xff]
    %v399 = vld [vmem:[#allocation5 + $0x890] sm:$0xff]
    %v400 = vld [vmem:[#allocation5 + $0x898] sm:$0xff]
    %v401 = vld [vmem:[#allocation5 + $0x8a0] sm:$0xff]
    %v402 = vld [vmem:[#allocation5 + $0x8a8] sm:$0xff]
    %v403 = vld [vmem:[#allocation5 + $0x8b0] sm:$0xff]
    %v404 = vld [vmem:[#allocation5 + $0x8b8] sm:$0xff]
    %v405 = vld [vmem:[#allocation5 + $0x8c0] sm:$0xff]
    %v406 = vld [vmem:[#allocation5 + $0x8c8] sm:$0xff]
    %v407 = vld [vmem:[#allocation5 + $0x8d0] sm:$0xff]
    %v408 = vld [vmem:[#allocation5 + $0x8d8] sm:$0xff]
    %v409 = vld [vmem:[#allocation5 + $0x8e0] sm:$0xff]
    %v410 = vld [vmem:[#allocation5 + $0x8e8] sm:$0xff]
    %v411 = vld [vmem:[#allocation5 + $0x8f0] sm:$0xff]
    %v412 = vld [vmem:[#allocation5 + $0x8f8] sm:$0xff]
    %v413 = vld [vmem:[#allocation5 + $0x900] sm:$0xff]
    %v414 = vld [vmem:[#allocation5 + $0x908] sm:$0xff]
    %v415 = vld [vmem:[#allocation5 + $0x910] sm:$0xff]
    %v416 = vld [vmem:[#allocation5 + $0x918] sm:$0xff]
    %v417 = vld [vmem:[#allocation5 + $0x920] sm:$0xff]
    %v418 = vld [vmem:[#allocation5 + $0x928] sm:$0xff]
    %v419 = vld [vmem:[#allocation5 + $0x930] sm:$0xff]
    %v420 = vld [vmem:[#allocation5 + $0x938] sm:$0xff]
    %v421 = vld [vmem:[#allocation5 + $0x940] sm:$0xff]
    %v422 = vld [vmem:[#allocation5 + $0x948] sm:$0xff]
    %v423 = vld [vmem:[#allocation5 + $0x950] sm:$0xff]
    %v424 = vld [vmem:[#allocation5 + $0x958] sm:$0xff]
    %v425 = vld [vmem:[#allocation5 + $0x960] sm:$0xff]
    %v426 = vld [vmem:[#allocation5 + $0x968] sm:$0xff]
    %v427 = vld [vmem:[#allocation5 + $0x970] sm:$0xff]
    %v428 = vld [vmem:[#allocation5 + $0x978] sm:$0xff]
    %v429 = vld [vmem:[#allocation5 + $0x980] sm:$0xff]
    %v430 = vld [vmem:[#allocation5 + $0x988] sm:$0xff]
    %v431 = vld [vmem:[#allocation5 + $0x990] sm:$0xff]
    %v432 = vld [vmem:[#allocation5 + $0x998] sm:$0xff]
    %v433 = vld [vmem:[#allocation5 + $0x9a0] sm:$0xff]
    %v434 = vld [vmem:[#allocation5 + $0x9a8] sm:$0xff]
    %v435 = vld [vmem:[#allocation5 + $0x9b0] sm:$0xff]
    %v436 = vld [vmem:[#allocation5 + $0x9b8] sm:$0xff]
    %v437 = vld [vmem:[#allocation5 + $0x9c0] sm:$0xff]
    %v438 = vld [vmem:[#allocation5 + $0x9c8] sm:$0xff]
    %v439 = vld [vmem:[#allocation5 + $0x9d0] sm:$0xff]
    %v440 = vld [vmem:[#allocation5 + $0x9d8] sm:$0xff]
    %v441 = vld [vmem:[#allocation5 + $0x9e0] sm:$0xff]
    %v442 = vld [vmem:[#allocation5 + $0x9e8] sm:$0xff]
    %v443 = vld [vmem:[#allocation5 + $0x9f0] sm:$0xff]
    %v444 = vld [vmem:[#allocation5 + $0x9f8] sm:$0xff]
    %v445 = vld [vmem:[#allocation5 + $0xa00] sm:$0xff]
    %v446 = vld [vmem:[#allocation5 + $0xa08] sm:$0xff]
    %v447 = vld [vmem:[#allocation5 + $0xa10] sm:$0xff]
    %v448 = vld [vmem:[#allocation5 + $0xa18] sm:$0xff]
    %v449 = vld [vmem:[#allocation5 + $0xa20] sm:$0xff]
    %v450 = vld [vmem:[#allocation5 + $0xa28] sm:$0xff]
    %v451 = vld [vmem:[#allocation5 + $0xa30] sm:$0xff]
    %v452 = vld [vmem:[#allocation5 + $0xa38] sm:$0xff]
    %v453 = vld [vmem:[#allocation5 + $0xa40] sm:$0xff]
    %v454 = vld [vmem:[#allocation5 + $0xa48] sm:$0xff]
    %v455 = vld [vmem:[#allocation5 + $0xa50] sm:$0xff]
    %v456 = vld [vmem:[#allocation5 + $0xa58] sm:$0xff]
    %v457 = vld [vmem:[#allocation5 + $0xa60] sm:$0xff]
    %v458 = vld [vmem:[#allocation5 + $0xa68] sm:$0xff]
    %v459 = vld [vmem:[#allocation5 + $0xa70] sm:$0xff]
    %v460 = vld [vmem:[#allocation5 + $0xa78] sm:$0xff]
    %v461 = vld [vmem:[#allocation5 + $0xa80] sm:$0xff]
    %v462 = vld [vmem:[#allocation5 + $0xa88] sm:$0xff]
    %v463 = vld [vmem:[#allocation5 + $0xa90] sm:$0xff]
    %v464 = vld [vmem:[#allocation5 + $0xa98] sm:$0xff]
    %v465 = vld [vmem:[#allocation5 + $0xaa0] sm:$0xff]
    %v466 = vld [vmem:[#allocation5 + $0xaa8] sm:$0xff]
    %v467 = vld [vmem:[#allocation5 + $0xab0] sm:$0xff]
    %v468 = vld [vmem:[#allocation5 + $0xab8] sm:$0xff]
    %v469 = vld [vmem:[#allocation5 + $0xac0] sm:$0xff]
    %v470 = vld [vmem:[#allocation5 + $0xac8] sm:$0xff]
    %v471 = vld [vmem:[#allocation5 + $0xad0] sm:$0xff]
    %v472 = vld [vmem:[#allocation5 + $0xad8] sm:$0xff]
    %v473 = vld [vmem:[#allocation5 + $0xae0] sm:$0xff]
    %v474 = vld [vmem:[#allocation5 + $0xae8] sm:$0xff]
    %v475 = vld [vmem:[#allocation5 + $0xaf0] sm:$0xff]
    %v476 = vld [vmem:[#allocation5 + $0xaf8] sm:$0xff]
    %v477 = vld [vmem:[#allocation5 + $0xb00] sm:$0xff]
    %v478 = vld [vmem:[#allocation5 + $0xb08] sm:$0xff]
    %v479 = vld [vmem:[#allocation5 + $0xb10] sm:$0xff]
    %v480 = vld [vmem:[#allocation5 + $0xb18] sm:$0xff]
    %v481 = vld [vmem:[#allocation5 + $0xb20] sm:$0xff]
    %v482 = vld [vmem:[#allocation5 + $0xb28] sm:$0xff]
    %v483 = vld [vmem:[#allocation5 + $0xb30] sm:$0xff]
    %v484 = vld [vmem:[#allocation5 + $0xb38] sm:$0xff]
    %v485 = vld [vmem:[#allocation5 + $0xb40] sm:$0xff]
    %v486 = vld [vmem:[#allocation5 + $0xb48] sm:$0xff]
    %v487 = vld [vmem:[#allocation5 + $0xb50] sm:$0xff]
    %v488 = vld [vmem:[#allocation5 + $0xb58] sm:$0xff]
    %v489 = vld [vmem:[#allocation5 + $0xb60] sm:$0xff]
    %v490 = vld [vmem:[#allocation5 + $0xb68] sm:$0xff]
    %v491 = vld [vmem:[#allocation5 + $0xb70] sm:$0xff]
    %v492 = vld [vmem:[#allocation5 + $0xb78] sm:$0xff]
    %v493 = vld [vmem:[#allocation5 + $0xb80] sm:$0xff]
    %v494 = vld [vmem:[#allocation5 + $0xb88] sm:$0xff]
    %v495 = vld [vmem:[#allocation5 + $0xb90] sm:$0xff]
    %v496 = vld [vmem:[#allocation5 + $0xb98] sm:$0xff]
    %v497 = vld [vmem:[#allocation5 + $0xba0] sm:$0xff]
    %v498 = vld [vmem:[#allocation5 + $0xba8] sm:$0xff]
    %v499 = vld [vmem:[#allocation5 + $0xbb0] sm:$0xff]
    %v500 = vld [vmem:[#allocation5 + $0xbb8] sm:$0xff]
    %v501 = vld [vmem:[#allocation5 + $0xbc0] sm:$0xff]
    %v502 = vld [vmem:[#allocation5 + $0xbc8] sm:$0xff]
    %v503 = vld [vmem:[#allocation5 + $0xbd0] sm:$0xff]
    %v504 = vld [vmem:[#allocation5 + $0xbd8] sm:$0xff]
    %v505 = vld [vmem:[#allocation5 + $0xbe0] sm:$0xff]
    %v506 = vld [vmem:[#allocation5 + $0xbe8] sm:$0xff]
    %v507 = vld [vmem:[#allocation5 + $0xbf0] sm:$0xff]
    %v508 = vld [vmem:[#allocation5 + $0xbf8] sm:$0xff]
    %v509 = vld [vmem:[#allocation5 + $0xc00] sm:$0xff]
    %v510 = vld [vmem:[#allocation5 + $0xc08] sm:$0xff]
    %v511 = vld [vmem:[#allocation5 + $0xc10] sm:$0xff]
    %v512 = vld [vmem:[#allocation5 + $0xc18] sm:$0xff]
    %v513 = vld [vmem:[#allocation5 + $0xc20] sm:$0xff]
    %v514 = vld [vmem:[#allocation5 + $0xc28] sm:$0xff]
    %v515 = vld [vmem:[#allocation5 + $0xc30] sm:$0xff]
    %v516 = vld [vmem:[#allocation5 + $0xc38] sm:$0xff]
    %v517 = vld [vmem:[#allocation5 + $0xc40] sm:$0xff]
    %v518 = vld [vmem:[#allocation5 + $0xc48] sm:$0xff]
    %v519 = vld [vmem:[#allocation5 + $0xc50] sm:$0xff]
    %v520 = vld [vmem:[#allocation5 + $0xc58] sm:$0xff]
    %v521 = vld [vmem:[#allocation5 + $0xc60] sm:$0xff]
    %v522 = vld [vmem:[#allocation5 + $0xc68] sm:$0xff]
    %v523 = vld [vmem:[#allocation5 + $0xc70] sm:$0xff]
    %v524 = vld [vmem:[#allocation5 + $0xc78] sm:$0xff]
    %v525 = vld [vmem:[#allocation5 + $0xc80] sm:$0xff]
    %v526 = vld [vmem:[#allocation5 + $0xc88] sm:$0xff]
    %v527 = vld [vmem:[#allocation5 + $0xc90] sm:$0xff]
    %v528 = vld [vmem:[#allocation5 + $0xc98] sm:$0xff]
    %v529 = vld [vmem:[#allocation5 + $0xca0] sm:$0xff]
    %v530 = vld [vmem:[#allocation5 + $0xca8] sm:$0xff]
    %v531 = vld [vmem:[#allocation5 + $0xcb0] sm:$0xff]
    %v532 = vld [vmem:[#allocation5 + $0xcb8] sm:$0xff]
    %v533 = vld [vmem:[#allocation5 + $0xcc0] sm:$0xff]
    %v534 = vld [vmem:[#allocation5 + $0xcc8] sm:$0xff]
    %v535 = vld [vmem:[#allocation5 + $0xcd0] sm:$0xff]
    %v536 = vld [vmem:[#allocation5 + $0xcd8] sm:$0xff]
    %v537 = vld [vmem:[#allocation5 + $0xce0] sm:$0xff]
    %v538 = vld [vmem:[#allocation5 + $0xce8] sm:$0xff]
    %v539 = vld [vmem:[#allocation5 + $0xcf0] sm:$0xff]
    %v540 = vld [vmem:[#allocation5 + $0xcf8] sm:$0xff]
    %v541 = vld [vmem:[#allocation5 + $0xd00] sm:$0xff]
    %v542 = vld [vmem:[#allocation5 + $0xd08] sm:$0xff]
    %v543 = vld [vmem:[#allocation5 + $0xd10] sm:$0xff]
    %v544 = vld [vmem:[#allocation5 + $0xd18] sm:$0xff]
    %v545 = vld [vmem:[#allocation5 + $0xd20] sm:$0xff]
    %v546 = vld [vmem:[#allocation5 + $0xd28] sm:$0xff]
    %v547 = vld [vmem:[#allocation5 + $0xd30] sm:$0xff]
    %v548 = vld [vmem:[#allocation5 + $0xd38] sm:$0xff]
    %v549 = vld [vmem:[#allocation5 + $0xd40] sm:$0xff]
    %v550 = vld [vmem:[#allocation5 + $0xd48] sm:$0xff]
    %v551 = vld [vmem:[#allocation5 + $0xd50] sm:$0xff]
    %v552 = vld [vmem:[#allocation5 + $0xd58] sm:$0xff]
    %v553 = vld [vmem:[#allocation5 + $0xd60] sm:$0xff]
    %v554 = vld [vmem:[#allocation5 + $0xd68] sm:$0xff]
    %v555 = vld [vmem:[#allocation5 + $0xd70] sm:$0xff]
    %v556 = vld [vmem:[#allocation5 + $0xd78] sm:$0xff]
    %v557 = vld [vmem:[#allocation5 + $0xd80] sm:$0xff]
    %v558 = vld [vmem:[#allocation5 + $0xd88] sm:$0xff]
    %v559 = vld [vmem:[#allocation5 + $0xd90] sm:$0xff]
    %v560 = vld [vmem:[#allocation5 + $0xd98] sm:$0xff]
    %v561 = vld [vmem:[#allocation5 + $0xda0] sm:$0xff]
    %v562 = vld [vmem:[#allocation5 + $0xda8] sm:$0xff]
    %v563 = vld [vmem:[#allocation5 + $0xdb0] sm:$0xff]
    %v564 = vld [vmem:[#allocation5 + $0xdb8] sm:$0xff]
    %v565 = vld [vmem:[#allocation5 + $0xdc0] sm:$0xff]
    %v566 = vld [vmem:[#allocation5 + $0xdc8] sm:$0xff]
    %v567 = vld [vmem:[#allocation5 + $0xdd0] sm:$0xff]
    %v568 = vld [vmem:[#allocation5 + $0xdd8] sm:$0xff]
    %v569 = vld [vmem:[#allocation5 + $0xde0] sm:$0xff]
    %v570 = vld [vmem:[#allocation5 + $0xde8] sm:$0xff]
    %v571 = vld [vmem:[#allocation5 + $0xdf0] sm:$0xff]
    %v572 = vld [vmem:[#allocation5 + $0xdf8] sm:$0xff]
    %v573 = vld [vmem:[#allocation5 + $0xe00] sm:$0xff]
    %v574 = vld [vmem:[#allocation5 + $0xe08] sm:$0xff]
    %v575 = vld [vmem:[#allocation5 + $0xe10] sm:$0xff]
    %v576 = vld [vmem:[#allocation5 + $0xe18] sm:$0xff]
    %v577 = vld [vmem:[#allocation5 + $0xe20] sm:$0xff]
    %v578 = vld [vmem:[#allocation5 + $0xe28] sm:$0xff]
    %v579 = vld [vmem:[#allocation5 + $0xe30] sm:$0xff]
    %v580 = vld [vmem:[#allocation5 + $0xe38] sm:$0xff]
    %v581 = vld [vmem:[#allocation5 + $0xe40] sm:$0xff]
    %v582 = vld [vmem:[#allocation5 + $0xe48] sm:$0xff]
    %v583 = vld [vmem:[#allocation5 + $0xe50] sm:$0xff]
    %v584 = vld [vmem:[#allocation5 + $0xe58] sm:$0xff]
    %v585 = vld [vmem:[#allocation5 + $0xe60] sm:$0xff]
    %v586 = vld [vmem:[#allocation5 + $0xe68] sm:$0xff]
    %v587 = vld [vmem:[#allocation5 + $0xe70] sm:$0xff]
    %v588 = vld [vmem:[#allocation5 + $0xe78] sm:$0xff]
    %v589 = vld [vmem:[#allocation5 + $0xe80] sm:$0xff]
    %v590 = vld [vmem:[#allocation5 + $0xe88] sm:$0xff]
    %v591 = vld [vmem:[#allocation5 + $0xe90] sm:$0xff]
    %v592 = vld [vmem:[#allocation5 + $0xe98] sm:$0xff]
    %v593 = vld [vmem:[#allocation5 + $0xea0] sm:$0xff]
    %v594 = vld [vmem:[#allocation5 + $0xea8] sm:$0xff]
    %v595 = vld [vmem:[#allocation5 + $0xeb0] sm:$0xff]
    %v596 = vld [vmem:[#allocation5 + $0xeb8] sm:$0xff]
    %v597 = vld [vmem:[#allocation5 + $0xec0] sm:$0xff]
    %v598 = vld [vmem:[#allocation5 + $0xec8] sm:$0xff]
    %v599 = vld [vmem:[#allocation5 + $0xed0] sm:$0xff]
    %v600 = vld [vmem:[#allocation5 + $0xed8] sm:$0xff]
    %v601 = vld [vmem:[#allocation5 + $0xee0] sm:$0xff]
    %v602 = vld [vmem:[#allocation5 + $0xee8] sm:$0xff]
    %v603 = vld [vmem:[#allocation5 + $0xef0] sm:$0xff]
    %v604 = vld [vmem:[#allocation5 + $0xef8] sm:$0xff]
    %v605 = vld [vmem:[#allocation5 + $0xf00] sm:$0xff]
    %v606 = vld [vmem:[#allocation5 + $0xf08] sm:$0xff]
    %v607 = vld [vmem:[#allocation5 + $0xf10] sm:$0xff]
    %v608 = vld [vmem:[#allocation5 + $0xf18] sm:$0xff]
    %v609 = vld [vmem:[#allocation5 + $0xf20] sm:$0xff]
    %v610 = vld [vmem:[#allocation5 + $0xf28] sm:$0xff]
    %v611 = vld [vmem:[#allocation5 + $0xf30] sm:$0xff]
    %v612 = vld [vmem:[#allocation5 + $0xf38] sm:$0xff]
    %v613 = vld [vmem:[#allocation5 + $0xf40] sm:$0xff]
    %v614 = vld [vmem:[#allocation5 + $0xf48] sm:$0xff]
    %v615 = vld [vmem:[#allocation5 + $0xf50] sm:$0xff]
    %v616 = vld [vmem:[#allocation5 + $0xf58] sm:$0xff]
    %v617 = vld [vmem:[#allocation5 + $0xf60] sm:$0xff]
    %v618 = vld [vmem:[#allocation5 + $0xf68] sm:$0xff]
    %v619 = vld [vmem:[#allocation5 + $0xf70] sm:$0xff]
    %v620 = vld [vmem:[#allocation5 + $0xf78] sm:$0xff]
    %v621 = vld [vmem:[#allocation5 + $0xf80] sm:$0xff]
    %v622 = vld [vmem:[#allocation5 + $0xf88] sm:$0xff]
    %v623 = vld [vmem:[#allocation5 + $0xf90] sm:$0xff]
    %v624 = vld [vmem:[#allocation5 + $0xf98] sm:$0xff]
    %v625 = vld [vmem:[#allocation5 + $0xfa0] sm:$0xff]
    %v626 = vld [vmem:[#allocation5 + $0xfa8] sm:$0xff]
    %v627 = vld [vmem:[#allocation5 + $0xfb0] sm:$0xff]
    %v628 = vld [vmem:[#allocation5 + $0xfb8] sm:$0xff]
    %v629 = vld [vmem:[#allocation5 + $0xfc0] sm:$0xff]
    %v630 = vld [vmem:[#allocation5 + $0xfc8] sm:$0xff]
    %v631 = vld [vmem:[#allocation5 + $0xfd0] sm:$0xff]
    %v632 = vld [vmem:[#allocation5 + $0xfd8] sm:$0xff]
    %v633 = vld [vmem:[#allocation5 + $0xfe0] sm:$0xff]
    %v634 = vld [vmem:[#allocation5 + $0xfe8] sm:$0xff]
    %v635 = vld [vmem:[#allocation5 + $0xff0] sm:$0xff]
    %v636 = vld [vmem:[#allocation5 + $0xff8] sm:$0xff]
    %v637 = vld [vmem:[#allocation7] sm:$0xff]
    %v639 = vlaneseq
    %v640 = vshrl.u32 %v639, 7
    %v641 = vsub.s32 0, %v640
    %v642 = vrot.slane %v637, %v641
    %v643 = vlaneseq
    %v644 = vshrl.u32 %v643, 7
    %v645 = vsub.s32 1, %v644
    %v646 = vrot.slane %v637, %v645
    %v647 = vlaneseq
    %v648 = vshrl.u32 %v647, 7
    %v649 = vsub.s32 2, %v648
    %v650 = vrot.slane %v637, %v649
    %v651 = vlaneseq
    %v652 = vshrl.u32 %v651, 7
    %v653 = vsub.s32 3, %v652
    %v654 = vrot.slane %v637, %v653
    %v655 = vlaneseq
    %v656 = vshrl.u32 %v655, 7
    %v657 = vsub.s32 4, %v656
    %v658 = vrot.slane %v637, %v657
    %v659 = vlaneseq
    %v660 = vshrl.u32 %v659, 7
    %v661 = vsub.s32 5, %v660
    %v662 = vrot.slane %v637, %v661
    %v663 = vlaneseq
    %v664 = vshrl.u32 %v663, 7
    %v665 = vsub.s32 6, %v664
    %v666 = vrot.slane %v637, %v665
    %v667 = vlaneseq
    %v668 = vshrl.u32 %v667, 7
    %v669 = vsub.s32 7, %v668
    %v670 = vrot.slane %v637, %v669
    %v687 = vunpack.c.l.b16 %v117
    %v688 = vunpack.c.h.b16 %v117
    %v689 = vunpack.c.l.b16 %v118
    %v690 = vunpack.c.h.b16 %v118
    %v691 = vunpack.c.l.b16 %v119
    %v692 = vunpack.c.h.b16 %v119
    %v693 = vunpack.c.l.b16 %v120
    %v694 = vunpack.c.h.b16 %v120
    %v695 = vunpack.c.l.b16 %v121
    %v696 = vunpack.c.h.b16 %v121
    %v697 = vunpack.c.l.b16 %v122
    %v698 = vunpack.c.h.b16 %v122
    %v699 = vunpack.c.l.b16 %v123
    %v700 = vunpack.c.h.b16 %v123
    %v701 = vunpack.c.l.b16 %v124
    %v702 = vunpack.c.h.b16 %v124
    %v703 = vpack.c.b16 %v695, %v687
    %v704 = vpack.c.b16 %v696, %v688
    %v705 = vpack.c.b16 %v697, %v689
    %v706 = vpack.c.b16 %v698, %v690
    %v707 = vpack.c.b16 %v699, %v691
    %v708 = vpack.c.b16 %v700, %v692
    %v709 = vpack.c.b16 %v701, %v693
    %v710 = vpack.c.b16 %v702, %v694
    %v1231 = vunpack.c.l.b16 %v125
    %v1232 = vunpack.c.h.b16 %v125
    %v1233 = vunpack.c.l.b16 %v126
    %v1234 = vunpack.c.h.b16 %v126
    %v1235 = vunpack.c.l.b16 %v127
    %v1236 = vunpack.c.h.b16 %v127
    %v1237 = vunpack.c.l.b16 %v128
    %v1238 = vunpack.c.h.b16 %v128
    %v1239 = vunpack.c.l.b16 %v129
    %v1240 = vunpack.c.h.b16 %v129
    %v1241 = vunpack.c.l.b16 %v130
    %v1242 = vunpack.c.h.b16 %v130
    %v1243 = vunpack.c.l.b16 %v131
    %v1244 = vunpack.c.h.b16 %v131
    %v1245 = vunpack.c.l.b16 %v132
    %v1246 = vunpack.c.h.b16 %v132
    %v1247 = vunpack.c.l.b16 %v133
    %v1248 = vunpack.c.h.b16 %v133
    %v1249 = vunpack.c.l.b16 %v134
    %v1250 = vunpack.c.h.b16 %v134
    %v1251 = vunpack.c.l.b16 %v135
    %v1252 = vunpack.c.h.b16 %v135
    %v1253 = vunpack.c.l.b16 %v136
    %v1254 = vunpack.c.h.b16 %v136
    %v1255 = vunpack.c.l.b16 %v137
    %v1256 = vunpack.c.h.b16 %v137
    %v1257 = vunpack.c.l.b16 %v138
    %v1258 = vunpack.c.h.b16 %v138
    %v1259 = vunpack.c.l.b16 %v139
    %v1260 = vunpack.c.h.b16 %v139
    %v1261 = vunpack.c.l.b16 %v140
    %v1262 = vunpack.c.h.b16 %v140
    %v1263 = vunpack.c.l.b16 %v141
    %v1264 = vunpack.c.h.b16 %v141
    %v1265 = vunpack.c.l.b16 %v142
    %v1266 = vunpack.c.h.b16 %v142
    %v1267 = vunpack.c.l.b16 %v143
    %v1268 = vunpack.c.h.b16 %v143
    %v1269 = vunpack.c.l.b16 %v144
    %v1270 = vunpack.c.h.b16 %v144
    %v1271 = vunpack.c.l.b16 %v145
    %v1272 = vunpack.c.h.b16 %v145
    %v1273 = vunpack.c.l.b16 %v146
    %v1274 = vunpack.c.h.b16 %v146
    %v1275 = vunpack.c.l.b16 %v147
    %v1276 = vunpack.c.h.b16 %v147
    %v1277 = vunpack.c.l.b16 %v148
    %v1278 = vunpack.c.h.b16 %v148
    %v1279 = vunpack.c.l.b16 %v149
    %v1280 = vunpack.c.h.b16 %v149
    %v1281 = vunpack.c.l.b16 %v150
    %v1282 = vunpack.c.h.b16 %v150
    %v1283 = vunpack.c.l.b16 %v151
    %v1284 = vunpack.c.h.b16 %v151
    %v1285 = vunpack.c.l.b16 %v152
    %v1286 = vunpack.c.h.b16 %v152
    %v1287 = vunpack.c.l.b16 %v153
    %v1288 = vunpack.c.h.b16 %v153
    %v1289 = vunpack.c.l.b16 %v154
    %v1290 = vunpack.c.h.b16 %v154
    %v1291 = vunpack.c.l.b16 %v155
    %v1292 = vunpack.c.h.b16 %v155
    %v1293 = vunpack.c.l.b16 %v156
    %v1294 = vunpack.c.h.b16 %v156
    %v1295 = vunpack.c.l.b16 %v157
    %v1296 = vunpack.c.h.b16 %v157
    %v1297 = vunpack.c.l.b16 %v158
    %v1298 = vunpack.c.h.b16 %v158
    %v1299 = vunpack.c.l.b16 %v159
    %v1300 = vunpack.c.h.b16 %v159
    %v1301 = vunpack.c.l.b16 %v160
    %v1302 = vunpack.c.h.b16 %v160
    %v1303 = vunpack.c.l.b16 %v161
    %v1304 = vunpack.c.h.b16 %v161
    %v1305 = vunpack.c.l.b16 %v162
    %v1306 = vunpack.c.h.b16 %v162
    %v1307 = vunpack.c.l.b16 %v163
    %v1308 = vunpack.c.h.b16 %v163
    %v1309 = vunpack.c.l.b16 %v164
    %v1310 = vunpack.c.h.b16 %v164
    %v1311 = vunpack.c.l.b16 %v165
    %v1312 = vunpack.c.h.b16 %v165
    %v1313 = vunpack.c.l.b16 %v166
    %v1314 = vunpack.c.h.b16 %v166
    %v1315 = vunpack.c.l.b16 %v167
    %v1316 = vunpack.c.h.b16 %v167
    %v1317 = vunpack.c.l.b16 %v168
    %v1318 = vunpack.c.h.b16 %v168
    %v1319 = vunpack.c.l.b16 %v169
    %v1320 = vunpack.c.h.b16 %v169
    %v1321 = vunpack.c.l.b16 %v170
    %v1322 = vunpack.c.h.b16 %v170
    %v1323 = vunpack.c.l.b16 %v171
    %v1324 = vunpack.c.h.b16 %v171
    %v1325 = vunpack.c.l.b16 %v172
    %v1326 = vunpack.c.h.b16 %v172
    %v1327 = vunpack.c.l.b16 %v173
    %v1328 = vunpack.c.h.b16 %v173
    %v1329 = vunpack.c.l.b16 %v174
    %v1330 = vunpack.c.h.b16 %v174
    %v1331 = vunpack.c.l.b16 %v175
    %v1332 = vunpack.c.h.b16 %v175
    %v1333 = vunpack.c.l.b16 %v176
    %v1334 = vunpack.c.h.b16 %v176
    %v1335 = vunpack.c.l.b16 %v177
    %v1336 = vunpack.c.h.b16 %v177
    %v1337 = vunpack.c.l.b16 %v178
    %v1338 = vunpack.c.h.b16 %v178
    %v1339 = vunpack.c.l.b16 %v179
    %v1340 = vunpack.c.h.b16 %v179
    %v1341 = vunpack.c.l.b16 %v180
    %v1342 = vunpack.c.h.b16 %v180
    %v1343 = vunpack.c.l.b16 %v181
    %v1344 = vunpack.c.h.b16 %v181
    %v1345 = vunpack.c.l.b16 %v182
    %v1346 = vunpack.c.h.b16 %v182
    %v1347 = vunpack.c.l.b16 %v183
    %v1348 = vunpack.c.h.b16 %v183
    %v1349 = vunpack.c.l.b16 %v184
    %v1350 = vunpack.c.h.b16 %v184
    %v1351 = vunpack.c.l.b16 %v185
    %v1352 = vunpack.c.h.b16 %v185
    %v1353 = vunpack.c.l.b16 %v186
    %v1354 = vunpack.c.h.b16 %v186
    %v1355 = vunpack.c.l.b16 %v187
    %v1356 = vunpack.c.h.b16 %v187
    %v1357 = vunpack.c.l.b16 %v188
    %v1358 = vunpack.c.h.b16 %v188
    %v1359 = vunpack.c.l.b16 %v189
    %v1360 = vunpack.c.h.b16 %v189
    %v1361 = vunpack.c.l.b16 %v190
    %v1362 = vunpack.c.h.b16 %v190
    %v1363 = vunpack.c.l.b16 %v191
    %v1364 = vunpack.c.h.b16 %v191
    %v1365 = vunpack.c.l.b16 %v192
    %v1366 = vunpack.c.h.b16 %v192
    %v1367 = vunpack.c.l.b16 %v193
    %v1368 = vunpack.c.h.b16 %v193
    %v1369 = vunpack.c.l.b16 %v194
    %v1370 = vunpack.c.h.b16 %v194
    %v1371 = vunpack.c.l.b16 %v195
    %v1372 = vunpack.c.h.b16 %v195
    %v1373 = vunpack.c.l.b16 %v196
    %v1374 = vunpack.c.h.b16 %v196
    %v1375 = vunpack.c.l.b16 %v197
    %v1376 = vunpack.c.h.b16 %v197
    %v1377 = vunpack.c.l.b16 %v198
    %v1378 = vunpack.c.h.b16 %v198
    %v1379 = vunpack.c.l.b16 %v199
    %v1380 = vunpack.c.h.b16 %v199
    %v1381 = vunpack.c.l.b16 %v200
    %v1382 = vunpack.c.h.b16 %v200
    %v1383 = vunpack.c.l.b16 %v201
    %v1384 = vunpack.c.h.b16 %v201
    %v1385 = vunpack.c.l.b16 %v202
    %v1386 = vunpack.c.h.b16 %v202
    %v1387 = vunpack.c.l.b16 %v203
    %v1388 = vunpack.c.h.b16 %v203
    %v1389 = vunpack.c.l.b16 %v204
    %v1390 = vunpack.c.h.b16 %v204
    %v1391 = vunpack.c.l.b16 %v205
    %v1392 = vunpack.c.h.b16 %v205
    %v1393 = vunpack.c.l.b16 %v206
    %v1394 = vunpack.c.h.b16 %v206
    %v1395 = vunpack.c.l.b16 %v207
    %v1396 = vunpack.c.h.b16 %v207
    %v1397 = vunpack.c.l.b16 %v208
    %v1398 = vunpack.c.h.b16 %v208
    %v1399 = vunpack.c.l.b16 %v209
    %v1400 = vunpack.c.h.b16 %v209
    %v1401 = vunpack.c.l.b16 %v210
    %v1402 = vunpack.c.h.b16 %v210
    %v1403 = vunpack.c.l.b16 %v211
    %v1404 = vunpack.c.h.b16 %v211
    %v1405 = vunpack.c.l.b16 %v212
    %v1406 = vunpack.c.h.b16 %v212
    %v1407 = vunpack.c.l.b16 %v213
    %v1408 = vunpack.c.h.b16 %v213
    %v1409 = vunpack.c.l.b16 %v214
    %v1410 = vunpack.c.h.b16 %v214
    %v1411 = vunpack.c.l.b16 %v215
    %v1412 = vunpack.c.h.b16 %v215
    %v1413 = vunpack.c.l.b16 %v216
    %v1414 = vunpack.c.h.b16 %v216
    %v1415 = vunpack.c.l.b16 %v217
    %v1416 = vunpack.c.h.b16 %v217
    %v1417 = vunpack.c.l.b16 %v218
    %v1418 = vunpack.c.h.b16 %v218
    %v1419 = vunpack.c.l.b16 %v219
    %v1420 = vunpack.c.h.b16 %v219
    %v1421 = vunpack.c.l.b16 %v220
    %v1422 = vunpack.c.h.b16 %v220
    %v1423 = vunpack.c.l.b16 %v221
    %v1424 = vunpack.c.h.b16 %v221
    %v1425 = vunpack.c.l.b16 %v222
    %v1426 = vunpack.c.h.b16 %v222
    %v1427 = vunpack.c.l.b16 %v223
    %v1428 = vunpack.c.h.b16 %v223
    %v1429 = vunpack.c.l.b16 %v224
    %v1430 = vunpack.c.h.b16 %v224
    %v1431 = vunpack.c.l.b16 %v225
    %v1432 = vunpack.c.h.b16 %v225
    %v1433 = vunpack.c.l.b16 %v226
    %v1434 = vunpack.c.h.b16 %v226
    %v1435 = vunpack.c.l.b16 %v227
    %v1436 = vunpack.c.h.b16 %v227
    %v1437 = vunpack.c.l.b16 %v228
    %v1438 = vunpack.c.h.b16 %v228
    %v1439 = vunpack.c.l.b16 %v229
    %v1440 = vunpack.c.h.b16 %v229
    %v1441 = vunpack.c.l.b16 %v230
    %v1442 = vunpack.c.h.b16 %v230
    %v1443 = vunpack.c.l.b16 %v231
    %v1444 = vunpack.c.h.b16 %v231
    %v1445 = vunpack.c.l.b16 %v232
    %v1446 = vunpack.c.h.b16 %v232
    %v1447 = vunpack.c.l.b16 %v233
    %v1448 = vunpack.c.h.b16 %v233
    %v1449 = vunpack.c.l.b16 %v234
    %v1450 = vunpack.c.h.b16 %v234
    %v1451 = vunpack.c.l.b16 %v235
    %v1452 = vunpack.c.h.b16 %v235
    %v1453 = vunpack.c.l.b16 %v236
    %v1454 = vunpack.c.h.b16 %v236
    %v1455 = vunpack.c.l.b16 %v237
    %v1456 = vunpack.c.h.b16 %v237
    %v1457 = vunpack.c.l.b16 %v238
    %v1458 = vunpack.c.h.b16 %v238
    %v1459 = vunpack.c.l.b16 %v239
    %v1460 = vunpack.c.h.b16 %v239
    %v1461 = vunpack.c.l.b16 %v240
    %v1462 = vunpack.c.h.b16 %v240
    %v1463 = vunpack.c.l.b16 %v241
    %v1464 = vunpack.c.h.b16 %v241
    %v1465 = vunpack.c.l.b16 %v242
    %v1466 = vunpack.c.h.b16 %v242
    %v1467 = vunpack.c.l.b16 %v243
    %v1468 = vunpack.c.h.b16 %v243
    %v1469 = vunpack.c.l.b16 %v244
    %v1470 = vunpack.c.h.b16 %v244
    %v1471 = vunpack.c.l.b16 %v245
    %v1472 = vunpack.c.h.b16 %v245
    %v1473 = vunpack.c.l.b16 %v246
    %v1474 = vunpack.c.h.b16 %v246
    %v1475 = vunpack.c.l.b16 %v247
    %v1476 = vunpack.c.h.b16 %v247
    %v1477 = vunpack.c.l.b16 %v248
    %v1478 = vunpack.c.h.b16 %v248
    %v1479 = vunpack.c.l.b16 %v249
    %v1480 = vunpack.c.h.b16 %v249
    %v1481 = vunpack.c.l.b16 %v250
    %v1482 = vunpack.c.h.b16 %v250
    %v1483 = vunpack.c.l.b16 %v251
    %v1484 = vunpack.c.h.b16 %v251
    %v1485 = vunpack.c.l.b16 %v252
    %v1486 = vunpack.c.h.b16 %v252
    %v1487 = vunpack.c.l.b16 %v253
    %v1488 = vunpack.c.h.b16 %v253
    %v1489 = vunpack.c.l.b16 %v254
    %v1490 = vunpack.c.h.b16 %v254
    %v1491 = vunpack.c.l.b16 %v255
    %v1492 = vunpack.c.h.b16 %v255
    %v1493 = vunpack.c.l.b16 %v256
    %v1494 = vunpack.c.h.b16 %v256
    %v1495 = vunpack.c.l.b16 %v257
    %v1496 = vunpack.c.h.b16 %v257
    %v1497 = vunpack.c.l.b16 %v258
    %v1498 = vunpack.c.h.b16 %v258
    %v1499 = vunpack.c.l.b16 %v259
    %v1500 = vunpack.c.h.b16 %v259
    %v1501 = vunpack.c.l.b16 %v260
    %v1502 = vunpack.c.h.b16 %v260
    %v1503 = vunpack.c.l.b16 %v261
    %v1504 = vunpack.c.h.b16 %v261
    %v1505 = vunpack.c.l.b16 %v262
    %v1506 = vunpack.c.h.b16 %v262
    %v1507 = vunpack.c.l.b16 %v263
    %v1508 = vunpack.c.h.b16 %v263
    %v1509 = vunpack.c.l.b16 %v264
    %v1510 = vunpack.c.h.b16 %v264
    %v1511 = vunpack.c.l.b16 %v265
    %v1512 = vunpack.c.h.b16 %v265
    %v1513 = vunpack.c.l.b16 %v266
    %v1514 = vunpack.c.h.b16 %v266
    %v1515 = vunpack.c.l.b16 %v267
    %v1516 = vunpack.c.h.b16 %v267
    %v1517 = vunpack.c.l.b16 %v268
    %v1518 = vunpack.c.h.b16 %v268
    %v1519 = vunpack.c.l.b16 %v269
    %v1520 = vunpack.c.h.b16 %v269
    %v1521 = vunpack.c.l.b16 %v270
    %v1522 = vunpack.c.h.b16 %v270
    %v1523 = vunpack.c.l.b16 %v271
    %v1524 = vunpack.c.h.b16 %v271
    %v1525 = vunpack.c.l.b16 %v272
    %v1526 = vunpack.c.h.b16 %v272
    %v1527 = vunpack.c.l.b16 %v273
    %v1528 = vunpack.c.h.b16 %v273
    %v1529 = vunpack.c.l.b16 %v274
    %v1530 = vunpack.c.h.b16 %v274
    %v1531 = vunpack.c.l.b16 %v275
    %v1532 = vunpack.c.h.b16 %v275
    %v1533 = vunpack.c.l.b16 %v276
    %v1534 = vunpack.c.h.b16 %v276
    %v1535 = vunpack.c.l.b16 %v277
    %v1536 = vunpack.c.h.b16 %v277
    %v1537 = vunpack.c.l.b16 %v278
    %v1538 = vunpack.c.h.b16 %v278
    %v1539 = vunpack.c.l.b16 %v279
    %v1540 = vunpack.c.h.b16 %v279
    %v1541 = vunpack.c.l.b16 %v280
    %v1542 = vunpack.c.h.b16 %v280
    %v1543 = vunpack.c.l.b16 %v281
    %v1544 = vunpack.c.h.b16 %v281
    %v1545 = vunpack.c.l.b16 %v282
    %v1546 = vunpack.c.h.b16 %v282
    %v1547 = vunpack.c.l.b16 %v283
    %v1548 = vunpack.c.h.b16 %v283
    %v1549 = vunpack.c.l.b16 %v284
    %v1550 = vunpack.c.h.b16 %v284
    %v1551 = vunpack.c.l.b16 %v285
    %v1552 = vunpack.c.h.b16 %v285
    %v1553 = vunpack.c.l.b16 %v286
    %v1554 = vunpack.c.h.b16 %v286
    %v1555 = vunpack.c.l.b16 %v287
    %v1556 = vunpack.c.h.b16 %v287
    %v1557 = vunpack.c.l.b16 %v288
    %v1558 = vunpack.c.h.b16 %v288
    %v1559 = vunpack.c.l.b16 %v289
    %v1560 = vunpack.c.h.b16 %v289
    %v1561 = vunpack.c.l.b16 %v290
    %v1562 = vunpack.c.h.b16 %v290
    %v1563 = vunpack.c.l.b16 %v291
    %v1564 = vunpack.c.h.b16 %v291
    %v1565 = vunpack.c.l.b16 %v292
    %v1566 = vunpack.c.h.b16 %v292
    %v1567 = vunpack.c.l.b16 %v293
    %v1568 = vunpack.c.h.b16 %v293
    %v1569 = vunpack.c.l.b16 %v294
    %v1570 = vunpack.c.h.b16 %v294
    %v1571 = vunpack.c.l.b16 %v295
    %v1572 = vunpack.c.h.b16 %v295
    %v1573 = vunpack.c.l.b16 %v296
    %v1574 = vunpack.c.h.b16 %v296
    %v1575 = vunpack.c.l.b16 %v297
    %v1576 = vunpack.c.h.b16 %v297
    %v1577 = vunpack.c.l.b16 %v298
    %v1578 = vunpack.c.h.b16 %v298
    %v1579 = vunpack.c.l.b16 %v299
    %v1580 = vunpack.c.h.b16 %v299
    %v1581 = vunpack.c.l.b16 %v300
    %v1582 = vunpack.c.h.b16 %v300
    %v1583 = vunpack.c.l.b16 %v301
    %v1584 = vunpack.c.h.b16 %v301
    %v1585 = vunpack.c.l.b16 %v302
    %v1586 = vunpack.c.h.b16 %v302
    %v1587 = vunpack.c.l.b16 %v303
    %v1588 = vunpack.c.h.b16 %v303
    %v1589 = vunpack.c.l.b16 %v304
    %v1590 = vunpack.c.h.b16 %v304
    %v1591 = vunpack.c.l.b16 %v305
    %v1592 = vunpack.c.h.b16 %v305
    %v1593 = vunpack.c.l.b16 %v306
    %v1594 = vunpack.c.h.b16 %v306
    %v1595 = vunpack.c.l.b16 %v307
    %v1596 = vunpack.c.h.b16 %v307
    %v1597 = vunpack.c.l.b16 %v308
    %v1598 = vunpack.c.h.b16 %v308
    %v1599 = vunpack.c.l.b16 %v309
    %v1600 = vunpack.c.h.b16 %v309
    %v1601 = vunpack.c.l.b16 %v310
    %v1602 = vunpack.c.h.b16 %v310
    %v1603 = vunpack.c.l.b16 %v311
    %v1604 = vunpack.c.h.b16 %v311
    %v1605 = vunpack.c.l.b16 %v312
    %v1606 = vunpack.c.h.b16 %v312
    %v1607 = vunpack.c.l.b16 %v313
    %v1608 = vunpack.c.h.b16 %v313
    %v1609 = vunpack.c.l.b16 %v314
    %v1610 = vunpack.c.h.b16 %v314
    %v1611 = vunpack.c.l.b16 %v315
    %v1612 = vunpack.c.h.b16 %v315
    %v1613 = vunpack.c.l.b16 %v316
    %v1614 = vunpack.c.h.b16 %v316
    %v1615 = vunpack.c.l.b16 %v317
    %v1616 = vunpack.c.h.b16 %v317
    %v1617 = vunpack.c.l.b16 %v318
    %v1618 = vunpack.c.h.b16 %v318
    %v1619 = vunpack.c.l.b16 %v319
    %v1620 = vunpack.c.h.b16 %v319
    %v1621 = vunpack.c.l.b16 %v320
    %v1622 = vunpack.c.h.b16 %v320
    %v1623 = vunpack.c.l.b16 %v321
    %v1624 = vunpack.c.h.b16 %v321
    %v1625 = vunpack.c.l.b16 %v322
    %v1626 = vunpack.c.h.b16 %v322
    %v1627 = vunpack.c.l.b16 %v323
    %v1628 = vunpack.c.h.b16 %v323
    %v1629 = vunpack.c.l.b16 %v324
    %v1630 = vunpack.c.h.b16 %v324
    %v1631 = vunpack.c.l.b16 %v325
    %v1632 = vunpack.c.h.b16 %v325
    %v1633 = vunpack.c.l.b16 %v326
    %v1634 = vunpack.c.h.b16 %v326
    %v1635 = vunpack.c.l.b16 %v327
    %v1636 = vunpack.c.h.b16 %v327
    %v1637 = vunpack.c.l.b16 %v328
    %v1638 = vunpack.c.h.b16 %v328
    %v1639 = vunpack.c.l.b16 %v329
    %v1640 = vunpack.c.h.b16 %v329
    %v1641 = vunpack.c.l.b16 %v330
    %v1642 = vunpack.c.h.b16 %v330
    %v1643 = vunpack.c.l.b16 %v331
    %v1644 = vunpack.c.h.b16 %v331
    %v1645 = vunpack.c.l.b16 %v332
    %v1646 = vunpack.c.h.b16 %v332
    %v1647 = vunpack.c.l.b16 %v333
    %v1648 = vunpack.c.h.b16 %v333
    %v1649 = vunpack.c.l.b16 %v334
    %v1650 = vunpack.c.h.b16 %v334
    %v1651 = vunpack.c.l.b16 %v335
    %v1652 = vunpack.c.h.b16 %v335
    %v1653 = vunpack.c.l.b16 %v336
    %v1654 = vunpack.c.h.b16 %v336
    %v1655 = vunpack.c.l.b16 %v337
    %v1656 = vunpack.c.h.b16 %v337
    %v1657 = vunpack.c.l.b16 %v338
    %v1658 = vunpack.c.h.b16 %v338
    %v1659 = vunpack.c.l.b16 %v339
    %v1660 = vunpack.c.h.b16 %v339
    %v1661 = vunpack.c.l.b16 %v340
    %v1662 = vunpack.c.h.b16 %v340
    %v1663 = vunpack.c.l.b16 %v341
    %v1664 = vunpack.c.h.b16 %v341
    %v1665 = vunpack.c.l.b16 %v342
    %v1666 = vunpack.c.h.b16 %v342
    %v1667 = vunpack.c.l.b16 %v343
    %v1668 = vunpack.c.h.b16 %v343
    %v1669 = vunpack.c.l.b16 %v344
    %v1670 = vunpack.c.h.b16 %v344
    %v1671 = vunpack.c.l.b16 %v345
    %v1672 = vunpack.c.h.b16 %v345
    %v1673 = vunpack.c.l.b16 %v346
    %v1674 = vunpack.c.h.b16 %v346
    %v1675 = vunpack.c.l.b16 %v347
    %v1676 = vunpack.c.h.b16 %v347
    %v1677 = vunpack.c.l.b16 %v348
    %v1678 = vunpack.c.h.b16 %v348
    %v1679 = vunpack.c.l.b16 %v349
    %v1680 = vunpack.c.h.b16 %v349
    %v1681 = vunpack.c.l.b16 %v350
    %v1682 = vunpack.c.h.b16 %v350
    %v1683 = vunpack.c.l.b16 %v351
    %v1684 = vunpack.c.h.b16 %v351
    %v1685 = vunpack.c.l.b16 %v352
    %v1686 = vunpack.c.h.b16 %v352
    %v1687 = vunpack.c.l.b16 %v353
    %v1688 = vunpack.c.h.b16 %v353
    %v1689 = vunpack.c.l.b16 %v354
    %v1690 = vunpack.c.h.b16 %v354
    %v1691 = vunpack.c.l.b16 %v355
    %v1692 = vunpack.c.h.b16 %v355
    %v1693 = vunpack.c.l.b16 %v356
    %v1694 = vunpack.c.h.b16 %v356
    %v1695 = vunpack.c.l.b16 %v357
    %v1696 = vunpack.c.h.b16 %v357
    %v1697 = vunpack.c.l.b16 %v358
    %v1698 = vunpack.c.h.b16 %v358
    %v1699 = vunpack.c.l.b16 %v359
    %v1700 = vunpack.c.h.b16 %v359
    %v1701 = vunpack.c.l.b16 %v360
    %v1702 = vunpack.c.h.b16 %v360
    %v1703 = vunpack.c.l.b16 %v361
    %v1704 = vunpack.c.h.b16 %v361
    %v1705 = vunpack.c.l.b16 %v362
    %v1706 = vunpack.c.h.b16 %v362
    %v1707 = vunpack.c.l.b16 %v363
    %v1708 = vunpack.c.h.b16 %v363
    %v1709 = vunpack.c.l.b16 %v364
    %v1710 = vunpack.c.h.b16 %v364
    %v1711 = vunpack.c.l.b16 %v365
    %v1712 = vunpack.c.h.b16 %v365
    %v1713 = vunpack.c.l.b16 %v366
    %v1714 = vunpack.c.h.b16 %v366
    %v1715 = vunpack.c.l.b16 %v367
    %v1716 = vunpack.c.h.b16 %v367
    %v1717 = vunpack.c.l.b16 %v368
    %v1718 = vunpack.c.h.b16 %v368
    %v1719 = vunpack.c.l.b16 %v369
    %v1720 = vunpack.c.h.b16 %v369
    %v1721 = vunpack.c.l.b16 %v370
    %v1722 = vunpack.c.h.b16 %v370
    %v1723 = vunpack.c.l.b16 %v371
    %v1724 = vunpack.c.h.b16 %v371
    %v1725 = vunpack.c.l.b16 %v372
    %v1726 = vunpack.c.h.b16 %v372
    %v1727 = vunpack.c.l.b16 %v373
    %v1728 = vunpack.c.h.b16 %v373
    %v1729 = vunpack.c.l.b16 %v374
    %v1730 = vunpack.c.h.b16 %v374
    %v1731 = vunpack.c.l.b16 %v375
    %v1732 = vunpack.c.h.b16 %v375
    %v1733 = vunpack.c.l.b16 %v376
    %v1734 = vunpack.c.h.b16 %v376
    %v1735 = vunpack.c.l.b16 %v377
    %v1736 = vunpack.c.h.b16 %v377
    %v1737 = vunpack.c.l.b16 %v378
    %v1738 = vunpack.c.h.b16 %v378
    %v1739 = vunpack.c.l.b16 %v379
    %v1740 = vunpack.c.h.b16 %v379
    %v1741 = vunpack.c.l.b16 %v380
    %v1742 = vunpack.c.h.b16 %v380
    %v1743 = vunpack.c.l.b16 %v381
    %v1744 = vunpack.c.h.b16 %v381
    %v1745 = vunpack.c.l.b16 %v382
    %v1746 = vunpack.c.h.b16 %v382
    %v1747 = vunpack.c.l.b16 %v383
    %v1748 = vunpack.c.h.b16 %v383
    %v1749 = vunpack.c.l.b16 %v384
    %v1750 = vunpack.c.h.b16 %v384
    %v1751 = vunpack.c.l.b16 %v385
    %v1752 = vunpack.c.h.b16 %v385
    %v1753 = vunpack.c.l.b16 %v386
    %v1754 = vunpack.c.h.b16 %v386
    %v1755 = vunpack.c.l.b16 %v387
    %v1756 = vunpack.c.h.b16 %v387
    %v1757 = vunpack.c.l.b16 %v388
    %v1758 = vunpack.c.h.b16 %v388
    %v1759 = vunpack.c.l.b16 %v389
    %v1760 = vunpack.c.h.b16 %v389
    %v1761 = vunpack.c.l.b16 %v390
    %v1762 = vunpack.c.h.b16 %v390
    %v1763 = vunpack.c.l.b16 %v391
    %v1764 = vunpack.c.h.b16 %v391
    %v1765 = vunpack.c.l.b16 %v392
    %v1766 = vunpack.c.h.b16 %v392
    %v1767 = vunpack.c.l.b16 %v393
    %v1768 = vunpack.c.h.b16 %v393
    %v1769 = vunpack.c.l.b16 %v394
    %v1770 = vunpack.c.h.b16 %v394
    %v1771 = vunpack.c.l.b16 %v395
    %v1772 = vunpack.c.h.b16 %v395
    %v1773 = vunpack.c.l.b16 %v396
    %v1774 = vunpack.c.h.b16 %v396
    %v1775 = vunpack.c.l.b16 %v397
    %v1776 = vunpack.c.h.b16 %v397
    %v1777 = vunpack.c.l.b16 %v398
    %v1778 = vunpack.c.h.b16 %v398
    %v1779 = vunpack.c.l.b16 %v399
    %v1780 = vunpack.c.h.b16 %v399
    %v1781 = vunpack.c.l.b16 %v400
    %v1782 = vunpack.c.h.b16 %v400
    %v1783 = vunpack.c.l.b16 %v401
    %v1784 = vunpack.c.h.b16 %v401
    %v1785 = vunpack.c.l.b16 %v402
    %v1786 = vunpack.c.h.b16 %v402
    %v1787 = vunpack.c.l.b16 %v403
    %v1788 = vunpack.c.h.b16 %v403
    %v1789 = vunpack.c.l.b16 %v404
    %v1790 = vunpack.c.h.b16 %v404
    %v1791 = vunpack.c.l.b16 %v405
    %v1792 = vunpack.c.h.b16 %v405
    %v1793 = vunpack.c.l.b16 %v406
    %v1794 = vunpack.c.h.b16 %v406
    %v1795 = vunpack.c.l.b16 %v407
    %v1796 = vunpack.c.h.b16 %v407
    %v1797 = vunpack.c.l.b16 %v408
    %v1798 = vunpack.c.h.b16 %v408
    %v1799 = vunpack.c.l.b16 %v409
    %v1800 = vunpack.c.h.b16 %v409
    %v1801 = vunpack.c.l.b16 %v410
    %v1802 = vunpack.c.h.b16 %v410
    %v1803 = vunpack.c.l.b16 %v411
    %v1804 = vunpack.c.h.b16 %v411
    %v1805 = vunpack.c.l.b16 %v412
    %v1806 = vunpack.c.h.b16 %v412
    %v1807 = vunpack.c.l.b16 %v413
    %v1808 = vunpack.c.h.b16 %v413
    %v1809 = vunpack.c.l.b16 %v414
    %v1810 = vunpack.c.h.b16 %v414
    %v1811 = vunpack.c.l.b16 %v415
    %v1812 = vunpack.c.h.b16 %v415
    %v1813 = vunpack.c.l.b16 %v416
    %v1814 = vunpack.c.h.b16 %v416
    %v1815 = vunpack.c.l.b16 %v417
    %v1816 = vunpack.c.h.b16 %v417
    %v1817 = vunpack.c.l.b16 %v418
    %v1818 = vunpack.c.h.b16 %v418
    %v1819 = vunpack.c.l.b16 %v419
    %v1820 = vunpack.c.h.b16 %v419
    %v1821 = vunpack.c.l.b16 %v420
    %v1822 = vunpack.c.h.b16 %v420
    %v1823 = vunpack.c.l.b16 %v421
    %v1824 = vunpack.c.h.b16 %v421
    %v1825 = vunpack.c.l.b16 %v422
    %v1826 = vunpack.c.h.b16 %v422
    %v1827 = vunpack.c.l.b16 %v423
    %v1828 = vunpack.c.h.b16 %v423
    %v1829 = vunpack.c.l.b16 %v424
    %v1830 = vunpack.c.h.b16 %v424
    %v1831 = vunpack.c.l.b16 %v425
    %v1832 = vunpack.c.h.b16 %v425
    %v1833 = vunpack.c.l.b16 %v426
    %v1834 = vunpack.c.h.b16 %v426
    %v1835 = vunpack.c.l.b16 %v427
    %v1836 = vunpack.c.h.b16 %v427
    %v1837 = vunpack.c.l.b16 %v428
    %v1838 = vunpack.c.h.b16 %v428
    %v1839 = vunpack.c.l.b16 %v429
    %v1840 = vunpack.c.h.b16 %v429
    %v1841 = vunpack.c.l.b16 %v430
    %v1842 = vunpack.c.h.b16 %v430
    %v1843 = vunpack.c.l.b16 %v431
    %v1844 = vunpack.c.h.b16 %v431
    %v1845 = vunpack.c.l.b16 %v432
    %v1846 = vunpack.c.h.b16 %v432
    %v1847 = vunpack.c.l.b16 %v433
    %v1848 = vunpack.c.h.b16 %v433
    %v1849 = vunpack.c.l.b16 %v434
    %v1850 = vunpack.c.h.b16 %v434
    %v1851 = vunpack.c.l.b16 %v435
    %v1852 = vunpack.c.h.b16 %v435
    %v1853 = vunpack.c.l.b16 %v436
    %v1854 = vunpack.c.h.b16 %v436
    %v1855 = vunpack.c.l.b16 %v437
    %v1856 = vunpack.c.h.b16 %v437
    %v1857 = vunpack.c.l.b16 %v438
    %v1858 = vunpack.c.h.b16 %v438
    %v1859 = vunpack.c.l.b16 %v439
    %v1860 = vunpack.c.h.b16 %v439
    %v1861 = vunpack.c.l.b16 %v440
    %v1862 = vunpack.c.h.b16 %v440
    %v1863 = vunpack.c.l.b16 %v441
    %v1864 = vunpack.c.h.b16 %v441
    %v1865 = vunpack.c.l.b16 %v442
    %v1866 = vunpack.c.h.b16 %v442
    %v1867 = vunpack.c.l.b16 %v443
    %v1868 = vunpack.c.h.b16 %v443
    %v1869 = vunpack.c.l.b16 %v444
    %v1870 = vunpack.c.h.b16 %v444
    %v1871 = vunpack.c.l.b16 %v445
    %v1872 = vunpack.c.h.b16 %v445
    %v1873 = vunpack.c.l.b16 %v446
    %v1874 = vunpack.c.h.b16 %v446
    %v1875 = vunpack.c.l.b16 %v447
    %v1876 = vunpack.c.h.b16 %v447
    %v1877 = vunpack.c.l.b16 %v448
    %v1878 = vunpack.c.h.b16 %v448
    %v1879 = vunpack.c.l.b16 %v449
    %v1880 = vunpack.c.h.b16 %v449
    %v1881 = vunpack.c.l.b16 %v450
    %v1882 = vunpack.c.h.b16 %v450
    %v1883 = vunpack.c.l.b16 %v451
    %v1884 = vunpack.c.h.b16 %v451
    %v1885 = vunpack.c.l.b16 %v452
    %v1886 = vunpack.c.h.b16 %v452
    %v1887 = vunpack.c.l.b16 %v453
    %v1888 = vunpack.c.h.b16 %v453
    %v1889 = vunpack.c.l.b16 %v454
    %v1890 = vunpack.c.h.b16 %v454
    %v1891 = vunpack.c.l.b16 %v455
    %v1892 = vunpack.c.h.b16 %v455
    %v1893 = vunpack.c.l.b16 %v456
    %v1894 = vunpack.c.h.b16 %v456
    %v1895 = vunpack.c.l.b16 %v457
    %v1896 = vunpack.c.h.b16 %v457
    %v1897 = vunpack.c.l.b16 %v458
    %v1898 = vunpack.c.h.b16 %v458
    %v1899 = vunpack.c.l.b16 %v459
    %v1900 = vunpack.c.h.b16 %v459
    %v1901 = vunpack.c.l.b16 %v460
    %v1902 = vunpack.c.h.b16 %v460
    %v1903 = vunpack.c.l.b16 %v461
    %v1904 = vunpack.c.h.b16 %v461
    %v1905 = vunpack.c.l.b16 %v462
    %v1906 = vunpack.c.h.b16 %v462
    %v1907 = vunpack.c.l.b16 %v463
    %v1908 = vunpack.c.h.b16 %v463
    %v1909 = vunpack.c.l.b16 %v464
    %v1910 = vunpack.c.h.b16 %v464
    %v1911 = vunpack.c.l.b16 %v465
    %v1912 = vunpack.c.h.b16 %v465
    %v1913 = vunpack.c.l.b16 %v466
    %v1914 = vunpack.c.h.b16 %v466
    %v1915 = vunpack.c.l.b16 %v467
    %v1916 = vunpack.c.h.b16 %v467
    %v1917 = vunpack.c.l.b16 %v468
    %v1918 = vunpack.c.h.b16 %v468
    %v1919 = vunpack.c.l.b16 %v469
    %v1920 = vunpack.c.h.b16 %v469
    %v1921 = vunpack.c.l.b16 %v470
    %v1922 = vunpack.c.h.b16 %v470
    %v1923 = vunpack.c.l.b16 %v471
    %v1924 = vunpack.c.h.b16 %v471
    %v1925 = vunpack.c.l.b16 %v472
    %v1926 = vunpack.c.h.b16 %v472
    %v1927 = vunpack.c.l.b16 %v473
    %v1928 = vunpack.c.h.b16 %v473
    %v1929 = vunpack.c.l.b16 %v474
    %v1930 = vunpack.c.h.b16 %v474
    %v1931 = vunpack.c.l.b16 %v475
    %v1932 = vunpack.c.h.b16 %v475
    %v1933 = vunpack.c.l.b16 %v476
    %v1934 = vunpack.c.h.b16 %v476
    %v1935 = vunpack.c.l.b16 %v477
    %v1936 = vunpack.c.h.b16 %v477
    %v1937 = vunpack.c.l.b16 %v478
    %v1938 = vunpack.c.h.b16 %v478
    %v1939 = vunpack.c.l.b16 %v479
    %v1940 = vunpack.c.h.b16 %v479
    %v1941 = vunpack.c.l.b16 %v480
    %v1942 = vunpack.c.h.b16 %v480
    %v1943 = vunpack.c.l.b16 %v481
    %v1944 = vunpack.c.h.b16 %v481
    %v1945 = vunpack.c.l.b16 %v482
    %v1946 = vunpack.c.h.b16 %v482
    %v1947 = vunpack.c.l.b16 %v483
    %v1948 = vunpack.c.h.b16 %v483
    %v1949 = vunpack.c.l.b16 %v484
    %v1950 = vunpack.c.h.b16 %v484
    %v1951 = vunpack.c.l.b16 %v485
    %v1952 = vunpack.c.h.b16 %v485
    %v1953 = vunpack.c.l.b16 %v486
    %v1954 = vunpack.c.h.b16 %v486
    %v1955 = vunpack.c.l.b16 %v487
    %v1956 = vunpack.c.h.b16 %v487
    %v1957 = vunpack.c.l.b16 %v488
    %v1958 = vunpack.c.h.b16 %v488
    %v1959 = vunpack.c.l.b16 %v489
    %v1960 = vunpack.c.h.b16 %v489
    %v1961 = vunpack.c.l.b16 %v490
    %v1962 = vunpack.c.h.b16 %v490
    %v1963 = vunpack.c.l.b16 %v491
    %v1964 = vunpack.c.h.b16 %v491
    %v1965 = vunpack.c.l.b16 %v492
    %v1966 = vunpack.c.h.b16 %v492
    %v1967 = vunpack.c.l.b16 %v493
    %v1968 = vunpack.c.h.b16 %v493
    %v1969 = vunpack.c.l.b16 %v494
    %v1970 = vunpack.c.h.b16 %v494
    %v1971 = vunpack.c.l.b16 %v495
    %v1972 = vunpack.c.h.b16 %v495
    %v1973 = vunpack.c.l.b16 %v496
    %v1974 = vunpack.c.h.b16 %v496
    %v1975 = vunpack.c.l.b16 %v497
    %v1976 = vunpack.c.h.b16 %v497
    %v1977 = vunpack.c.l.b16 %v498
    %v1978 = vunpack.c.h.b16 %v498
    %v1979 = vunpack.c.l.b16 %v499
    %v1980 = vunpack.c.h.b16 %v499
    %v1981 = vunpack.c.l.b16 %v500
    %v1982 = vunpack.c.h.b16 %v500
    %v1983 = vunpack.c.l.b16 %v501
    %v1984 = vunpack.c.h.b16 %v501
    %v1985 = vunpack.c.l.b16 %v502
    %v1986 = vunpack.c.h.b16 %v502
    %v1987 = vunpack.c.l.b16 %v503
    %v1988 = vunpack.c.h.b16 %v503
    %v1989 = vunpack.c.l.b16 %v504
    %v1990 = vunpack.c.h.b16 %v504
    %v1991 = vunpack.c.l.b16 %v505
    %v1992 = vunpack.c.h.b16 %v505
    %v1993 = vunpack.c.l.b16 %v506
    %v1994 = vunpack.c.h.b16 %v506
    %v1995 = vunpack.c.l.b16 %v507
    %v1996 = vunpack.c.h.b16 %v507
    %v1997 = vunpack.c.l.b16 %v508
    %v1998 = vunpack.c.h.b16 %v508
    %v1999 = vunpack.c.l.b16 %v509
    %v2000 = vunpack.c.h.b16 %v509
    %v2001 = vunpack.c.l.b16 %v510
    %v2002 = vunpack.c.h.b16 %v510
    %v2003 = vunpack.c.l.b16 %v511
    %v2004 = vunpack.c.h.b16 %v511
    %v2005 = vunpack.c.l.b16 %v512
    %v2006 = vunpack.c.h.b16 %v512
    %v2007 = vunpack.c.l.b16 %v513
    %v2008 = vunpack.c.h.b16 %v513
    %v2009 = vunpack.c.l.b16 %v514
    %v2010 = vunpack.c.h.b16 %v514
    %v2011 = vunpack.c.l.b16 %v515
    %v2012 = vunpack.c.h.b16 %v515
    %v2013 = vunpack.c.l.b16 %v516
    %v2014 = vunpack.c.h.b16 %v516
    %v2015 = vunpack.c.l.b16 %v517
    %v2016 = vunpack.c.h.b16 %v517
    %v2017 = vunpack.c.l.b16 %v518
    %v2018 = vunpack.c.h.b16 %v518
    %v2019 = vunpack.c.l.b16 %v519
    %v2020 = vunpack.c.h.b16 %v519
    %v2021 = vunpack.c.l.b16 %v520
    %v2022 = vunpack.c.h.b16 %v520
    %v2023 = vunpack.c.l.b16 %v521
    %v2024 = vunpack.c.h.b16 %v521
    %v2025 = vunpack.c.l.b16 %v522
    %v2026 = vunpack.c.h.b16 %v522
    %v2027 = vunpack.c.l.b16 %v523
    %v2028 = vunpack.c.h.b16 %v523
    %v2029 = vunpack.c.l.b16 %v524
    %v2030 = vunpack.c.h.b16 %v524
    %v2031 = vunpack.c.l.b16 %v525
    %v2032 = vunpack.c.h.b16 %v525
    %v2033 = vunpack.c.l.b16 %v526
    %v2034 = vunpack.c.h.b16 %v526
    %v2035 = vunpack.c.l.b16 %v527
    %v2036 = vunpack.c.h.b16 %v527
    %v2037 = vunpack.c.l.b16 %v528
    %v2038 = vunpack.c.h.b16 %v528
    %v2039 = vunpack.c.l.b16 %v529
    %v2040 = vunpack.c.h.b16 %v529
    %v2041 = vunpack.c.l.b16 %v530
    %v2042 = vunpack.c.h.b16 %v530
    %v2043 = vunpack.c.l.b16 %v531
    %v2044 = vunpack.c.h.b16 %v531
    %v2045 = vunpack.c.l.b16 %v532
    %v2046 = vunpack.c.h.b16 %v532
    %v2047 = vunpack.c.l.b16 %v533
    %v2048 = vunpack.c.h.b16 %v533
    %v2049 = vunpack.c.l.b16 %v534
    %v2050 = vunpack.c.h.b16 %v534
    %v2051 = vunpack.c.l.b16 %v535
    %v2052 = vunpack.c.h.b16 %v535
    %v2053 = vunpack.c.l.b16 %v536
    %v2054 = vunpack.c.h.b16 %v536
    %v2055 = vunpack.c.l.b16 %v537
    %v2056 = vunpack.c.h.b16 %v537
    %v2057 = vunpack.c.l.b16 %v538
    %v2058 = vunpack.c.h.b16 %v538
    %v2059 = vunpack.c.l.b16 %v539
    %v2060 = vunpack.c.h.b16 %v539
    %v2061 = vunpack.c.l.b16 %v540
    %v2062 = vunpack.c.h.b16 %v540
    %v2063 = vunpack.c.l.b16 %v541
    %v2064 = vunpack.c.h.b16 %v541
    %v2065 = vunpack.c.l.b16 %v542
    %v2066 = vunpack.c.h.b16 %v542
    %v2067 = vunpack.c.l.b16 %v543
    %v2068 = vunpack.c.h.b16 %v543
    %v2069 = vunpack.c.l.b16 %v544
    %v2070 = vunpack.c.h.b16 %v544
    %v2071 = vunpack.c.l.b16 %v545
    %v2072 = vunpack.c.h.b16 %v545
    %v2073 = vunpack.c.l.b16 %v546
    %v2074 = vunpack.c.h.b16 %v546
    %v2075 = vunpack.c.l.b16 %v547
    %v2076 = vunpack.c.h.b16 %v547
    %v2077 = vunpack.c.l.b16 %v548
    %v2078 = vunpack.c.h.b16 %v548
    %v2079 = vunpack.c.l.b16 %v549
    %v2080 = vunpack.c.h.b16 %v549
    %v2081 = vunpack.c.l.b16 %v550
    %v2082 = vunpack.c.h.b16 %v550
    %v2083 = vunpack.c.l.b16 %v551
    %v2084 = vunpack.c.h.b16 %v551
    %v2085 = vunpack.c.l.b16 %v552
    %v2086 = vunpack.c.h.b16 %v552
    %v2087 = vunpack.c.l.b16 %v553
    %v2088 = vunpack.c.h.b16 %v553
    %v2089 = vunpack.c.l.b16 %v554
    %v2090 = vunpack.c.h.b16 %v554
    %v2091 = vunpack.c.l.b16 %v555
    %v2092 = vunpack.c.h.b16 %v555
    %v2093 = vunpack.c.l.b16 %v556
    %v2094 = vunpack.c.h.b16 %v556
    %v2095 = vunpack.c.l.b16 %v557
    %v2096 = vunpack.c.h.b16 %v557
    %v2097 = vunpack.c.l.b16 %v558
    %v2098 = vunpack.c.h.b16 %v558
    %v2099 = vunpack.c.l.b16 %v559
    %v2100 = vunpack.c.h.b16 %v559
    %v2101 = vunpack.c.l.b16 %v560
    %v2102 = vunpack.c.h.b16 %v560
    %v2103 = vunpack.c.l.b16 %v561
    %v2104 = vunpack.c.h.b16 %v561
    %v2105 = vunpack.c.l.b16 %v562
    %v2106 = vunpack.c.h.b16 %v562
    %v2107 = vunpack.c.l.b16 %v563
    %v2108 = vunpack.c.h.b16 %v563
    %v2109 = vunpack.c.l.b16 %v564
    %v2110 = vunpack.c.h.b16 %v564
    %v2111 = vunpack.c.l.b16 %v565
    %v2112 = vunpack.c.h.b16 %v565
    %v2113 = vunpack.c.l.b16 %v566
    %v2114 = vunpack.c.h.b16 %v566
    %v2115 = vunpack.c.l.b16 %v567
    %v2116 = vunpack.c.h.b16 %v567
    %v2117 = vunpack.c.l.b16 %v568
    %v2118 = vunpack.c.h.b16 %v568
    %v2119 = vunpack.c.l.b16 %v569
    %v2120 = vunpack.c.h.b16 %v569
    %v2121 = vunpack.c.l.b16 %v570
    %v2122 = vunpack.c.h.b16 %v570
    %v2123 = vunpack.c.l.b16 %v571
    %v2124 = vunpack.c.h.b16 %v571
    %v2125 = vunpack.c.l.b16 %v572
    %v2126 = vunpack.c.h.b16 %v572
    %v2127 = vunpack.c.l.b16 %v573
    %v2128 = vunpack.c.h.b16 %v573
    %v2129 = vunpack.c.l.b16 %v574
    %v2130 = vunpack.c.h.b16 %v574
    %v2131 = vunpack.c.l.b16 %v575
    %v2132 = vunpack.c.h.b16 %v575
    %v2133 = vunpack.c.l.b16 %v576
    %v2134 = vunpack.c.h.b16 %v576
    %v2135 = vunpack.c.l.b16 %v577
    %v2136 = vunpack.c.h.b16 %v577
    %v2137 = vunpack.c.l.b16 %v578
    %v2138 = vunpack.c.h.b16 %v578
    %v2139 = vunpack.c.l.b16 %v579
    %v2140 = vunpack.c.h.b16 %v579
    %v2141 = vunpack.c.l.b16 %v580
    %v2142 = vunpack.c.h.b16 %v580
    %v2143 = vunpack.c.l.b16 %v581
    %v2144 = vunpack.c.h.b16 %v581
    %v2145 = vunpack.c.l.b16 %v582
    %v2146 = vunpack.c.h.b16 %v582
    %v2147 = vunpack.c.l.b16 %v583
    %v2148 = vunpack.c.h.b16 %v583
    %v2149 = vunpack.c.l.b16 %v584
    %v2150 = vunpack.c.h.b16 %v584
    %v2151 = vunpack.c.l.b16 %v585
    %v2152 = vunpack.c.h.b16 %v585
    %v2153 = vunpack.c.l.b16 %v586
    %v2154 = vunpack.c.h.b16 %v586
    %v2155 = vunpack.c.l.b16 %v587
    %v2156 = vunpack.c.h.b16 %v587
    %v2157 = vunpack.c.l.b16 %v588
    %v2158 = vunpack.c.h.b16 %v588
    %v2159 = vunpack.c.l.b16 %v589
    %v2160 = vunpack.c.h.b16 %v589
    %v2161 = vunpack.c.l.b16 %v590
    %v2162 = vunpack.c.h.b16 %v590
    %v2163 = vunpack.c.l.b16 %v591
    %v2164 = vunpack.c.h.b16 %v591
    %v2165 = vunpack.c.l.b16 %v592
    %v2166 = vunpack.c.h.b16 %v592
    %v2167 = vunpack.c.l.b16 %v593
    %v2168 = vunpack.c.h.b16 %v593
    %v2169 = vunpack.c.l.b16 %v594
    %v2170 = vunpack.c.h.b16 %v594
    %v2171 = vunpack.c.l.b16 %v595
    %v2172 = vunpack.c.h.b16 %v595
    %v2173 = vunpack.c.l.b16 %v596
    %v2174 = vunpack.c.h.b16 %v596
    %v2175 = vunpack.c.l.b16 %v597
    %v2176 = vunpack.c.h.b16 %v597
    %v2177 = vunpack.c.l.b16 %v598
    %v2178 = vunpack.c.h.b16 %v598
    %v2179 = vunpack.c.l.b16 %v599
    %v2180 = vunpack.c.h.b16 %v599
    %v2181 = vunpack.c.l.b16 %v600
    %v2182 = vunpack.c.h.b16 %v600
    %v2183 = vunpack.c.l.b16 %v601
    %v2184 = vunpack.c.h.b16 %v601
    %v2185 = vunpack.c.l.b16 %v602
    %v2186 = vunpack.c.h.b16 %v602
    %v2187 = vunpack.c.l.b16 %v603
    %v2188 = vunpack.c.h.b16 %v603
    %v2189 = vunpack.c.l.b16 %v604
    %v2190 = vunpack.c.h.b16 %v604
    %v2191 = vunpack.c.l.b16 %v605
    %v2192 = vunpack.c.h.b16 %v605
    %v2193 = vunpack.c.l.b16 %v606
    %v2194 = vunpack.c.h.b16 %v606
    %v2195 = vunpack.c.l.b16 %v607
    %v2196 = vunpack.c.h.b16 %v607
    %v2197 = vunpack.c.l.b16 %v608
    %v2198 = vunpack.c.h.b16 %v608
    %v2199 = vunpack.c.l.b16 %v609
    %v2200 = vunpack.c.h.b16 %v609
    %v2201 = vunpack.c.l.b16 %v610
    %v2202 = vunpack.c.h.b16 %v610
    %v2203 = vunpack.c.l.b16 %v611
    %v2204 = vunpack.c.h.b16 %v611
    %v2205 = vunpack.c.l.b16 %v612
    %v2206 = vunpack.c.h.b16 %v612
    %v2207 = vunpack.c.l.b16 %v613
    %v2208 = vunpack.c.h.b16 %v613
    %v2209 = vunpack.c.l.b16 %v614
    %v2210 = vunpack.c.h.b16 %v614
    %v2211 = vunpack.c.l.b16 %v615
    %v2212 = vunpack.c.h.b16 %v615
    %v2213 = vunpack.c.l.b16 %v616
    %v2214 = vunpack.c.h.b16 %v616
    %v2215 = vunpack.c.l.b16 %v617
    %v2216 = vunpack.c.h.b16 %v617
    %v2217 = vunpack.c.l.b16 %v618
    %v2218 = vunpack.c.h.b16 %v618
    %v2219 = vunpack.c.l.b16 %v619
    %v2220 = vunpack.c.h.b16 %v619
    %v2221 = vunpack.c.l.b16 %v620
    %v2222 = vunpack.c.h.b16 %v620
    %v2223 = vunpack.c.l.b16 %v621
    %v2224 = vunpack.c.h.b16 %v621
    %v2225 = vunpack.c.l.b16 %v622
    %v2226 = vunpack.c.h.b16 %v622
    %v2227 = vunpack.c.l.b16 %v623
    %v2228 = vunpack.c.h.b16 %v623
    %v2229 = vunpack.c.l.b16 %v624
    %v2230 = vunpack.c.h.b16 %v624
    %v2231 = vunpack.c.l.b16 %v625
    %v2232 = vunpack.c.h.b16 %v625
    %v2233 = vunpack.c.l.b16 %v626
    %v2234 = vunpack.c.h.b16 %v626
    %v2235 = vunpack.c.l.b16 %v627
    %v2236 = vunpack.c.h.b16 %v627
    %v2237 = vunpack.c.l.b16 %v628
    %v2238 = vunpack.c.h.b16 %v628
    %v2239 = vunpack.c.l.b16 %v629
    %v2240 = vunpack.c.h.b16 %v629
    %v2241 = vunpack.c.l.b16 %v630
    %v2242 = vunpack.c.h.b16 %v630
    %v2243 = vunpack.c.l.b16 %v631
    %v2244 = vunpack.c.h.b16 %v631
    %v2245 = vunpack.c.l.b16 %v632
    %v2246 = vunpack.c.h.b16 %v632
    %v2247 = vunpack.c.l.b16 %v633
    %v2248 = vunpack.c.h.b16 %v633
    %v2249 = vunpack.c.l.b16 %v634
    %v2250 = vunpack.c.h.b16 %v634
    %v2251 = vunpack.c.l.b16 %v635
    %v2252 = vunpack.c.h.b16 %v635
    %v2253 = vunpack.c.l.b16 %v636
    %v2254 = vunpack.c.h.b16 %v636
    %v2255 = vpack.c.b16 %v1239, %v1231
    %v2256 = vpack.c.b16 %v1240, %v1232
    %v2257 = vpack.c.b16 %v1241, %v1233
    %v2258 = vpack.c.b16 %v1242, %v1234
    %v2259 = vpack.c.b16 %v1243, %v1235
    %v2260 = vpack.c.b16 %v1244, %v1236
    %v2261 = vpack.c.b16 %v1245, %v1237
    %v2262 = vpack.c.b16 %v1246, %v1238
    %v2263 = vpack.c.b16 %v1255, %v1247
    %v2264 = vpack.c.b16 %v1256, %v1248
    %v2265 = vpack.c.b16 %v1257, %v1249
    %v2266 = vpack.c.b16 %v1258, %v1250
    %v2267 = vpack.c.b16 %v1259, %v1251
    %v2268 = vpack.c.b16 %v1260, %v1252
    %v2269 = vpack.c.b16 %v1261, %v1253
    %v2270 = vpack.c.b16 %v1262, %v1254
    %v2271 = vpack.c.b16 %v1271, %v1263
    %v2272 = vpack.c.b16 %v1272, %v1264
    %v2273 = vpack.c.b16 %v1273, %v1265
    %v2274 = vpack.c.b16 %v1274, %v1266
    %v2275 = vpack.c.b16 %v1275, %v1267
    %v2276 = vpack.c.b16 %v1276, %v1268
    %v2277 = vpack.c.b16 %v1277, %v1269
    %v2278 = vpack.c.b16 %v1278, %v1270
    %v2279 = vpack.c.b16 %v1287, %v1279
    %v2280 = vpack.c.b16 %v1288, %v1280
    %v2281 = vpack.c.b16 %v1289, %v1281
    %v2282 = vpack.c.b16 %v1290, %v1282
    %v2283 = vpack.c.b16 %v1291, %v1283
    %v2284 = vpack.c.b16 %v1292, %v1284
    %v2285 = vpack.c.b16 %v1293, %v1285
    %v2286 = vpack.c.b16 %v1294, %v1286
    %v2287 = vpack.c.b16 %v1303, %v1295
    %v2288 = vpack.c.b16 %v1304, %v1296
    %v2289 = vpack.c.b16 %v1305, %v1297
    %v2290 = vpack.c.b16 %v1306, %v1298
    %v2291 = vpack.c.b16 %v1307, %v1299
    %v2292 = vpack.c.b16 %v1308, %v1300
    %v2293 = vpack.c.b16 %v1309, %v1301
    %v2294 = vpack.c.b16 %v1310, %v1302
    %v2295 = vpack.c.b16 %v1319, %v1311
    %v2296 = vpack.c.b16 %v1320, %v1312
    %v2297 = vpack.c.b16 %v1321, %v1313
    %v2298 = vpack.c.b16 %v1322, %v1314
    %v2299 = vpack.c.b16 %v1323, %v1315
    %v2300 = vpack.c.b16 %v1324, %v1316
    %v2301 = vpack.c.b16 %v1325, %v1317
    %v2302 = vpack.c.b16 %v1326, %v1318
    %v2303 = vpack.c.b16 %v1335, %v1327
    %v2304 = vpack.c.b16 %v1336, %v1328
    %v2305 = vpack.c.b16 %v1337, %v1329
    %v2306 = vpack.c.b16 %v1338, %v1330
    %v2307 = vpack.c.b16 %v1339, %v1331
    %v2308 = vpack.c.b16 %v1340, %v1332
    %v2309 = vpack.c.b16 %v1341, %v1333
    %v2310 = vpack.c.b16 %v1342, %v1334
    %v2311 = vpack.c.b16 %v1351, %v1343
    %v2312 = vpack.c.b16 %v1352, %v1344
    %v2313 = vpack.c.b16 %v1353, %v1345
    %v2314 = vpack.c.b16 %v1354, %v1346
    %v2315 = vpack.c.b16 %v1355, %v1347
    %v2316 = vpack.c.b16 %v1356, %v1348
    %v2317 = vpack.c.b16 %v1357, %v1349
    %v2318 = vpack.c.b16 %v1358, %v1350
    %v2319 = vpack.c.b16 %v1367, %v1359
    %v2320 = vpack.c.b16 %v1368, %v1360
    %v2321 = vpack.c.b16 %v1369, %v1361
    %v2322 = vpack.c.b16 %v1370, %v1362
    %v2323 = vpack.c.b16 %v1371, %v1363
    %v2324 = vpack.c.b16 %v1372, %v1364
    %v2325 = vpack.c.b16 %v1373, %v1365
    %v2326 = vpack.c.b16 %v1374, %v1366
    %v2327 = vpack.c.b16 %v1383, %v1375
    %v2328 = vpack.c.b16 %v1384, %v1376
    %v2329 = vpack.c.b16 %v1385, %v1377
    %v2330 = vpack.c.b16 %v1386, %v1378
    %v2331 = vpack.c.b16 %v1387, %v1379
    %v2332 = vpack.c.b16 %v1388, %v1380
    %v2333 = vpack.c.b16 %v1389, %v1381
    %v2334 = vpack.c.b16 %v1390, %v1382
    %v2335 = vpack.c.b16 %v1399, %v1391
    %v2336 = vpack.c.b16 %v1400, %v1392
    %v2337 = vpack.c.b16 %v1401, %v1393
    %v2338 = vpack.c.b16 %v1402, %v1394
    %v2339 = vpack.c.b16 %v1403, %v1395
    %v2340 = vpack.c.b16 %v1404, %v1396
    %v2341 = vpack.c.b16 %v1405, %v1397
    %v2342 = vpack.c.b16 %v1406, %v1398
    %v2343 = vpack.c.b16 %v1415, %v1407
    %v2344 = vpack.c.b16 %v1416, %v1408
    %v2345 = vpack.c.b16 %v1417, %v1409
    %v2346 = vpack.c.b16 %v1418, %v1410
    %v2347 = vpack.c.b16 %v1419, %v1411
    %v2348 = vpack.c.b16 %v1420, %v1412
    %v2349 = vpack.c.b16 %v1421, %v1413
    %v2350 = vpack.c.b16 %v1422, %v1414
    %v2351 = vpack.c.b16 %v1431, %v1423
    %v2352 = vpack.c.b16 %v1432, %v1424
    %v2353 = vpack.c.b16 %v1433, %v1425
    %v2354 = vpack.c.b16 %v1434, %v1426
    %v2355 = vpack.c.b16 %v1435, %v1427
    %v2356 = vpack.c.b16 %v1436, %v1428
    %v2357 = vpack.c.b16 %v1437, %v1429
    %v2358 = vpack.c.b16 %v1438, %v1430
    %v2359 = vpack.c.b16 %v1447, %v1439
    %v2360 = vpack.c.b16 %v1448, %v1440
    %v2361 = vpack.c.b16 %v1449, %v1441
    %v2362 = vpack.c.b16 %v1450, %v1442
    %v2363 = vpack.c.b16 %v1451, %v1443
    %v2364 = vpack.c.b16 %v1452, %v1444
    %v2365 = vpack.c.b16 %v1453, %v1445
    %v2366 = vpack.c.b16 %v1454, %v1446
    %v2367 = vpack.c.b16 %v1463, %v1455
    %v2368 = vpack.c.b16 %v1464, %v1456
    %v2369 = vpack.c.b16 %v1465, %v1457
    %v2370 = vpack.c.b16 %v1466, %v1458
    %v2371 = vpack.c.b16 %v1467, %v1459
    %v2372 = vpack.c.b16 %v1468, %v1460
    %v2373 = vpack.c.b16 %v1469, %v1461
    %v2374 = vpack.c.b16 %v1470, %v1462
    %v2375 = vpack.c.b16 %v1479, %v1471
    %v2376 = vpack.c.b16 %v1480, %v1472
    %v2377 = vpack.c.b16 %v1481, %v1473
    %v2378 = vpack.c.b16 %v1482, %v1474
    %v2379 = vpack.c.b16 %v1483, %v1475
    %v2380 = vpack.c.b16 %v1484, %v1476
    %v2381 = vpack.c.b16 %v1485, %v1477
    %v2382 = vpack.c.b16 %v1486, %v1478
    %v2383 = vpack.c.b16 %v1495, %v1487
    %v2384 = vpack.c.b16 %v1496, %v1488
    %v2385 = vpack.c.b16 %v1497, %v1489
    %v2386 = vpack.c.b16 %v1498, %v1490
    %v2387 = vpack.c.b16 %v1499, %v1491
    %v2388 = vpack.c.b16 %v1500, %v1492
    %v2389 = vpack.c.b16 %v1501, %v1493
    %v2390 = vpack.c.b16 %v1502, %v1494
    %v2391 = vpack.c.b16 %v1511, %v1503
    %v2392 = vpack.c.b16 %v1512, %v1504
    %v2393 = vpack.c.b16 %v1513, %v1505
    %v2394 = vpack.c.b16 %v1514, %v1506
    %v2395 = vpack.c.b16 %v1515, %v1507
    %v2396 = vpack.c.b16 %v1516, %v1508
    %v2397 = vpack.c.b16 %v1517, %v1509
    %v2398 = vpack.c.b16 %v1518, %v1510
    %v2399 = vpack.c.b16 %v1527, %v1519
    %v2400 = vpack.c.b16 %v1528, %v1520
    %v2401 = vpack.c.b16 %v1529, %v1521
    %v2402 = vpack.c.b16 %v1530, %v1522
    %v2403 = vpack.c.b16 %v1531, %v1523
    %v2404 = vpack.c.b16 %v1532, %v1524
    %v2405 = vpack.c.b16 %v1533, %v1525
    %v2406 = vpack.c.b16 %v1534, %v1526
    %v2407 = vpack.c.b16 %v1543, %v1535
    %v2408 = vpack.c.b16 %v1544, %v1536
    %v2409 = vpack.c.b16 %v1545, %v1537
    %v2410 = vpack.c.b16 %v1546, %v1538
    %v2411 = vpack.c.b16 %v1547, %v1539
    %v2412 = vpack.c.b16 %v1548, %v1540
    %v2413 = vpack.c.b16 %v1549, %v1541
    %v2414 = vpack.c.b16 %v1550, %v1542
    %v2415 = vpack.c.b16 %v1559, %v1551
    %v2416 = vpack.c.b16 %v1560, %v1552
    %v2417 = vpack.c.b16 %v1561, %v1553
    %v2418 = vpack.c.b16 %v1562, %v1554
    %v2419 = vpack.c.b16 %v1563, %v1555
    %v2420 = vpack.c.b16 %v1564, %v1556
    %v2421 = vpack.c.b16 %v1565, %v1557
    %v2422 = vpack.c.b16 %v1566, %v1558
    %v2423 = vpack.c.b16 %v1575, %v1567
    %v2424 = vpack.c.b16 %v1576, %v1568
    %v2425 = vpack.c.b16 %v1577, %v1569
    %v2426 = vpack.c.b16 %v1578, %v1570
    %v2427 = vpack.c.b16 %v1579, %v1571
    %v2428 = vpack.c.b16 %v1580, %v1572
    %v2429 = vpack.c.b16 %v1581, %v1573
    %v2430 = vpack.c.b16 %v1582, %v1574
    %v2431 = vpack.c.b16 %v1591, %v1583
    %v2432 = vpack.c.b16 %v1592, %v1584
    %v2433 = vpack.c.b16 %v1593, %v1585
    %v2434 = vpack.c.b16 %v1594, %v1586
    %v2435 = vpack.c.b16 %v1595, %v1587
    %v2436 = vpack.c.b16 %v1596, %v1588
    %v2437 = vpack.c.b16 %v1597, %v1589
    %v2438 = vpack.c.b16 %v1598, %v1590
    %v2439 = vpack.c.b16 %v1607, %v1599
    %v2440 = vpack.c.b16 %v1608, %v1600
    %v2441 = vpack.c.b16 %v1609, %v1601
    %v2442 = vpack.c.b16 %v1610, %v1602
    %v2443 = vpack.c.b16 %v1611, %v1603
    %v2444 = vpack.c.b16 %v1612, %v1604
    %v2445 = vpack.c.b16 %v1613, %v1605
    %v2446 = vpack.c.b16 %v1614, %v1606
    %v2447 = vpack.c.b16 %v1623, %v1615
    %v2448 = vpack.c.b16 %v1624, %v1616
    %v2449 = vpack.c.b16 %v1625, %v1617
    %v2450 = vpack.c.b16 %v1626, %v1618
    %v2451 = vpack.c.b16 %v1627, %v1619
    %v2452 = vpack.c.b16 %v1628, %v1620
    %v2453 = vpack.c.b16 %v1629, %v1621
    %v2454 = vpack.c.b16 %v1630, %v1622
    %v2455 = vpack.c.b16 %v1639, %v1631
    %v2456 = vpack.c.b16 %v1640, %v1632
    %v2457 = vpack.c.b16 %v1641, %v1633
    %v2458 = vpack.c.b16 %v1642, %v1634
    %v2459 = vpack.c.b16 %v1643, %v1635
    %v2460 = vpack.c.b16 %v1644, %v1636
    %v2461 = vpack.c.b16 %v1645, %v1637
    %v2462 = vpack.c.b16 %v1646, %v1638
    %v2463 = vpack.c.b16 %v1655, %v1647
    %v2464 = vpack.c.b16 %v1656, %v1648
    %v2465 = vpack.c.b16 %v1657, %v1649
    %v2466 = vpack.c.b16 %v1658, %v1650
    %v2467 = vpack.c.b16 %v1659, %v1651
    %v2468 = vpack.c.b16 %v1660, %v1652
    %v2469 = vpack.c.b16 %v1661, %v1653
    %v2470 = vpack.c.b16 %v1662, %v1654
    %v2471 = vpack.c.b16 %v1671, %v1663
    %v2472 = vpack.c.b16 %v1672, %v1664
    %v2473 = vpack.c.b16 %v1673, %v1665
    %v2474 = vpack.c.b16 %v1674, %v1666
    %v2475 = vpack.c.b16 %v1675, %v1667
    %v2476 = vpack.c.b16 %v1676, %v1668
    %v2477 = vpack.c.b16 %v1677, %v1669
    %v2478 = vpack.c.b16 %v1678, %v1670
    %v2479 = vpack.c.b16 %v1687, %v1679
    %v2480 = vpack.c.b16 %v1688, %v1680
    %v2481 = vpack.c.b16 %v1689, %v1681
    %v2482 = vpack.c.b16 %v1690, %v1682
    %v2483 = vpack.c.b16 %v1691, %v1683
    %v2484 = vpack.c.b16 %v1692, %v1684
    %v2485 = vpack.c.b16 %v1693, %v1685
    %v2486 = vpack.c.b16 %v1694, %v1686
    %v2487 = vpack.c.b16 %v1703, %v1695
    %v2488 = vpack.c.b16 %v1704, %v1696
    %v2489 = vpack.c.b16 %v1705, %v1697
    %v2490 = vpack.c.b16 %v1706, %v1698
    %v2491 = vpack.c.b16 %v1707, %v1699
    %v2492 = vpack.c.b16 %v1708, %v1700
    %v2493 = vpack.c.b16 %v1709, %v1701
    %v2494 = vpack.c.b16 %v1710, %v1702
    %v2495 = vpack.c.b16 %v1719, %v1711
    %v2496 = vpack.c.b16 %v1720, %v1712
    %v2497 = vpack.c.b16 %v1721, %v1713
    %v2498 = vpack.c.b16 %v1722, %v1714
    %v2499 = vpack.c.b16 %v1723, %v1715
    %v2500 = vpack.c.b16 %v1724, %v1716
    %v2501 = vpack.c.b16 %v1725, %v1717
    %v2502 = vpack.c.b16 %v1726, %v1718
    %v2503 = vpack.c.b16 %v1735, %v1727
    %v2504 = vpack.c.b16 %v1736, %v1728
    %v2505 = vpack.c.b16 %v1737, %v1729
    %v2506 = vpack.c.b16 %v1738, %v1730
    %v2507 = vpack.c.b16 %v1739, %v1731
    %v2508 = vpack.c.b16 %v1740, %v1732
    %v2509 = vpack.c.b16 %v1741, %v1733
    %v2510 = vpack.c.b16 %v1742, %v1734
    %v2511 = vpack.c.b16 %v1751, %v1743
    %v2512 = vpack.c.b16 %v1752, %v1744
    %v2513 = vpack.c.b16 %v1753, %v1745
    %v2514 = vpack.c.b16 %v1754, %v1746
    %v2515 = vpack.c.b16 %v1755, %v1747
    %v2516 = vpack.c.b16 %v1756, %v1748
    %v2517 = vpack.c.b16 %v1757, %v1749
    %v2518 = vpack.c.b16 %v1758, %v1750
    %v2519 = vpack.c.b16 %v1767, %v1759
    %v2520 = vpack.c.b16 %v1768, %v1760
    %v2521 = vpack.c.b16 %v1769, %v1761
    %v2522 = vpack.c.b16 %v1770, %v1762
    %v2523 = vpack.c.b16 %v1771, %v1763
    %v2524 = vpack.c.b16 %v1772, %v1764
    %v2525 = vpack.c.b16 %v1773, %v1765
    %v2526 = vpack.c.b16 %v1774, %v1766
    %v2527 = vpack.c.b16 %v1783, %v1775
    %v2528 = vpack.c.b16 %v1784, %v1776
    %v2529 = vpack.c.b16 %v1785, %v1777
    %v2530 = vpack.c.b16 %v1786, %v1778
    %v2531 = vpack.c.b16 %v1787, %v1779
    %v2532 = vpack.c.b16 %v1788, %v1780
    %v2533 = vpack.c.b16 %v1789, %v1781
    %v2534 = vpack.c.b16 %v1790, %v1782
    %v2535 = vpack.c.b16 %v1799, %v1791
    %v2536 = vpack.c.b16 %v1800, %v1792
    %v2537 = vpack.c.b16 %v1801, %v1793
    %v2538 = vpack.c.b16 %v1802, %v1794
    %v2539 = vpack.c.b16 %v1803, %v1795
    %v2540 = vpack.c.b16 %v1804, %v1796
    %v2541 = vpack.c.b16 %v1805, %v1797
    %v2542 = vpack.c.b16 %v1806, %v1798
    %v2543 = vpack.c.b16 %v1815, %v1807
    %v2544 = vpack.c.b16 %v1816, %v1808
    %v2545 = vpack.c.b16 %v1817, %v1809
    %v2546 = vpack.c.b16 %v1818, %v1810
    %v2547 = vpack.c.b16 %v1819, %v1811
    %v2548 = vpack.c.b16 %v1820, %v1812
    %v2549 = vpack.c.b16 %v1821, %v1813
    %v2550 = vpack.c.b16 %v1822, %v1814
    %v2551 = vpack.c.b16 %v1831, %v1823
    %v2552 = vpack.c.b16 %v1832, %v1824
    %v2553 = vpack.c.b16 %v1833, %v1825
    %v2554 = vpack.c.b16 %v1834, %v1826
    %v2555 = vpack.c.b16 %v1835, %v1827
    %v2556 = vpack.c.b16 %v1836, %v1828
    %v2557 = vpack.c.b16 %v1837, %v1829
    %v2558 = vpack.c.b16 %v1838, %v1830
    %v2559 = vpack.c.b16 %v1847, %v1839
    %v2560 = vpack.c.b16 %v1848, %v1840
    %v2561 = vpack.c.b16 %v1849, %v1841
    %v2562 = vpack.c.b16 %v1850, %v1842
    %v2563 = vpack.c.b16 %v1851, %v1843
    %v2564 = vpack.c.b16 %v1852, %v1844
    %v2565 = vpack.c.b16 %v1853, %v1845
    %v2566 = vpack.c.b16 %v1854, %v1846
    %v2567 = vpack.c.b16 %v1863, %v1855
    %v2568 = vpack.c.b16 %v1864, %v1856
    %v2569 = vpack.c.b16 %v1865, %v1857
    %v2570 = vpack.c.b16 %v1866, %v1858
    %v2571 = vpack.c.b16 %v1867, %v1859
    %v2572 = vpack.c.b16 %v1868, %v1860
    %v2573 = vpack.c.b16 %v1869, %v1861
    %v2574 = vpack.c.b16 %v1870, %v1862
    %v2575 = vpack.c.b16 %v1879, %v1871
    %v2576 = vpack.c.b16 %v1880, %v1872
    %v2577 = vpack.c.b16 %v1881, %v1873
    %v2578 = vpack.c.b16 %v1882, %v1874
    %v2579 = vpack.c.b16 %v1883, %v1875
    %v2580 = vpack.c.b16 %v1884, %v1876
    %v2581 = vpack.c.b16 %v1885, %v1877
    %v2582 = vpack.c.b16 %v1886, %v1878
    %v2583 = vpack.c.b16 %v1895, %v1887
    %v2584 = vpack.c.b16 %v1896, %v1888
    %v2585 = vpack.c.b16 %v1897, %v1889
    %v2586 = vpack.c.b16 %v1898, %v1890
    %v2587 = vpack.c.b16 %v1899, %v1891
    %v2588 = vpack.c.b16 %v1900, %v1892
    %v2589 = vpack.c.b16 %v1901, %v1893
    %v2590 = vpack.c.b16 %v1902, %v1894
    %v2591 = vpack.c.b16 %v1911, %v1903
    %v2592 = vpack.c.b16 %v1912, %v1904
    %v2593 = vpack.c.b16 %v1913, %v1905
    %v2594 = vpack.c.b16 %v1914, %v1906
    %v2595 = vpack.c.b16 %v1915, %v1907
    %v2596 = vpack.c.b16 %v1916, %v1908
    %v2597 = vpack.c.b16 %v1917, %v1909
    %v2598 = vpack.c.b16 %v1918, %v1910
    %v2599 = vpack.c.b16 %v1927, %v1919
    %v2600 = vpack.c.b16 %v1928, %v1920
    %v2601 = vpack.c.b16 %v1929, %v1921
    %v2602 = vpack.c.b16 %v1930, %v1922
    %v2603 = vpack.c.b16 %v1931, %v1923
    %v2604 = vpack.c.b16 %v1932, %v1924
    %v2605 = vpack.c.b16 %v1933, %v1925
    %v2606 = vpack.c.b16 %v1934, %v1926
    %v2607 = vpack.c.b16 %v1943, %v1935
    %v2608 = vpack.c.b16 %v1944, %v1936
    %v2609 = vpack.c.b16 %v1945, %v1937
    %v2610 = vpack.c.b16 %v1946, %v1938
    %v2611 = vpack.c.b16 %v1947, %v1939
    %v2612 = vpack.c.b16 %v1948, %v1940
    %v2613 = vpack.c.b16 %v1949, %v1941
    %v2614 = vpack.c.b16 %v1950, %v1942
    %v2615 = vpack.c.b16 %v1959, %v1951
    %v2616 = vpack.c.b16 %v1960, %v1952
    %v2617 = vpack.c.b16 %v1961, %v1953
    %v2618 = vpack.c.b16 %v1962, %v1954
    %v2619 = vpack.c.b16 %v1963, %v1955
    %v2620 = vpack.c.b16 %v1964, %v1956
    %v2621 = vpack.c.b16 %v1965, %v1957
    %v2622 = vpack.c.b16 %v1966, %v1958
    %v2623 = vpack.c.b16 %v1975, %v1967
    %v2624 = vpack.c.b16 %v1976, %v1968
    %v2625 = vpack.c.b16 %v1977, %v1969
    %v2626 = vpack.c.b16 %v1978, %v1970
    %v2627 = vpack.c.b16 %v1979, %v1971
    %v2628 = vpack.c.b16 %v1980, %v1972
    %v2629 = vpack.c.b16 %v1981, %v1973
    %v2630 = vpack.c.b16 %v1982, %v1974
    %v2631 = vpack.c.b16 %v1991, %v1983
    %v2632 = vpack.c.b16 %v1992, %v1984
    %v2633 = vpack.c.b16 %v1993, %v1985
    %v2634 = vpack.c.b16 %v1994, %v1986
    %v2635 = vpack.c.b16 %v1995, %v1987
    %v2636 = vpack.c.b16 %v1996, %v1988
    %v2637 = vpack.c.b16 %v1997, %v1989
    %v2638 = vpack.c.b16 %v1998, %v1990
    %v2639 = vpack.c.b16 %v2007, %v1999
    %v2640 = vpack.c.b16 %v2008, %v2000
    %v2641 = vpack.c.b16 %v2009, %v2001
    %v2642 = vpack.c.b16 %v2010, %v2002
    %v2643 = vpack.c.b16 %v2011, %v2003
    %v2644 = vpack.c.b16 %v2012, %v2004
    %v2645 = vpack.c.b16 %v2013, %v2005
    %v2646 = vpack.c.b16 %v2014, %v2006
    %v2647 = vpack.c.b16 %v2023, %v2015
    %v2648 = vpack.c.b16 %v2024, %v2016
    %v2649 = vpack.c.b16 %v2025, %v2017
    %v2650 = vpack.c.b16 %v2026, %v2018
    %v2651 = vpack.c.b16 %v2027, %v2019
    %v2652 = vpack.c.b16 %v2028, %v2020
    %v2653 = vpack.c.b16 %v2029, %v2021
    %v2654 = vpack.c.b16 %v2030, %v2022
    %v2655 = vpack.c.b16 %v2039, %v2031
    %v2656 = vpack.c.b16 %v2040, %v2032
    %v2657 = vpack.c.b16 %v2041, %v2033
    %v2658 = vpack.c.b16 %v2042, %v2034
    %v2659 = vpack.c.b16 %v2043, %v2035
    %v2660 = vpack.c.b16 %v2044, %v2036
    %v2661 = vpack.c.b16 %v2045, %v2037
    %v2662 = vpack.c.b16 %v2046, %v2038
    %v2663 = vpack.c.b16 %v2055, %v2047
    %v2664 = vpack.c.b16 %v2056, %v2048
    %v2665 = vpack.c.b16 %v2057, %v2049
    %v2666 = vpack.c.b16 %v2058, %v2050
    %v2667 = vpack.c.b16 %v2059, %v2051
    %v2668 = vpack.c.b16 %v2060, %v2052
    %v2669 = vpack.c.b16 %v2061, %v2053
    %v2670 = vpack.c.b16 %v2062, %v2054
    %v2671 = vpack.c.b16 %v2071, %v2063
    %v2672 = vpack.c.b16 %v2072, %v2064
    %v2673 = vpack.c.b16 %v2073, %v2065
    %v2674 = vpack.c.b16 %v2074, %v2066
    %v2675 = vpack.c.b16 %v2075, %v2067
    %v2676 = vpack.c.b16 %v2076, %v2068
    %v2677 = vpack.c.b16 %v2077, %v2069
    %v2678 = vpack.c.b16 %v2078, %v2070
    %v2679 = vpack.c.b16 %v2087, %v2079
    %v2680 = vpack.c.b16 %v2088, %v2080
    %v2681 = vpack.c.b16 %v2089, %v2081
    %v2682 = vpack.c.b16 %v2090, %v2082
    %v2683 = vpack.c.b16 %v2091, %v2083
    %v2684 = vpack.c.b16 %v2092, %v2084
    %v2685 = vpack.c.b16 %v2093, %v2085
    %v2686 = vpack.c.b16 %v2094, %v2086
    %v2687 = vpack.c.b16 %v2103, %v2095
    %v2688 = vpack.c.b16 %v2104, %v2096
    %v2689 = vpack.c.b16 %v2105, %v2097
    %v2690 = vpack.c.b16 %v2106, %v2098
    %v2691 = vpack.c.b16 %v2107, %v2099
    %v2692 = vpack.c.b16 %v2108, %v2100
    %v2693 = vpack.c.b16 %v2109, %v2101
    %v2694 = vpack.c.b16 %v2110, %v2102
    %v2695 = vpack.c.b16 %v2119, %v2111
    %v2696 = vpack.c.b16 %v2120, %v2112
    %v2697 = vpack.c.b16 %v2121, %v2113
    %v2698 = vpack.c.b16 %v2122, %v2114
    %v2699 = vpack.c.b16 %v2123, %v2115
    %v2700 = vpack.c.b16 %v2124, %v2116
    %v2701 = vpack.c.b16 %v2125, %v2117
    %v2702 = vpack.c.b16 %v2126, %v2118
    %v2703 = vpack.c.b16 %v2135, %v2127
    %v2704 = vpack.c.b16 %v2136, %v2128
    %v2705 = vpack.c.b16 %v2137, %v2129
    %v2706 = vpack.c.b16 %v2138, %v2130
    %v2707 = vpack.c.b16 %v2139, %v2131
    %v2708 = vpack.c.b16 %v2140, %v2132
    %v2709 = vpack.c.b16 %v2141, %v2133
    %v2710 = vpack.c.b16 %v2142, %v2134
    %v2711 = vpack.c.b16 %v2151, %v2143
    %v2712 = vpack.c.b16 %v2152, %v2144
    %v2713 = vpack.c.b16 %v2153, %v2145
    %v2714 = vpack.c.b16 %v2154, %v2146
    %v2715 = vpack.c.b16 %v2155, %v2147
    %v2716 = vpack.c.b16 %v2156, %v2148
    %v2717 = vpack.c.b16 %v2157, %v2149
    %v2718 = vpack.c.b16 %v2158, %v2150
    %v2719 = vpack.c.b16 %v2167, %v2159
    %v2720 = vpack.c.b16 %v2168, %v2160
    %v2721 = vpack.c.b16 %v2169, %v2161
    %v2722 = vpack.c.b16 %v2170, %v2162
    %v2723 = vpack.c.b16 %v2171, %v2163
    %v2724 = vpack.c.b16 %v2172, %v2164
    %v2725 = vpack.c.b16 %v2173, %v2165
    %v2726 = vpack.c.b16 %v2174, %v2166
    %v2727 = vpack.c.b16 %v2183, %v2175
    %v2728 = vpack.c.b16 %v2184, %v2176
    %v2729 = vpack.c.b16 %v2185, %v2177
    %v2730 = vpack.c.b16 %v2186, %v2178
    %v2731 = vpack.c.b16 %v2187, %v2179
    %v2732 = vpack.c.b16 %v2188, %v2180
    %v2733 = vpack.c.b16 %v2189, %v2181
    %v2734 = vpack.c.b16 %v2190, %v2182
    %v2735 = vpack.c.b16 %v2199, %v2191
    %v2736 = vpack.c.b16 %v2200, %v2192
    %v2737 = vpack.c.b16 %v2201, %v2193
    %v2738 = vpack.c.b16 %v2202, %v2194
    %v2739 = vpack.c.b16 %v2203, %v2195
    %v2740 = vpack.c.b16 %v2204, %v2196
    %v2741 = vpack.c.b16 %v2205, %v2197
    %v2742 = vpack.c.b16 %v2206, %v2198
    %v2743 = vpack.c.b16 %v2215, %v2207
    %v2744 = vpack.c.b16 %v2216, %v2208
    %v2745 = vpack.c.b16 %v2217, %v2209
    %v2746 = vpack.c.b16 %v2218, %v2210
    %v2747 = vpack.c.b16 %v2219, %v2211
    %v2748 = vpack.c.b16 %v2220, %v2212
    %v2749 = vpack.c.b16 %v2221, %v2213
    %v2750 = vpack.c.b16 %v2222, %v2214
    %v2751 = vpack.c.b16 %v2231, %v2223
    %v2752 = vpack.c.b16 %v2232, %v2224
    %v2753 = vpack.c.b16 %v2233, %v2225
    %v2754 = vpack.c.b16 %v2234, %v2226
    %v2755 = vpack.c.b16 %v2235, %v2227
    %v2756 = vpack.c.b16 %v2236, %v2228
    %v2757 = vpack.c.b16 %v2237, %v2229
    %v2758 = vpack.c.b16 %v2238, %v2230
    %v2759 = vpack.c.b16 %v2247, %v2239
    %v2760 = vpack.c.b16 %v2248, %v2240
    %v2761 = vpack.c.b16 %v2249, %v2241
    %v2762 = vpack.c.b16 %v2250, %v2242
    %v2763 = vpack.c.b16 %v2251, %v2243
    %v2764 = vpack.c.b16 %v2252, %v2244
    %v2765 = vpack.c.b16 %v2253, %v2245
    %v2766 = vpack.c.b16 %v2254, %v2246
    %3279 = vmatprep.subr.bf16.mxu0 %v2312
    %3280 = vmatpush1.bf16.msra.mxu0 %v2311
    %3281 = vmatprep.subr.bf16.mxu0 %v2304
    %3282 = vmatpush1.bf16.msra.mxu0 %v2303
    %3283 = vmatprep.subr.bf16.mxu0 %v2296
    %3284 = vmatpush1.bf16.msra.mxu0 %v2295
    %3285 = vmatprep.subr.bf16.mxu0 %v2288
    %3286 = vmatpush1.bf16.msra.mxu0 %v2287
    %3287 = vmatprep.subr.bf16.mxu0 %v2280
    %3288 = vmatpush1.bf16.msra.mxu0 %v2279
    %3289 = vmatprep.subr.bf16.mxu0 %v2272
    %3290 = vmatpush1.bf16.msra.mxu0 %v2271
    %3291 = vmatprep.subr.bf16.mxu0 %v2264
    %3292 = vmatpush1.bf16.msra.mxu0 %v2263
    %3293 = vmatprep.subr.bf16.mxu0 %v2256
    %3294 = vmatpush1.bf16.msra.mxu0 %v2255
    %3295 = vmatprep.subr.bf16.mxu0 %v2376
    %3296 = vmatpush2.bf16.msra.mxu0 %v2375
    %3297 = vmatprep.subr.bf16.mxu0 %v2368
    %3298 = vmatpush2.bf16.msra.mxu0 %v2367
    %3299 = vmatprep.subr.bf16.mxu0 %v2360
    %3300 = vmatpush2.bf16.msra.mxu0 %v2359
    %3301 = vmatprep.subr.bf16.mxu0 %v2352
    %3302 = vmatpush2.bf16.msra.mxu0 %v2351
    %3303 = vmatprep.subr.bf16.mxu0 %v2344
    %3304 = vmatpush2.bf16.msra.mxu0 %v2343
    %3305 = vmatprep.subr.bf16.mxu0 %v2336
    %3306 = vmatpush2.bf16.msra.mxu0 %v2335
    %3307 = vmatprep.subr.bf16.mxu0 %v2328
    %3308 = vmatpush2.bf16.msra.mxu0 %v2327
    %3309 = vmatprep.subr.bf16.mxu0 %v2320
    %3310 = vmatpush2.bf16.msra.mxu0 %v2319
    %3311 = vmatprep.mubr.bf16.mxu0 %v704
    %3312 = vmatmul.mubr.bf16.gmra.mxu0 %v703
    %v3313 = vpop.f32.mrf.mxu0
    %v3314 = vadd.f32 %v642, %v3313
    %v3315 = vpop.f32.mrf.mxu0
    %v3316 = vadd.f32 %v646, %v3315
    %v3317 = vpop.f32.mrf.mxu0
    %v3318 = vadd.f32 %v642, %v3317
    %v3319 = vpop.f32.mrf.mxu0
    %v3320 = vadd.f32 %v646, %v3319
    %3321 = vdwg.mxu0
    %3322 = vmatprep.subr.bf16.mxu0 %v2440
    %3323 = vmatpush1.bf16.msra.mxu0 %v2439
    %3324 = vmatprep.subr.bf16.mxu0 %v2432
    %3325 = vmatpush1.bf16.msra.mxu0 %v2431
    %3326 = vmatprep.subr.bf16.mxu0 %v2424
    %3327 = vmatpush1.bf16.msra.mxu0 %v2423
    %3328 = vmatprep.subr.bf16.mxu0 %v2416
    %3329 = vmatpush1.bf16.msra.mxu0 %v2415
    %3330 = vmatprep.subr.bf16.mxu0 %v2408
    %3331 = vmatpush1.bf16.msra.mxu0 %v2407
    %3332 = vmatprep.subr.bf16.mxu0 %v2400
    %3333 = vmatpush1.bf16.msra.mxu0 %v2399
    %3334 = vmatprep.subr.bf16.mxu0 %v2392
    %3335 = vmatpush1.bf16.msra.mxu0 %v2391
    %3336 = vmatprep.subr.bf16.mxu0 %v2384
    %3337 = vmatpush1.bf16.msra.mxu0 %v2383
    %3338 = vmatprep.subr.bf16.mxu0 %v2504
    %3339 = vmatpush2.bf16.msra.mxu0 %v2503
    %3340 = vmatprep.subr.bf16.mxu0 %v2496
    %3341 = vmatpush2.bf16.msra.mxu0 %v2495
    %3342 = vmatprep.subr.bf16.mxu0 %v2488
    %3343 = vmatpush2.bf16.msra.mxu0 %v2487
    %3344 = vmatprep.subr.bf16.mxu0 %v2480
    %3345 = vmatpush2.bf16.msra.mxu0 %v2479
    %3346 = vmatprep.subr.bf16.mxu0 %v2472
    %3347 = vmatpush2.bf16.msra.mxu0 %v2471
    %3348 = vmatprep.subr.bf16.mxu0 %v2464
    %3349 = vmatpush2.bf16.msra.mxu0 %v2463
    %3350 = vmatprep.subr.bf16.mxu0 %v2456
    %3351 = vmatpush2.bf16.msra.mxu0 %v2455
    %3352 = vmatprep.subr.bf16.mxu0 %v2448
    %3353 = vmatpush2.bf16.msra.mxu0 %v2447
    %3354 = vmatprep.mubr.bf16.mxu0 %v706
    %3355 = vmatmul.mubr.bf16.gmra.mxu0 %v705
    %v3356 = vpop.f32.mrf.mxu0
    %v3357 = vadd.f32 %v3314, %v3356
    %v3358 = vpop.f32.mrf.mxu0
    %v3359 = vadd.f32 %v3316, %v3358
    %v3360 = vpop.f32.mrf.mxu0
    %v3361 = vadd.f32 %v3318, %v3360
    %v3362 = vpop.f32.mrf.mxu0
    %v3363 = vadd.f32 %v3320, %v3362
    %3364 = vdwg.mxu0
    %3365 = vmatprep.subr.bf16.mxu0 %v2568
    %3366 = vmatpush1.bf16.msra.mxu0 %v2567
    %3367 = vmatprep.subr.bf16.mxu0 %v2560
    %3368 = vmatpush1.bf16.msra.mxu0 %v2559
    %3369 = vmatprep.subr.bf16.mxu0 %v2552
    %3370 = vmatpush1.bf16.msra.mxu0 %v2551
    %3371 = vmatprep.subr.bf16.mxu0 %v2544
    %3372 = vmatpush1.bf16.msra.mxu0 %v2543
    %3373 = vmatprep.subr.bf16.mxu0 %v2536
    %3374 = vmatpush1.bf16.msra.mxu0 %v2535
    %3375 = vmatprep.subr.bf16.mxu0 %v2528
    %3376 = vmatpush1.bf16.msra.mxu0 %v2527
    %3377 = vmatprep.subr.bf16.mxu0 %v2520
    %3378 = vmatpush1.bf16.msra.mxu0 %v2519
    %3379 = vmatprep.subr.bf16.mxu0 %v2512
    %3380 = vmatpush1.bf16.msra.mxu0 %v2511
    %3381 = vmatprep.subr.bf16.mxu0 %v2632
    %3382 = vmatpush2.bf16.msra.mxu0 %v2631
    %3383 = vmatprep.subr.bf16.mxu0 %v2624
    %3384 = vmatpush2.bf16.msra.mxu0 %v2623
    %3385 = vmatprep.subr.bf16.mxu0 %v2616
    %3386 = vmatpush2.bf16.msra.mxu0 %v2615
    %3387 = vmatprep.subr.bf16.mxu0 %v2608
    %3388 = vmatpush2.bf16.msra.mxu0 %v2607
    %3389 = vmatprep.subr.bf16.mxu0 %v2600
    %3390 = vmatpush2.bf16.msra.mxu0 %v2599
    %3391 = vmatprep.subr.bf16.mxu0 %v2592
    %3392 = vmatpush2.bf16.msra.mxu0 %v2591
    %3393 = vmatprep.subr.bf16.mxu0 %v2584
    %3394 = vmatpush2.bf16.msra.mxu0 %v2583
    %3395 = vmatprep.subr.bf16.mxu0 %v2576
    %3396 = vmatpush2.bf16.msra.mxu0 %v2575
    %3397 = vmatprep.mubr.bf16.mxu0 %v708
    %3398 = vmatmul.mubr.bf16.gmra.mxu0 %v707
    %v3399 = vpop.f32.mrf.mxu0
    %v3400 = vadd.f32 %v3357, %v3399
    %v3401 = vpop.f32.mrf.mxu0
    %v3402 = vadd.f32 %v3359, %v3401
    %v3403 = vpop.f32.mrf.mxu0
    %v3404 = vadd.f32 %v3361, %v3403
    %v3405 = vpop.f32.mrf.mxu0
    %v3406 = vadd.f32 %v3363, %v3405
    %3407 = vdwg.mxu0
    %3408 = vmatprep.subr.bf16.mxu0 %v2696
    %3409 = vmatpush1.bf16.msra.mxu0 %v2695
    %3410 = vmatprep.subr.bf16.mxu0 %v2688
    %3411 = vmatpush1.bf16.msra.mxu0 %v2687
    %3412 = vmatprep.subr.bf16.mxu0 %v2680
    %3413 = vmatpush1.bf16.msra.mxu0 %v2679
    %3414 = vmatprep.subr.bf16.mxu0 %v2672
    %3415 = vmatpush1.bf16.msra.mxu0 %v2671
    %3416 = vmatprep.subr.bf16.mxu0 %v2664
    %3417 = vmatpush1.bf16.msra.mxu0 %v2663
    %3418 = vmatprep.subr.bf16.mxu0 %v2656
    %3419 = vmatpush1.bf16.msra.mxu0 %v2655
    %3420 = vmatprep.subr.bf16.mxu0 %v2648
    %3421 = vmatpush1.bf16.msra.mxu0 %v2647
    %3422 = vmatprep.subr.bf16.mxu0 %v2640
    %3423 = vmatpush1.bf16.msra.mxu0 %v2639
    %3424 = vmatprep.subr.bf16.mxu0 %v2760
    %3425 = vmatpush2.bf16.msra.mxu0 %v2759
    %3426 = vmatprep.subr.bf16.mxu0 %v2752
    %3427 = vmatpush2.bf16.msra.mxu0 %v2751
    %3428 = vmatprep.subr.bf16.mxu0 %v2744
    %3429 = vmatpush2.bf16.msra.mxu0 %v2743
    %3430 = vmatprep.subr.bf16.mxu0 %v2736
    %3431 = vmatpush2.bf16.msra.mxu0 %v2735
    %3432 = vmatprep.subr.bf16.mxu0 %v2728
    %3433 = vmatpush2.bf16.msra.mxu0 %v2727
    %3434 = vmatprep.subr.bf16.mxu0 %v2720
    %3435 = vmatpush2.bf16.msra.mxu0 %v2719
    %3436 = vmatprep.subr.bf16.mxu0 %v2712
    %3437 = vmatpush2.bf16.msra.mxu0 %v2711
    %3438 = vmatprep.subr.bf16.mxu0 %v2704
    %3439 = vmatpush2.bf16.msra.mxu0 %v2703
    %3440 = vmatprep.mubr.bf16.mxu0 %v710
    %3441 = vmatmul.mubr.bf16.gmra.mxu0 %v709
    %v3442 = vpop.f32.mrf.mxu0
    %v3443 = vadd.f32 %v3400, %v3442
    %v3444 = vpop.f32.mrf.mxu0
    %v3445 = vadd.f32 %v3402, %v3444
    %v3446 = vpop.f32.mrf.mxu0
    %v3447 = vadd.f32 %v3404, %v3446
    %v3448 = vpop.f32.mrf.mxu0
    %v3449 = vadd.f32 %v3406, %v3448
    %3450 = vdwg.mxu0
    %3451 = vmatprep.subr.bf16.mxu0 %v2314
    %3452 = vmatpush1.bf16.msra.mxu0 %v2313
    %3453 = vmatprep.subr.bf16.mxu0 %v2306
    %3454 = vmatpush1.bf16.msra.mxu0 %v2305
    %3455 = vmatprep.subr.bf16.mxu0 %v2298
    %3456 = vmatpush1.bf16.msra.mxu0 %v2297
    %3457 = vmatprep.subr.bf16.mxu0 %v2290
    %3458 = vmatpush1.bf16.msra.mxu0 %v2289
    %3459 = vmatprep.subr.bf16.mxu0 %v2282
    %3460 = vmatpush1.bf16.msra.mxu0 %v2281
    %3461 = vmatprep.subr.bf16.mxu0 %v2274
    %3462 = vmatpush1.bf16.msra.mxu0 %v2273
    %3463 = vmatprep.subr.bf16.mxu0 %v2266
    %3464 = vmatpush1.bf16.msra.mxu0 %v2265
    %3465 = vmatprep.subr.bf16.mxu0 %v2258
    %3466 = vmatpush1.bf16.msra.mxu0 %v2257
    %3467 = vmatprep.subr.bf16.mxu0 %v2378
    %3468 = vmatpush2.bf16.msra.mxu0 %v2377
    %3469 = vmatprep.subr.bf16.mxu0 %v2370
    %3470 = vmatpush2.bf16.msra.mxu0 %v2369
    %3471 = vmatprep.subr.bf16.mxu0 %v2362
    %3472 = vmatpush2.bf16.msra.mxu0 %v2361
    %3473 = vmatprep.subr.bf16.mxu0 %v2354
    %3474 = vmatpush2.bf16.msra.mxu0 %v2353
    %3475 = vmatprep.subr.bf16.mxu0 %v2346
    %3476 = vmatpush2.bf16.msra.mxu0 %v2345
    %3477 = vmatprep.subr.bf16.mxu0 %v2338
    %3478 = vmatpush2.bf16.msra.mxu0 %v2337
    %3479 = vmatprep.subr.bf16.mxu0 %v2330
    %3480 = vmatpush2.bf16.msra.mxu0 %v2329
    %3481 = vmatprep.subr.bf16.mxu0 %v2322
    %3482 = vmatpush2.bf16.msra.mxu0 %v2321
    %3483 = vmatprep.mubr.bf16.mxu0 %v704
    %3484 = vmatmul.mubr.bf16.gmra.mxu0 %v703
    %v3485 = vpop.f32.mrf.mxu0
    %v3486 = vadd.f32 %v650, %v3485
    %v3487 = vpop.f32.mrf.mxu0
    %v3488 = vadd.f32 %v654, %v3487
    %v3489 = vpop.f32.mrf.mxu0
    %v3490 = vadd.f32 %v650, %v3489
    %v3491 = vpop.f32.mrf.mxu0
    %v3492 = vadd.f32 %v654, %v3491
    %3493 = vdwg.mxu0
    %3494 = vmatprep.subr.bf16.mxu0 %v2442
    %3495 = vmatpush1.bf16.msra.mxu0 %v2441
    %3496 = vmatprep.subr.bf16.mxu0 %v2434
    %3497 = vmatpush1.bf16.msra.mxu0 %v2433
    %3498 = vmatprep.subr.bf16.mxu0 %v2426
    %3499 = vmatpush1.bf16.msra.mxu0 %v2425
    %3500 = vmatprep.subr.bf16.mxu0 %v2418
    %3501 = vmatpush1.bf16.msra.mxu0 %v2417
    %3502 = vmatprep.subr.bf16.mxu0 %v2410
    %3503 = vmatpush1.bf16.msra.mxu0 %v2409
    %3504 = vmatprep.subr.bf16.mxu0 %v2402
    %3505 = vmatpush1.bf16.msra.mxu0 %v2401
    %3506 = vmatprep.subr.bf16.mxu0 %v2394
    %3507 = vmatpush1.bf16.msra.mxu0 %v2393
    %3508 = vmatprep.subr.bf16.mxu0 %v2386
    %3509 = vmatpush1.bf16.msra.mxu0 %v2385
    %3510 = vmatprep.subr.bf16.mxu0 %v2506
    %3511 = vmatpush2.bf16.msra.mxu0 %v2505
    %3512 = vmatprep.subr.bf16.mxu0 %v2498
    %3513 = vmatpush2.bf16.msra.mxu0 %v2497
    %3514 = vmatprep.subr.bf16.mxu0 %v2490
    %3515 = vmatpush2.bf16.msra.mxu0 %v2489
    %3516 = vmatprep.subr.bf16.mxu0 %v2482
    %3517 = vmatpush2.bf16.msra.mxu0 %v2481
    %3518 = vmatprep.subr.bf16.mxu0 %v2474
    %3519 = vmatpush2.bf16.msra.mxu0 %v2473
    %3520 = vmatprep.subr.bf16.mxu0 %v2466
    %3521 = vmatpush2.bf16.msra.mxu0 %v2465
    %3522 = vmatprep.subr.bf16.mxu0 %v2458
    %3523 = vmatpush2.bf16.msra.mxu0 %v2457
    %3524 = vmatprep.subr.bf16.mxu0 %v2450
    %3525 = vmatpush2.bf16.msra.mxu0 %v2449
    %3526 = vmatprep.mubr.bf16.mxu0 %v706
    %3527 = vmatmul.mubr.bf16.gmra.mxu0 %v705
    %v3528 = vpop.f32.mrf.mxu0
    %v3529 = vadd.f32 %v3486, %v3528
    %v3530 = vpop.f32.mrf.mxu0
    %v3531 = vadd.f32 %v3488, %v3530
    %v3532 = vpop.f32.mrf.mxu0
    %v3533 = vadd.f32 %v3490, %v3532
    %v3534 = vpop.f32.mrf.mxu0
    %v3535 = vadd.f32 %v3492, %v3534
    %3536 = vdwg.mxu0
    %3537 = vmatprep.subr.bf16.mxu0 %v2570
    %3538 = vmatpush1.bf16.msra.mxu0 %v2569
    %3539 = vmatprep.subr.bf16.mxu0 %v2562
    %3540 = vmatpush1.bf16.msra.mxu0 %v2561
    %3541 = vmatprep.subr.bf16.mxu0 %v2554
    %3542 = vmatpush1.bf16.msra.mxu0 %v2553
    %3543 = vmatprep.subr.bf16.mxu0 %v2546
    %3544 = vmatpush1.bf16.msra.mxu0 %v2545
    %3545 = vmatprep.subr.bf16.mxu0 %v2538
    %3546 = vmatpush1.bf16.msra.mxu0 %v2537
    %3547 = vmatprep.subr.bf16.mxu0 %v2530
    %3548 = vmatpush1.bf16.msra.mxu0 %v2529
    %3549 = vmatprep.subr.bf16.mxu0 %v2522
    %3550 = vmatpush1.bf16.msra.mxu0 %v2521
    %3551 = vmatprep.subr.bf16.mxu0 %v2514
    %3552 = vmatpush1.bf16.msra.mxu0 %v2513
    %3553 = vmatprep.subr.bf16.mxu0 %v2634
    %3554 = vmatpush2.bf16.msra.mxu0 %v2633
    %3555 = vmatprep.subr.bf16.mxu0 %v2626
    %3556 = vmatpush2.bf16.msra.mxu0 %v2625
    %3557 = vmatprep.subr.bf16.mxu0 %v2618
    %3558 = vmatpush2.bf16.msra.mxu0 %v2617
    %3559 = vmatprep.subr.bf16.mxu0 %v2610
    %3560 = vmatpush2.bf16.msra.mxu0 %v2609
    %3561 = vmatprep.subr.bf16.mxu0 %v2602
    %3562 = vmatpush2.bf16.msra.mxu0 %v2601
    %3563 = vmatprep.subr.bf16.mxu0 %v2594
    %3564 = vmatpush2.bf16.msra.mxu0 %v2593
    %3565 = vmatprep.subr.bf16.mxu0 %v2586
    %3566 = vmatpush2.bf16.msra.mxu0 %v2585
    %3567 = vmatprep.subr.bf16.mxu0 %v2578
    %3568 = vmatpush2.bf16.msra.mxu0 %v2577
    %3569 = vmatprep.mubr.bf16.mxu0 %v708
    %3570 = vmatmul.mubr.bf16.gmra.mxu0 %v707
    %v3571 = vpop.f32.mrf.mxu0
    %v3572 = vadd.f32 %v3529, %v3571
    %v3573 = vpop.f32.mrf.mxu0
    %v3574 = vadd.f32 %v3531, %v3573
    %v3575 = vpop.f32.mrf.mxu0
    %v3576 = vadd.f32 %v3533, %v3575
    %v3577 = vpop.f32.mrf.mxu0
    %v3578 = vadd.f32 %v3535, %v3577
    %3579 = vdwg.mxu0
    %3580 = vmatprep.subr.bf16.mxu0 %v2698
    %3581 = vmatpush1.bf16.msra.mxu0 %v2697
    %3582 = vmatprep.subr.bf16.mxu0 %v2690
    %3583 = vmatpush1.bf16.msra.mxu0 %v2689
    %3584 = vmatprep.subr.bf16.mxu0 %v2682
    %3585 = vmatpush1.bf16.msra.mxu0 %v2681
    %3586 = vmatprep.subr.bf16.mxu0 %v2674
    %3587 = vmatpush1.bf16.msra.mxu0 %v2673
    %3588 = vmatprep.subr.bf16.mxu0 %v2666
    %3589 = vmatpush1.bf16.msra.mxu0 %v2665
    %3590 = vmatprep.subr.bf16.mxu0 %v2658
    %3591 = vmatpush1.bf16.msra.mxu0 %v2657
    %3592 = vmatprep.subr.bf16.mxu0 %v2650
    %3593 = vmatpush1.bf16.msra.mxu0 %v2649
    %3594 = vmatprep.subr.bf16.mxu0 %v2642
    %3595 = vmatpush1.bf16.msra.mxu0 %v2641
    %3596 = vmatprep.subr.bf16.mxu0 %v2762
    %3597 = vmatpush2.bf16.msra.mxu0 %v2761
    %3598 = vmatprep.subr.bf16.mxu0 %v2754
    %3599 = vmatpush2.bf16.msra.mxu0 %v2753
    %3600 = vmatprep.subr.bf16.mxu0 %v2746
    %3601 = vmatpush2.bf16.msra.mxu0 %v2745
    %3602 = vmatprep.subr.bf16.mxu0 %v2738
    %3603 = vmatpush2.bf16.msra.mxu0 %v2737
    %3604 = vmatprep.subr.bf16.mxu0 %v2730
    %3605 = vmatpush2.bf16.msra.mxu0 %v2729
    %3606 = vmatprep.subr.bf16.mxu0 %v2722
    %3607 = vmatpush2.bf16.msra.mxu0 %v2721
    %3608 = vmatprep.subr.bf16.mxu0 %v2714
    %3609 = vmatpush2.bf16.msra.mxu0 %v2713
    %3610 = vmatprep.subr.bf16.mxu0 %v2706
    %3611 = vmatpush2.bf16.msra.mxu0 %v2705
    %3612 = vmatprep.mubr.bf16.mxu0 %v710
    %3613 = vmatmul.mubr.bf16.gmra.mxu0 %v709
    %v3614 = vpop.f32.mrf.mxu0
    %v3615 = vadd.f32 %v3572, %v3614
    %v3616 = vpop.f32.mrf.mxu0
    %v3617 = vadd.f32 %v3574, %v3616
    %v3618 = vpop.f32.mrf.mxu0
    %v3619 = vadd.f32 %v3576, %v3618
    %v3620 = vpop.f32.mrf.mxu0
    %v3621 = vadd.f32 %v3578, %v3620
    %3622 = vdwg.mxu0
    %3623 = vmatprep.subr.bf16.mxu0 %v2316
    %3624 = vmatpush1.bf16.msra.mxu0 %v2315
    %3625 = vmatprep.subr.bf16.mxu0 %v2308
    %3626 = vmatpush1.bf16.msra.mxu0 %v2307
    %3627 = vmatprep.subr.bf16.mxu0 %v2300
    %3628 = vmatpush1.bf16.msra.mxu0 %v2299
    %3629 = vmatprep.subr.bf16.mxu0 %v2292
    %3630 = vmatpush1.bf16.msra.mxu0 %v2291
    %3631 = vmatprep.subr.bf16.mxu0 %v2284
    %3632 = vmatpush1.bf16.msra.mxu0 %v2283
    %3633 = vmatprep.subr.bf16.mxu0 %v2276
    %3634 = vmatpush1.bf16.msra.mxu0 %v2275
    %3635 = vmatprep.subr.bf16.mxu0 %v2268
    %3636 = vmatpush1.bf16.msra.mxu0 %v2267
    %3637 = vmatprep.subr.bf16.mxu0 %v2260
    %3638 = vmatpush1.bf16.msra.mxu0 %v2259
    %3639 = vmatprep.subr.bf16.mxu0 %v2380
    %3640 = vmatpush2.bf16.msra.mxu0 %v2379
    %3641 = vmatprep.subr.bf16.mxu0 %v2372
    %3642 = vmatpush2.bf16.msra.mxu0 %v2371
    %3643 = vmatprep.subr.bf16.mxu0 %v2364
    %3644 = vmatpush2.bf16.msra.mxu0 %v2363
    %3645 = vmatprep.subr.bf16.mxu0 %v2356
    %3646 = vmatpush2.bf16.msra.mxu0 %v2355
    %3647 = vmatprep.subr.bf16.mxu0 %v2348
    %3648 = vmatpush2.bf16.msra.mxu0 %v2347
    %3649 = vmatprep.subr.bf16.mxu0 %v2340
    %3650 = vmatpush2.bf16.msra.mxu0 %v2339
    %3651 = vmatprep.subr.bf16.mxu0 %v2332
    %3652 = vmatpush2.bf16.msra.mxu0 %v2331
    %3653 = vmatprep.subr.bf16.mxu0 %v2324
    %3654 = vmatpush2.bf16.msra.mxu0 %v2323
    %3655 = vmatprep.mubr.bf16.mxu0 %v704
    %3656 = vmatmul.mubr.bf16.gmra.mxu0 %v703
    %v3657 = vpop.f32.mrf.mxu0
    %v3658 = vadd.f32 %v658, %v3657
    %v3659 = vpop.f32.mrf.mxu0
    %v3660 = vadd.f32 %v662, %v3659
    %v3661 = vpop.f32.mrf.mxu0
    %v3662 = vadd.f32 %v658, %v3661
    %v3663 = vpop.f32.mrf.mxu0
    %v3664 = vadd.f32 %v662, %v3663
    %3665 = vdwg.mxu0
    %3666 = vmatprep.subr.bf16.mxu0 %v2444
    %3667 = vmatpush1.bf16.msra.mxu0 %v2443
    %3668 = vmatprep.subr.bf16.mxu0 %v2436
    %3669 = vmatpush1.bf16.msra.mxu0 %v2435
    %3670 = vmatprep.subr.bf16.mxu0 %v2428
    %3671 = vmatpush1.bf16.msra.mxu0 %v2427
    %3672 = vmatprep.subr.bf16.mxu0 %v2420
    %3673 = vmatpush1.bf16.msra.mxu0 %v2419
    %3674 = vmatprep.subr.bf16.mxu0 %v2412
    %3675 = vmatpush1.bf16.msra.mxu0 %v2411
    %3676 = vmatprep.subr.bf16.mxu0 %v2404
    %3677 = vmatpush1.bf16.msra.mxu0 %v2403
    %3678 = vmatprep.subr.bf16.mxu0 %v2396
    %3679 = vmatpush1.bf16.msra.mxu0 %v2395
    %3680 = vmatprep.subr.bf16.mxu0 %v2388
    %3681 = vmatpush1.bf16.msra.mxu0 %v2387
    %3682 = vmatprep.subr.bf16.mxu0 %v2508
    %3683 = vmatpush2.bf16.msra.mxu0 %v2507
    %3684 = vmatprep.subr.bf16.mxu0 %v2500
    %3685 = vmatpush2.bf16.msra.mxu0 %v2499
    %3686 = vmatprep.subr.bf16.mxu0 %v2492
    %3687 = vmatpush2.bf16.msra.mxu0 %v2491
    %3688 = vmatprep.subr.bf16.mxu0 %v2484
    %3689 = vmatpush2.bf16.msra.mxu0 %v2483
    %3690 = vmatprep.subr.bf16.mxu0 %v2476
    %3691 = vmatpush2.bf16.msra.mxu0 %v2475
    %3692 = vmatprep.subr.bf16.mxu0 %v2468
    %3693 = vmatpush2.bf16.msra.mxu0 %v2467
    %3694 = vmatprep.subr.bf16.mxu0 %v2460
    %3695 = vmatpush2.bf16.msra.mxu0 %v2459
    %3696 = vmatprep.subr.bf16.mxu0 %v2452
    %3697 = vmatpush2.bf16.msra.mxu0 %v2451
    %3698 = vmatprep.mubr.bf16.mxu0 %v706
    %3699 = vmatmul.mubr.bf16.gmra.mxu0 %v705
    %v3700 = vpop.f32.mrf.mxu0
    %v3701 = vadd.f32 %v3658, %v3700
    %v3702 = vpop.f32.mrf.mxu0
    %v3703 = vadd.f32 %v3660, %v3702
    %v3704 = vpop.f32.mrf.mxu0
    %v3705 = vadd.f32 %v3662, %v3704
    %v3706 = vpop.f32.mrf.mxu0
    %v3707 = vadd.f32 %v3664, %v3706
    %3708 = vdwg.mxu0
    %3709 = vmatprep.subr.bf16.mxu0 %v2572
    %3710 = vmatpush1.bf16.msra.mxu0 %v2571
    %3711 = vmatprep.subr.bf16.mxu0 %v2564
    %3712 = vmatpush1.bf16.msra.mxu0 %v2563
    %3713 = vmatprep.subr.bf16.mxu0 %v2556
    %3714 = vmatpush1.bf16.msra.mxu0 %v2555
    %3715 = vmatprep.subr.bf16.mxu0 %v2548
    %3716 = vmatpush1.bf16.msra.mxu0 %v2547
    %3717 = vmatprep.subr.bf16.mxu0 %v2540
    %3718 = vmatpush1.bf16.msra.mxu0 %v2539
    %3719 = vmatprep.subr.bf16.mxu0 %v2532
    %3720 = vmatpush1.bf16.msra.mxu0 %v2531
    %3721 = vmatprep.subr.bf16.mxu0 %v2524
    %3722 = vmatpush1.bf16.msra.mxu0 %v2523
    %3723 = vmatprep.subr.bf16.mxu0 %v2516
    %3724 = vmatpush1.bf16.msra.mxu0 %v2515
    %3725 = vmatprep.subr.bf16.mxu0 %v2636
    %3726 = vmatpush2.bf16.msra.mxu0 %v2635
    %3727 = vmatprep.subr.bf16.mxu0 %v2628
    %3728 = vmatpush2.bf16.msra.mxu0 %v2627
    %3729 = vmatprep.subr.bf16.mxu0 %v2620
    %3730 = vmatpush2.bf16.msra.mxu0 %v2619
    %3731 = vmatprep.subr.bf16.mxu0 %v2612
    %3732 = vmatpush2.bf16.msra.mxu0 %v2611
    %3733 = vmatprep.subr.bf16.mxu0 %v2604
    %3734 = vmatpush2.bf16.msra.mxu0 %v2603
    %3735 = vmatprep.subr.bf16.mxu0 %v2596
    %3736 = vmatpush2.bf16.msra.mxu0 %v2595
    %3737 = vmatprep.subr.bf16.mxu0 %v2588
    %3738 = vmatpush2.bf16.msra.mxu0 %v2587
    %3739 = vmatprep.subr.bf16.mxu0 %v2580
    %3740 = vmatpush2.bf16.msra.mxu0 %v2579
    %3741 = vmatprep.mubr.bf16.mxu0 %v708
    %3742 = vmatmul.mubr.bf16.gmra.mxu0 %v707
    %v3743 = vpop.f32.mrf.mxu0
    %v3744 = vadd.f32 %v3701, %v3743
    %v3745 = vpop.f32.mrf.mxu0
    %v3746 = vadd.f32 %v3703, %v3745
    %v3747 = vpop.f32.mrf.mxu0
    %v3748 = vadd.f32 %v3705, %v3747
    %v3749 = vpop.f32.mrf.mxu0
    %v3750 = vadd.f32 %v3707, %v3749
    %3751 = vdwg.mxu0
    %3752 = vmatprep.subr.bf16.mxu0 %v2700
    %3753 = vmatpush1.bf16.msra.mxu0 %v2699
    %3754 = vmatprep.subr.bf16.mxu0 %v2692
    %3755 = vmatpush1.bf16.msra.mxu0 %v2691
    %3756 = vmatprep.subr.bf16.mxu0 %v2684
    %3757 = vmatpush1.bf16.msra.mxu0 %v2683
    %3758 = vmatprep.subr.bf16.mxu0 %v2676
    %3759 = vmatpush1.bf16.msra.mxu0 %v2675
    %3760 = vmatprep.subr.bf16.mxu0 %v2668
    %3761 = vmatpush1.bf16.msra.mxu0 %v2667
    %3762 = vmatprep.subr.bf16.mxu0 %v2660
    %3763 = vmatpush1.bf16.msra.mxu0 %v2659
    %3764 = vmatprep.subr.bf16.mxu0 %v2652
    %3765 = vmatpush1.bf16.msra.mxu0 %v2651
    %3766 = vmatprep.subr.bf16.mxu0 %v2644
    %3767 = vmatpush1.bf16.msra.mxu0 %v2643
    %3768 = vmatprep.subr.bf16.mxu0 %v2764
    %3769 = vmatpush2.bf16.msra.mxu0 %v2763
    %3770 = vmatprep.subr.bf16.mxu0 %v2756
    %3771 = vmatpush2.bf16.msra.mxu0 %v2755
    %3772 = vmatprep.subr.bf16.mxu0 %v2748
    %3773 = vmatpush2.bf16.msra.mxu0 %v2747
    %3774 = vmatprep.subr.bf16.mxu0 %v2740
    %3775 = vmatpush2.bf16.msra.mxu0 %v2739
    %3776 = vmatprep.subr.bf16.mxu0 %v2732
    %3777 = vmatpush2.bf16.msra.mxu0 %v2731
    %3778 = vmatprep.subr.bf16.mxu0 %v2724
    %3779 = vmatpush2.bf16.msra.mxu0 %v2723
    %3780 = vmatprep.subr.bf16.mxu0 %v2716
    %3781 = vmatpush2.bf16.msra.mxu0 %v2715
    %3782 = vmatprep.subr.bf16.mxu0 %v2708
    %3783 = vmatpush2.bf16.msra.mxu0 %v2707
    %3784 = vmatprep.mubr.bf16.mxu0 %v710
    %3785 = vmatmul.mubr.bf16.gmra.mxu0 %v709
    %v3786 = vpop.f32.mrf.mxu0
    %v3787 = vadd.f32 %v3744, %v3786
    %v3788 = vpop.f32.mrf.mxu0
    %v3789 = vadd.f32 %v3746, %v3788
    %v3790 = vpop.f32.mrf.mxu0
    %v3791 = vadd.f32 %v3748, %v3790
    %v3792 = vpop.f32.mrf.mxu0
    %v3793 = vadd.f32 %v3750, %v3792
    %3794 = vdwg.mxu0
    %3795 = vmatprep.subr.bf16.mxu0 %v2318
    %3796 = vmatpush1.bf16.msra.mxu0 %v2317
    %3797 = vmatprep.subr.bf16.mxu0 %v2310
    %3798 = vmatpush1.bf16.msra.mxu0 %v2309
    %3799 = vmatprep.subr.bf16.mxu0 %v2302
    %3800 = vmatpush1.bf16.msra.mxu0 %v2301
    %3801 = vmatprep.subr.bf16.mxu0 %v2294
    %3802 = vmatpush1.bf16.msra.mxu0 %v2293
    %3803 = vmatprep.subr.bf16.mxu0 %v2286
    %3804 = vmatpush1.bf16.msra.mxu0 %v2285
    %3805 = vmatprep.subr.bf16.mxu0 %v2278
    %3806 = vmatpush1.bf16.msra.mxu0 %v2277
    %3807 = vmatprep.subr.bf16.mxu0 %v2270
    %3808 = vmatpush1.bf16.msra.mxu0 %v2269
    %3809 = vmatprep.subr.bf16.mxu0 %v2262
    %3810 = vmatpush1.bf16.msra.mxu0 %v2261
    %3811 = vmatprep.subr.bf16.mxu0 %v2382
    %3812 = vmatpush2.bf16.msra.mxu0 %v2381
    %3813 = vmatprep.subr.bf16.mxu0 %v2374
    %3814 = vmatpush2.bf16.msra.mxu0 %v2373
    %3815 = vmatprep.subr.bf16.mxu0 %v2366
    %3816 = vmatpush2.bf16.msra.mxu0 %v2365
    %3817 = vmatprep.subr.bf16.mxu0 %v2358
    %3818 = vmatpush2.bf16.msra.mxu0 %v2357
    %3819 = vmatprep.subr.bf16.mxu0 %v2350
    %3820 = vmatpush2.bf16.msra.mxu0 %v2349
    %3821 = vmatprep.subr.bf16.mxu0 %v2342
    %3822 = vmatpush2.bf16.msra.mxu0 %v2341
    %3823 = vmatprep.subr.bf16.mxu0 %v2334
    %3824 = vmatpush2.bf16.msra.mxu0 %v2333
    %3825 = vmatprep.subr.bf16.mxu0 %v2326
    %3826 = vmatpush2.bf16.msra.mxu0 %v2325
    %3827 = vmatprep.mubr.bf16.mxu0 %v704
    %3828 = vmatmul.mubr.bf16.gmra.mxu0 %v703
    %v3829 = vpop.f32.mrf.mxu0
    %v3830 = vadd.f32 %v666, %v3829
    %v3831 = vpop.f32.mrf.mxu0
    %v3832 = vadd.f32 %v670, %v3831
    %v3833 = vpop.f32.mrf.mxu0
    %v3834 = vadd.f32 %v666, %v3833
    %v3835 = vpop.f32.mrf.mxu0
    %v3836 = vadd.f32 %v670, %v3835
    %3837 = vdwg.mxu0
    %3838 = vmatprep.subr.bf16.mxu0 %v2446
    %3839 = vmatpush1.bf16.msra.mxu0 %v2445
    %3840 = vmatprep.subr.bf16.mxu0 %v2438
    %3841 = vmatpush1.bf16.msra.mxu0 %v2437
    %3842 = vmatprep.subr.bf16.mxu0 %v2430
    %3843 = vmatpush1.bf16.msra.mxu0 %v2429
    %3844 = vmatprep.subr.bf16.mxu0 %v2422
    %3845 = vmatpush1.bf16.msra.mxu0 %v2421
    %3846 = vmatprep.subr.bf16.mxu0 %v2414
    %3847 = vmatpush1.bf16.msra.mxu0 %v2413
    %3848 = vmatprep.subr.bf16.mxu0 %v2406
    %3849 = vmatpush1.bf16.msra.mxu0 %v2405
    %3850 = vmatprep.subr.bf16.mxu0 %v2398
    %3851 = vmatpush1.bf16.msra.mxu0 %v2397
    %3852 = vmatprep.subr.bf16.mxu0 %v2390
    %3853 = vmatpush1.bf16.msra.mxu0 %v2389
    %3854 = vmatprep.subr.bf16.mxu0 %v2510
    %3855 = vmatpush2.bf16.msra.mxu0 %v2509
    %3856 = vmatprep.subr.bf16.mxu0 %v2502
    %3857 = vmatpush2.bf16.msra.mxu0 %v2501
    %3858 = vmatprep.subr.bf16.mxu0 %v2494
    %3859 = vmatpush2.bf16.msra.mxu0 %v2493
    %3860 = vmatprep.subr.bf16.mxu0 %v2486
    %3861 = vmatpush2.bf16.msra.mxu0 %v2485
    %3862 = vmatprep.subr.bf16.mxu0 %v2478
    %3863 = vmatpush2.bf16.msra.mxu0 %v2477
    %3864 = vmatprep.subr.bf16.mxu0 %v2470
    %3865 = vmatpush2.bf16.msra.mxu0 %v2469
    %3866 = vmatprep.subr.bf16.mxu0 %v2462
    %3867 = vmatpush2.bf16.msra.mxu0 %v2461
    %3868 = vmatprep.subr.bf16.mxu0 %v2454
    %3869 = vmatpush2.bf16.msra.mxu0 %v2453
    %3870 = vmatprep.mubr.bf16.mxu0 %v706
    %3871 = vmatmul.mubr.bf16.gmra.mxu0 %v705
    %v3872 = vpop.f32.mrf.mxu0
    %v3873 = vadd.f32 %v3830, %v3872
    %v3874 = vpop.f32.mrf.mxu0
    %v3875 = vadd.f32 %v3832, %v3874
    %v3876 = vpop.f32.mrf.mxu0
    %v3877 = vadd.f32 %v3834, %v3876
    %v3878 = vpop.f32.mrf.mxu0
    %v3879 = vadd.f32 %v3836, %v3878
    %3880 = vdwg.mxu0
    %3881 = vmatprep.subr.bf16.mxu0 %v2574
    %3882 = vmatpush1.bf16.msra.mxu0 %v2573
    %3883 = vmatprep.subr.bf16.mxu0 %v2566
    %3884 = vmatpush1.bf16.msra.mxu0 %v2565
    %3885 = vmatprep.subr.bf16.mxu0 %v2558
    %3886 = vmatpush1.bf16.msra.mxu0 %v2557
    %3887 = vmatprep.subr.bf16.mxu0 %v2550
    %3888 = vmatpush1.bf16.msra.mxu0 %v2549
    %3889 = vmatprep.subr.bf16.mxu0 %v2542
    %3890 = vmatpush1.bf16.msra.mxu0 %v2541
    %3891 = vmatprep.subr.bf16.mxu0 %v2534
    %3892 = vmatpush1.bf16.msra.mxu0 %v2533
    %3893 = vmatprep.subr.bf16.mxu0 %v2526
    %3894 = vmatpush1.bf16.msra.mxu0 %v2525
    %3895 = vmatprep.subr.bf16.mxu0 %v2518
    %3896 = vmatpush1.bf16.msra.mxu0 %v2517
    %3897 = vmatprep.subr.bf16.mxu0 %v2638
    %3898 = vmatpush2.bf16.msra.mxu0 %v2637
    %3899 = vmatprep.subr.bf16.mxu0 %v2630
    %3900 = vmatpush2.bf16.msra.mxu0 %v2629
    %3901 = vmatprep.subr.bf16.mxu0 %v2622
    %3902 = vmatpush2.bf16.msra.mxu0 %v2621
    %3903 = vmatprep.subr.bf16.mxu0 %v2614
    %3904 = vmatpush2.bf16.msra.mxu0 %v2613
    %3905 = vmatprep.subr.bf16.mxu0 %v2606
    %3906 = vmatpush2.bf16.msra.mxu0 %v2605
    %3907 = vmatprep.subr.bf16.mxu0 %v2598
    %3908 = vmatpush2.bf16.msra.mxu0 %v2597
    %3909 = vmatprep.subr.bf16.mxu0 %v2590
    %3910 = vmatpush2.bf16.msra.mxu0 %v2589
    %3911 = vmatprep.subr.bf16.mxu0 %v2582
    %3912 = vmatpush2.bf16.msra.mxu0 %v2581
    %3913 = vmatprep.mubr.bf16.mxu0 %v708
    %3914 = vmatmul.mubr.bf16.gmra.mxu0 %v707
    %v3915 = vpop.f32.mrf.mxu0
    %v3916 = vadd.f32 %v3873, %v3915
    %v3917 = vpop.f32.mrf.mxu0
    %v3918 = vadd.f32 %v3875, %v3917
    %v3919 = vpop.f32.mrf.mxu0
    %v3920 = vadd.f32 %v3877, %v3919
    %v3921 = vpop.f32.mrf.mxu0
    %v3922 = vadd.f32 %v3879, %v3921
    %3923 = vdwg.mxu0
    %3924 = vmatprep.subr.bf16.mxu0 %v2702
    %3925 = vmatpush1.bf16.msra.mxu0 %v2701
    %3926 = vmatprep.subr.bf16.mxu0 %v2694
    %3927 = vmatpush1.bf16.msra.mxu0 %v2693
    %3928 = vmatprep.subr.bf16.mxu0 %v2686
    %3929 = vmatpush1.bf16.msra.mxu0 %v2685
    %3930 = vmatprep.subr.bf16.mxu0 %v2678
    %3931 = vmatpush1.bf16.msra.mxu0 %v2677
    %3932 = vmatprep.subr.bf16.mxu0 %v2670
    %3933 = vmatpush1.bf16.msra.mxu0 %v2669
    %3934 = vmatprep.subr.bf16.mxu0 %v2662
    %3935 = vmatpush1.bf16.msra.mxu0 %v2661
    %3936 = vmatprep.subr.bf16.mxu0 %v2654
    %3937 = vmatpush1.bf16.msra.mxu0 %v2653
    %3938 = vmatprep.subr.bf16.mxu0 %v2646
    %3939 = vmatpush1.bf16.msra.mxu0 %v2645
    %3940 = vmatprep.subr.bf16.mxu0 %v2766
    %3941 = vmatpush2.bf16.msra.mxu0 %v2765
    %3942 = vmatprep.subr.bf16.mxu0 %v2758
    %3943 = vmatpush2.bf16.msra.mxu0 %v2757
    %3944 = vmatprep.subr.bf16.mxu0 %v2750
    %3945 = vmatpush2.bf16.msra.mxu0 %v2749
    %3946 = vmatprep.subr.bf16.mxu0 %v2742
    %3947 = vmatpush2.bf16.msra.mxu0 %v2741
    %3948 = vmatprep.subr.bf16.mxu0 %v2734
    %3949 = vmatpush2.bf16.msra.mxu0 %v2733
    %3950 = vmatprep.subr.bf16.mxu0 %v2726
    %3951 = vmatpush2.bf16.msra.mxu0 %v2725
    %3952 = vmatprep.subr.bf16.mxu0 %v2718
    %3953 = vmatpush2.bf16.msra.mxu0 %v2717
    %3954 = vmatprep.subr.bf16.mxu0 %v2710
    %3955 = vmatpush2.bf16.msra.mxu0 %v2709
    %3956 = vmatprep.mubr.bf16.mxu0 %v710
    %3957 = vmatmul.mubr.bf16.gmra.mxu0 %v709
    %v3958 = vpop.f32.mrf.mxu0
    %v3959 = vadd.f32 %v3916, %v3958
    %v3960 = vpop.f32.mrf.mxu0
    %v3961 = vadd.f32 %v3918, %v3960
    %v3962 = vpop.f32.mrf.mxu0
    %v3963 = vadd.f32 %v3920, %v3962
    %v3964 = vpop.f32.mrf.mxu0
    %v3965 = vadd.f32 %v3922, %v3964
    %3966 = vdwg.mxu0
    %v3967 = vmul.f32 %v3443, 0.5
    %v3968 = vmul.f32 %v3445, 0.5
    %v3969 = vmul.f32 %v3615, 0.5
    %v3970 = vmul.f32 %v3617, 0.5
    %v3971 = vmul.f32 %v3787, 0.5
    %v3972 = vmul.f32 %v3789, 0.5
    %v3973 = vmul.f32 %v3959, 0.5
    %v3974 = vmul.f32 %v3961, 0.5
    %v3975 = vmul.f32 %v3447, 0.5
    %v3976 = vmul.f32 %v3449, 0.5
    %v3977 = vmul.f32 %v3619, 0.5
    %v3978 = vmul.f32 %v3621, 0.5
    %v3979 = vmul.f32 %v3791, 0.5
    %v3980 = vmul.f32 %v3793, 0.5
    %v3981 = vmul.f32 %v3963, 0.5
    %v3982 = vmul.f32 %v3965, 0.5
    %v3983 = vtanh.pop %v3967
    %v3984 = vtanh.pop %v3968
    %v3985 = vtanh.pop %v3969
    %v3986 = vtanh.pop %v3970
    %v3987 = vtanh.pop %v3971
    %v3988 = vtanh.pop %v3972
    %v3989 = vtanh.pop %v3973
    %v3990 = vtanh.pop %v3974
    %v3991 = vtanh.pop %v3975
    %v3992 = vtanh.pop %v3976
    %v3993 = vtanh.pop %v3977
    %v3994 = vtanh.pop %v3978
    %v3995 = vtanh.pop %v3979
    %v3996 = vtanh.pop %v3980
    %v3997 = vtanh.pop %v3981
    %v3998 = vtanh.pop %v3982
    %v3999 = vadd.f32 %v3983, 1.0
    %v4000 = vadd.f32 %v3984, 1.0
    %v4001 = vadd.f32 %v3985, 1.0
    %v4002 = vadd.f32 %v3986, 1.0
    %v4003 = vadd.f32 %v3987, 1.0
    %v4004 = vadd.f32 %v3988, 1.0
    %v4005 = vadd.f32 %v3989, 1.0
    %v4006 = vadd.f32 %v3990, 1.0
    %v4007 = vadd.f32 %v3991, 1.0
    %v4008 = vadd.f32 %v3992, 1.0
    %v4009 = vadd.f32 %v3993, 1.0
    %v4010 = vadd.f32 %v3994, 1.0
    %v4011 = vadd.f32 %v3995, 1.0
    %v4012 = vadd.f32 %v3996, 1.0
    %v4013 = vadd.f32 %v3997, 1.0
    %v4014 = vadd.f32 %v3998, 1.0
    %v4015 = vmul.f32 %v3999, 0.5
    %v4016 = vmul.f32 %v4000, 0.5
    %v4017 = vmul.f32 %v4001, 0.5
    %v4018 = vmul.f32 %v4002, 0.5
    %v4019 = vmul.f32 %v4003, 0.5
    %v4020 = vmul.f32 %v4004, 0.5
    %v4021 = vmul.f32 %v4005, 0.5
    %v4022 = vmul.f32 %v4006, 0.5
    %v4023 = vmul.f32 %v4007, 0.5
    %v4024 = vmul.f32 %v4008, 0.5
    %v4025 = vmul.f32 %v4009, 0.5
    %v4026 = vmul.f32 %v4010, 0.5
    %v4027 = vmul.f32 %v4011, 0.5
    %v4028 = vmul.f32 %v4012, 0.5
    %v4029 = vmul.f32 %v4013, 0.5
    %v4030 = vmul.f32 %v4014, 0.5
    %v4031 = vpack.c.bf16 %v4023, %v4015
    %v4032 = vpack.c.bf16 %v4024, %v4016
    %v4033 = vpack.c.bf16 %v4025, %v4017
    %v4034 = vpack.c.bf16 %v4026, %v4018
    %v4035 = vpack.c.bf16 %v4027, %v4019
    %v4036 = vpack.c.bf16 %v4028, %v4020
    %v4037 = vpack.c.bf16 %v4029, %v4021
    %v4038 = vpack.c.bf16 %v4030, %v4022
    %v4039 = vld [vmem:[#allocation8] sm:$0xff]
    %v4040 = vld [vmem:[#allocation8 + $0x8] sm:$0xf]
    %v4041 = vld [vmem:[#allocation8 + $0xc] sm:$0xff]
    %v4042 = vld [vmem:[#allocation8 + $0x14] sm:$0xf]
    %v4043 = vld [vmem:[#allocation8 + $0x18] sm:$0xff]
    %v4044 = vld [vmem:[#allocation8 + $0x20] sm:$0xf]
    %v4045 = vld [vmem:[#allocation8 + $0x24] sm:$0xff]
    %v4046 = vld [vmem:[#allocation8 + $0x2c] sm:$0xf]
    %v4047 = vld [vmem:[#allocation8 + $0x30] sm:$0xff]
    %v4048 = vld [vmem:[#allocation8 + $0x38] sm:$0xf]
    %v4049 = vld [vmem:[#allocation8 + $0x3c] sm:$0xff]
    %v4050 = vld [vmem:[#allocation8 + $0x44] sm:$0xf]
    %v4051 = vld [vmem:[#allocation8 + $0x48] sm:$0xff]
    %v4052 = vld [vmem:[#allocation8 + $0x50] sm:$0xf]
    %v4053 = vld [vmem:[#allocation8 + $0x54] sm:$0xff]
    %v4054 = vld [vmem:[#allocation8 + $0x5c] sm:$0xf]
    %v4055 = vld [vmem:[#allocation8 + $0x60] sm:$0xff]
    %v4056 = vld [vmem:[#allocation8 + $0x68] sm:$0xf]
    %v4057 = vld [vmem:[#allocation8 + $0x6c] sm:$0xff]
    %v4058 = vld [vmem:[#allocation8 + $0x74] sm:$0xf]
    %v4059 = vld [vmem:[#allocation8 + $0x78] sm:$0xff]
    %v4060 = vld [vmem:[#allocation8 + $0x80] sm:$0xf]
    %v4061 = vld [vmem:[#allocation8 + $0x84] sm:$0xff]
    %v4062 = vld [vmem:[#allocation8 + $0x8c] sm:$0xf]
    %v4063 = vld [vmem:[#allocation8 + $0x90] sm:$0xff]
    %v4064 = vld [vmem:[#allocation8 + $0x98] sm:$0xf]
    %v4065 = vld [vmem:[#allocation8 + $0x9c] sm:$0xff]
    %v4066 = vld [vmem:[#allocation8 + $0xa4] sm:$0xf]
    %v4067 = vld [vmem:[#allocation8 + $0xa8] sm:$0xff]
    %v4068 = vld [vmem:[#allocation8 + $0xb0] sm:$0xf]
    %v4069 = vld [vmem:[#allocation8 + $0xb4] sm:$0xff]
    %v4070 = vld [vmem:[#allocation8 + $0xbc] sm:$0xf]
    %v4071 = vld [vmem:[#allocation8 + $0xc0] sm:$0xff]
    %v4072 = vld [vmem:[#allocation8 + $0xc8] sm:$0xf]
    %v4073 = vld [vmem:[#allocation8 + $0xcc] sm:$0xff]
    %v4074 = vld [vmem:[#allocation8 + $0xd4] sm:$0xf]
    %v4075 = vld [vmem:[#allocation8 + $0xd8] sm:$0xff]
    %v4076 = vld [vmem:[#allocation8 + $0xe0] sm:$0xf]
    %v4077 = vld [vmem:[#allocation8 + $0xe4] sm:$0xff]
    %v4078 = vld [vmem:[#allocation8 + $0xec] sm:$0xf]
    %v4079 = vld [vmem:[#allocation8 + $0xf0] sm:$0xff]
    %v4080 = vld [vmem:[#allocation8 + $0xf8] sm:$0xf]
    %v4081 = vld [vmem:[#allocation8 + $0xfc] sm:$0xff]
    %v4082 = vld [vmem:[#allocation8 + $0x104] sm:$0xf]
    %v4083 = vld [vmem:[#allocation8 + $0x108] sm:$0xff]
    %v4084 = vld [vmem:[#allocation8 + $0x110] sm:$0xf]
    %v4085 = vld [vmem:[#allocation8 + $0x114] sm:$0xff]
    %v4086 = vld [vmem:[#allocation8 + $0x11c] sm:$0xf]
    %v4087 = vld [vmem:[#allocation8 + $0x120] sm:$0xff]
    %v4088 = vld [vmem:[#allocation8 + $0x128] sm:$0xf]
    %v4089 = vld [vmem:[#allocation8 + $0x12c] sm:$0xff]
    %v4090 = vld [vmem:[#allocation8 + $0x134] sm:$0xf]
    %v4091 = vld [vmem:[#allocation8 + $0x138] sm:$0xff]
    %v4092 = vld [vmem:[#allocation8 + $0x140] sm:$0xf]
    %v4093 = vld [vmem:[#allocation8 + $0x144] sm:$0xff]
    %v4094 = vld [vmem:[#allocation8 + $0x14c] sm:$0xf]
    %v4095 = vld [vmem:[#allocation8 + $0x150] sm:$0xff]
    %v4096 = vld [vmem:[#allocation8 + $0x158] sm:$0xf]
    %v4097 = vld [vmem:[#allocation8 + $0x15c] sm:$0xff]
    %v4098 = vld [vmem:[#allocation8 + $0x164] sm:$0xf]
    %v4099 = vld [vmem:[#allocation8 + $0x168] sm:$0xff]
    %v4100 = vld [vmem:[#allocation8 + $0x170] sm:$0xf]
    %v4101 = vld [vmem:[#allocation8 + $0x174] sm:$0xff]
    %v4102 = vld [vmem:[#allocation8 + $0x17c] sm:$0xf]
    %v4103 = vld [vmem:[#allocation8 + $0x180] sm:$0xff]
    %v4104 = vld [vmem:[#allocation8 + $0x188] sm:$0xf]
    %v4105 = vld [vmem:[#allocation8 + $0x18c] sm:$0xff]
    %v4106 = vld [vmem:[#allocation8 + $0x194] sm:$0xf]
    %v4107 = vld [vmem:[#allocation8 + $0x198] sm:$0xff]
    %v4108 = vld [vmem:[#allocation8 + $0x1a0] sm:$0xf]
    %v4109 = vld [vmem:[#allocation8 + $0x1a4] sm:$0xff]
    %v4110 = vld [vmem:[#allocation8 + $0x1ac] sm:$0xf]
    %v4111 = vld [vmem:[#allocation8 + $0x1b0] sm:$0xff]
    %v4112 = vld [vmem:[#allocation8 + $0x1b8] sm:$0xf]
    %v4113 = vld [vmem:[#allocation8 + $0x1bc] sm:$0xff]
    %v4114 = vld [vmem:[#allocation8 + $0x1c4] sm:$0xf]
    %v4115 = vld [vmem:[#allocation8 + $0x1c8] sm:$0xff]
    %v4116 = vld [vmem:[#allocation8 + $0x1d0] sm:$0xf]
    %v4117 = vld [vmem:[#allocation8 + $0x1d4] sm:$0xff]
    %v4118 = vld [vmem:[#allocation8 + $0x1dc] sm:$0xf]
    %v4119 = vld [vmem:[#allocation8 + $0x1e0] sm:$0xff]
    %v4120 = vld [vmem:[#allocation8 + $0x1e8] sm:$0xf]
    %v4121 = vld [vmem:[#allocation8 + $0x1ec] sm:$0xff]
    %v4122 = vld [vmem:[#allocation8 + $0x1f4] sm:$0xf]
    %v4123 = vld [vmem:[#allocation8 + $0x1f8] sm:$0xff]
    %v4124 = vld [vmem:[#allocation8 + $0x200] sm:$0xf]
    %v4125 = vld [vmem:[#allocation8 + $0x204] sm:$0xff]
    %v4126 = vld [vmem:[#allocation8 + $0x20c] sm:$0xf]
    %v4127 = vld [vmem:[#allocation8 + $0x210] sm:$0xff]
    %v4128 = vld [vmem:[#allocation8 + $0x218] sm:$0xf]
    %v4129 = vld [vmem:[#allocation8 + $0x21c] sm:$0xff]
    %v4130 = vld [vmem:[#allocation8 + $0x224] sm:$0xf]
    %v4131 = vld [vmem:[#allocation8 + $0x228] sm:$0xff]
    %v4132 = vld [vmem:[#allocation8 + $0x230] sm:$0xf]
    %v4133 = vld [vmem:[#allocation8 + $0x234] sm:$0xff]
    %v4134 = vld [vmem:[#allocation8 + $0x23c] sm:$0xf]
    %v4135 = vld [vmem:[#allocation8 + $0x240] sm:$0xff]
    %v4136 = vld [vmem:[#allocation8 + $0x248] sm:$0xf]
    %v4137 = vld [vmem:[#allocation8 + $0x24c] sm:$0xff]
    %v4138 = vld [vmem:[#allocation8 + $0x254] sm:$0xf]
    %v4139 = vld [vmem:[#allocation8 + $0x258] sm:$0xff]
    %v4140 = vld [vmem:[#allocation8 + $0x260] sm:$0xf]
    %v4141 = vld [vmem:[#allocation8 + $0x264] sm:$0xff]
    %v4142 = vld [vmem:[#allocation8 + $0x26c] sm:$0xf]
    %v4143 = vld [vmem:[#allocation8 + $0x270] sm:$0xff]
    %v4144 = vld [vmem:[#allocation8 + $0x278] sm:$0xf]
    %v4145 = vld [vmem:[#allocation8 + $0x27c] sm:$0xff]
    %v4146 = vld [vmem:[#allocation8 + $0x284] sm:$0xf]
    %v4147 = vld [vmem:[#allocation8 + $0x288] sm:$0xff]
    %v4148 = vld [vmem:[#allocation8 + $0x290] sm:$0xf]
    %v4149 = vld [vmem:[#allocation8 + $0x294] sm:$0xff]
    %v4150 = vld [vmem:[#allocation8 + $0x29c] sm:$0xf]
    %v4151 = vld [vmem:[#allocation8 + $0x2a0] sm:$0xff]
    %v4152 = vld [vmem:[#allocation8 + $0x2a8] sm:$0xf]
    %v4153 = vld [vmem:[#allocation8 + $0x2ac] sm:$0xff]
    %v4154 = vld [vmem:[#allocation8 + $0x2b4] sm:$0xf]
    %v4155 = vld [vmem:[#allocation8 + $0x2b8] sm:$0xff]
    %v4156 = vld [vmem:[#allocation8 + $0x2c0] sm:$0xf]
    %v4157 = vld [vmem:[#allocation8 + $0x2c4] sm:$0xff]
    %v4158 = vld [vmem:[#allocation8 + $0x2cc] sm:$0xf]
    %v4159 = vld [vmem:[#allocation8 + $0x2d0] sm:$0xff]
    %v4160 = vld [vmem:[#allocation8 + $0x2d8] sm:$0xf]
    %v4161 = vld [vmem:[#allocation8 + $0x2dc] sm:$0xff]
    %v4162 = vld [vmem:[#allocation8 + $0x2e4] sm:$0xf]
    %v4163 = vld [vmem:[#allocation8 + $0x2e8] sm:$0xff]
    %v4164 = vld [vmem:[#allocation8 + $0x2f0] sm:$0xf]
    %v4165 = vld [vmem:[#allocation8 + $0x2f4] sm:$0xff]
    %v4166 = vld [vmem:[#allocation8 + $0x2fc] sm:$0xf]
    %v4167 = vld [vmem:[#allocation8 + $0x300] sm:$0xff]
    %v4168 = vld [vmem:[#allocation8 + $0x308] sm:$0xf]
    %v4169 = vld [vmem:[#allocation8 + $0x30c] sm:$0xff]
    %v4170 = vld [vmem:[#allocation8 + $0x314] sm:$0xf]
    %v4171 = vld [vmem:[#allocation8 + $0x318] sm:$0xff]
    %v4172 = vld [vmem:[#allocation8 + $0x320] sm:$0xf]
    %v4173 = vld [vmem:[#allocation8 + $0x324] sm:$0xff]
    %v4174 = vld [vmem:[#allocation8 + $0x32c] sm:$0xf]
    %v4175 = vld [vmem:[#allocation8 + $0x330] sm:$0xff]
    %v4176 = vld [vmem:[#allocation8 + $0x338] sm:$0xf]
    %v4177 = vld [vmem:[#allocation8 + $0x33c] sm:$0xff]
    %v4178 = vld [vmem:[#allocation8 + $0x344] sm:$0xf]
    %v4179 = vld [vmem:[#allocation8 + $0x348] sm:$0xff]
    %v4180 = vld [vmem:[#allocation8 + $0x350] sm:$0xf]
    %v4181 = vld [vmem:[#allocation8 + $0x354] sm:$0xff]
    %v4182 = vld [vmem:[#allocation8 + $0x35c] sm:$0xf]
    %v4183 = vld [vmem:[#allocation8 + $0x360] sm:$0xff]
    %v4184 = vld [vmem:[#allocation8 + $0x368] sm:$0xf]
    %v4185 = vld [vmem:[#allocation8 + $0x36c] sm:$0xff]
    %v4186 = vld [vmem:[#allocation8 + $0x374] sm:$0xf]
    %v4187 = vld [vmem:[#allocation8 + $0x378] sm:$0xff]
    %v4188 = vld [vmem:[#allocation8 + $0x380] sm:$0xf]
    %v4189 = vld [vmem:[#allocation8 + $0x384] sm:$0xff]
    %v4190 = vld [vmem:[#allocation8 + $0x38c] sm:$0xf]
    %v4191 = vld [vmem:[#allocation8 + $0x390] sm:$0xff]
    %v4192 = vld [vmem:[#allocation8 + $0x398] sm:$0xf]
    %v4193 = vld [vmem:[#allocation8 + $0x39c] sm:$0xff]
    %v4194 = vld [vmem:[#allocation8 + $0x3a4] sm:$0xf]
    %v4195 = vld [vmem:[#allocation8 + $0x3a8] sm:$0xff]
    %v4196 = vld [vmem:[#allocation8 + $0x3b0] sm:$0xf]
    %v4197 = vld [vmem:[#allocation8 + $0x3b4] sm:$0xff]
    %v4198 = vld [vmem:[#allocation8 + $0x3bc] sm:$0xf]
    %v4199 = vld [vmem:[#allocation8 + $0x3c0] sm:$0xff]
    %v4200 = vld [vmem:[#allocation8 + $0x3c8] sm:$0xf]
    %v4201 = vld [vmem:[#allocation8 + $0x3cc] sm:$0xff]
    %v4202 = vld [vmem:[#allocation8 + $0x3d4] sm:$0xf]
    %v4203 = vld [vmem:[#allocation8 + $0x3d8] sm:$0xff]
    %v4204 = vld [vmem:[#allocation8 + $0x3e0] sm:$0xf]
    %v4205 = vld [vmem:[#allocation8 + $0x3e4] sm:$0xff]
    %v4206 = vld [vmem:[#allocation8 + $0x3ec] sm:$0xf]
    %v4207 = vld [vmem:[#allocation8 + $0x3f0] sm:$0xff]
    %v4208 = vld [vmem:[#allocation8 + $0x3f8] sm:$0xf]
    %v4209 = vld [vmem:[#allocation8 + $0x3fc] sm:$0xff]
    %v4210 = vld [vmem:[#allocation8 + $0x404] sm:$0xf]
    %v4211 = vld [vmem:[#allocation8 + $0x408] sm:$0xff]
    %v4212 = vld [vmem:[#allocation8 + $0x410] sm:$0xf]
    %v4213 = vld [vmem:[#allocation8 + $0x414] sm:$0xff]
    %v4214 = vld [vmem:[#allocation8 + $0x41c] sm:$0xf]
    %v4215 = vld [vmem:[#allocation8 + $0x420] sm:$0xff]
    %v4216 = vld [vmem:[#allocation8 + $0x428] sm:$0xf]
    %v4217 = vld [vmem:[#allocation8 + $0x42c] sm:$0xff]
    %v4218 = vld [vmem:[#allocation8 + $0x434] sm:$0xf]
    %v4219 = vld [vmem:[#allocation8 + $0x438] sm:$0xff]
    %v4220 = vld [vmem:[#allocation8 + $0x440] sm:$0xf]
    %v4221 = vld [vmem:[#allocation8 + $0x444] sm:$0xff]
    %v4222 = vld [vmem:[#allocation8 + $0x44c] sm:$0xf]
    %v4223 = vld [vmem:[#allocation8 + $0x450] sm:$0xff]
    %v4224 = vld [vmem:[#allocation8 + $0x458] sm:$0xf]
    %v4225 = vld [vmem:[#allocation8 + $0x45c] sm:$0xff]
    %v4226 = vld [vmem:[#allocation8 + $0x464] sm:$0xf]
    %v4227 = vld [vmem:[#allocation8 + $0x468] sm:$0xff]
    %v4228 = vld [vmem:[#allocation8 + $0x470] sm:$0xf]
    %v4229 = vld [vmem:[#allocation8 + $0x474] sm:$0xff]
    %v4230 = vld [vmem:[#allocation8 + $0x47c] sm:$0xf]
    %v4231 = vld [vmem:[#allocation8 + $0x480] sm:$0xff]
    %v4232 = vld [vmem:[#allocation8 + $0x488] sm:$0xf]
    %v4233 = vld [vmem:[#allocation8 + $0x48c] sm:$0xff]
    %v4234 = vld [vmem:[#allocation8 + $0x494] sm:$0xf]
    %v4235 = vld [vmem:[#allocation8 + $0x498] sm:$0xff]
    %v4236 = vld [vmem:[#allocation8 + $0x4a0] sm:$0xf]
    %v4237 = vld [vmem:[#allocation8 + $0x4a4] sm:$0xff]
    %v4238 = vld [vmem:[#allocation8 + $0x4ac] sm:$0xf]
    %v4239 = vld [vmem:[#allocation8 + $0x4b0] sm:$0xff]
    %v4240 = vld [vmem:[#allocation8 + $0x4b8] sm:$0xf]
    %v4241 = vld [vmem:[#allocation8 + $0x4bc] sm:$0xff]
    %v4242 = vld [vmem:[#allocation8 + $0x4c4] sm:$0xf]
    %v4243 = vld [vmem:[#allocation8 + $0x4c8] sm:$0xff]
    %v4244 = vld [vmem:[#allocation8 + $0x4d0] sm:$0xf]
    %v4245 = vld [vmem:[#allocation8 + $0x4d4] sm:$0xff]
    %v4246 = vld [vmem:[#allocation8 + $0x4dc] sm:$0xf]
    %v4247 = vld [vmem:[#allocation8 + $0x4e0] sm:$0xff]
    %v4248 = vld [vmem:[#allocation8 + $0x4e8] sm:$0xf]
    %v4249 = vld [vmem:[#allocation8 + $0x4ec] sm:$0xff]
    %v4250 = vld [vmem:[#allocation8 + $0x4f4] sm:$0xf]
    %v4251 = vld [vmem:[#allocation8 + $0x4f8] sm:$0xff]
    %v4252 = vld [vmem:[#allocation8 + $0x500] sm:$0xf]
    %v4253 = vld [vmem:[#allocation8 + $0x504] sm:$0xff]
    %v4254 = vld [vmem:[#allocation8 + $0x50c] sm:$0xf]
    %v4255 = vld [vmem:[#allocation8 + $0x510] sm:$0xff]
    %v4256 = vld [vmem:[#allocation8 + $0x518] sm:$0xf]
    %v4257 = vld [vmem:[#allocation8 + $0x51c] sm:$0xff]
    %v4258 = vld [vmem:[#allocation8 + $0x524] sm:$0xf]
    %v4259 = vld [vmem:[#allocation8 + $0x528] sm:$0xff]
    %v4260 = vld [vmem:[#allocation8 + $0x530] sm:$0xf]
    %v4261 = vld [vmem:[#allocation8 + $0x534] sm:$0xff]
    %v4262 = vld [vmem:[#allocation8 + $0x53c] sm:$0xf]
    %v4263 = vld [vmem:[#allocation8 + $0x540] sm:$0xff]
    %v4264 = vld [vmem:[#allocation8 + $0x548] sm:$0xf]
    %v4265 = vld [vmem:[#allocation8 + $0x54c] sm:$0xff]
    %v4266 = vld [vmem:[#allocation8 + $0x554] sm:$0xf]
    %v4267 = vld [vmem:[#allocation8 + $0x558] sm:$0xff]
    %v4268 = vld [vmem:[#allocation8 + $0x560] sm:$0xf]
    %v4269 = vld [vmem:[#allocation8 + $0x564] sm:$0xff]
    %v4270 = vld [vmem:[#allocation8 + $0x56c] sm:$0xf]
    %v4271 = vld [vmem:[#allocation8 + $0x570] sm:$0xff]
    %v4272 = vld [vmem:[#allocation8 + $0x578] sm:$0xf]
    %v4273 = vld [vmem:[#allocation8 + $0x57c] sm:$0xff]
    %v4274 = vld [vmem:[#allocation8 + $0x584] sm:$0xf]
    %v4275 = vld [vmem:[#allocation8 + $0x588] sm:$0xff]
    %v4276 = vld [vmem:[#allocation8 + $0x590] sm:$0xf]
    %v4277 = vld [vmem:[#allocation8 + $0x594] sm:$0xff]
    %v4278 = vld [vmem:[#allocation8 + $0x59c] sm:$0xf]
    %v4279 = vld [vmem:[#allocation8 + $0x5a0] sm:$0xff]
    %v4280 = vld [vmem:[#allocation8 + $0x5a8] sm:$0xf]
    %v4281 = vld [vmem:[#allocation8 + $0x5ac] sm:$0xff]
    %v4282 = vld [vmem:[#allocation8 + $0x5b4] sm:$0xf]
    %v4283 = vld [vmem:[#allocation8 + $0x5b8] sm:$0xff]
    %v4284 = vld [vmem:[#allocation8 + $0x5c0] sm:$0xf]
    %v4285 = vld [vmem:[#allocation8 + $0x5c4] sm:$0xff]
    %v4286 = vld [vmem:[#allocation8 + $0x5cc] sm:$0xf]
    %v4287 = vld [vmem:[#allocation8 + $0x5d0] sm:$0xff]
    %v4288 = vld [vmem:[#allocation8 + $0x5d8] sm:$0xf]
    %v4289 = vld [vmem:[#allocation8 + $0x5dc] sm:$0xff]
    %v4290 = vld [vmem:[#allocation8 + $0x5e4] sm:$0xf]
    %v4291 = vld [vmem:[#allocation8 + $0x5e8] sm:$0xff]
    %v4292 = vld [vmem:[#allocation8 + $0x5f0] sm:$0xf]
    %v4293 = vld [vmem:[#allocation8 + $0x5f4] sm:$0xff]
    %v4294 = vld [vmem:[#allocation8 + $0x5fc] sm:$0xf]
    %v4295 = vld [vmem:[#allocation10] sm:$0x7]
    %v4297 = vlaneseq
    %v4298 = vshrl.u32 %v4297, 7
    %v4299 = vsub.s32 0, %v4298
    %v4300 = vrot.slane %v4295, %v4299
    %v4301 = vlaneseq
    %v4302 = vshrl.u32 %v4301, 7
    %v4303 = vsub.s32 1, %v4302
    %v4304 = vrot.slane %v4295, %v4303
    %v4305 = vlaneseq
    %v4306 = vshrl.u32 %v4305, 7
    %v4307 = vsub.s32 2, %v4306
    %v4308 = vrot.slane %v4295, %v4307
    %v4568 = vunpack.c.l.b16 %v4039
    %v4569 = vunpack.c.h.b16 %v4039
    %v4570 = vunpack.c.l.b16 %v4040
    %v4571 = vunpack.c.l.b16 %v4041
    %v4572 = vunpack.c.h.b16 %v4041
    %v4573 = vunpack.c.l.b16 %v4042
    %v4574 = vunpack.c.l.b16 %v4043
    %v4575 = vunpack.c.h.b16 %v4043
    %v4576 = vunpack.c.l.b16 %v4044
    %v4577 = vunpack.c.l.b16 %v4045
    %v4578 = vunpack.c.h.b16 %v4045
    %v4579 = vunpack.c.l.b16 %v4046
    %v4580 = vunpack.c.l.b16 %v4047
    %v4581 = vunpack.c.h.b16 %v4047
    %v4582 = vunpack.c.l.b16 %v4048
    %v4583 = vunpack.c.l.b16 %v4049
    %v4584 = vunpack.c.h.b16 %v4049
    %v4585 = vunpack.c.l.b16 %v4050
    %v4586 = vunpack.c.l.b16 %v4051
    %v4587 = vunpack.c.h.b16 %v4051
    %v4588 = vunpack.c.l.b16 %v4052
    %v4589 = vunpack.c.l.b16 %v4053
    %v4590 = vunpack.c.h.b16 %v4053
    %v4591 = vunpack.c.l.b16 %v4054
    %v4592 = vunpack.c.l.b16 %v4055
    %v4593 = vunpack.c.h.b16 %v4055
    %v4594 = vunpack.c.l.b16 %v4056
    %v4595 = vunpack.c.l.b16 %v4057
    %v4596 = vunpack.c.h.b16 %v4057
    %v4597 = vunpack.c.l.b16 %v4058
    %v4598 = vunpack.c.l.b16 %v4059
    %v4599 = vunpack.c.h.b16 %v4059
    %v4600 = vunpack.c.l.b16 %v4060
    %v4601 = vunpack.c.l.b16 %v4061
    %v4602 = vunpack.c.h.b16 %v4061
    %v4603 = vunpack.c.l.b16 %v4062
    %v4604 = vunpack.c.l.b16 %v4063
    %v4605 = vunpack.c.h.b16 %v4063
    %v4606 = vunpack.c.l.b16 %v4064
    %v4607 = vunpack.c.l.b16 %v4065
    %v4608 = vunpack.c.h.b16 %v4065
    %v4609 = vunpack.c.l.b16 %v4066
    %v4610 = vunpack.c.l.b16 %v4067
    %v4611 = vunpack.c.h.b16 %v4067
    %v4612 = vunpack.c.l.b16 %v4068
    %v4613 = vunpack.c.l.b16 %v4069
    %v4614 = vunpack.c.h.b16 %v4069
    %v4615 = vunpack.c.l.b16 %v4070
    %v4616 = vunpack.c.l.b16 %v4071
    %v4617 = vunpack.c.h.b16 %v4071
    %v4618 = vunpack.c.l.b16 %v4072
    %v4619 = vunpack.c.l.b16 %v4073
    %v4620 = vunpack.c.h.b16 %v4073
    %v4621 = vunpack.c.l.b16 %v4074
    %v4622 = vunpack.c.l.b16 %v4075
    %v4623 = vunpack.c.h.b16 %v4075
    %v4624 = vunpack.c.l.b16 %v4076
    %v4625 = vunpack.c.l.b16 %v4077
    %v4626 = vunpack.c.h.b16 %v4077
    %v4627 = vunpack.c.l.b16 %v4078
    %v4628 = vunpack.c.l.b16 %v4079
    %v4629 = vunpack.c.h.b16 %v4079
    %v4630 = vunpack.c.l.b16 %v4080
    %v4631 = vunpack.c.l.b16 %v4081
    %v4632 = vunpack.c.h.b16 %v4081
    %v4633 = vunpack.c.l.b16 %v4082
    %v4634 = vunpack.c.l.b16 %v4083
    %v4635 = vunpack.c.h.b16 %v4083
    %v4636 = vunpack.c.l.b16 %v4084
    %v4637 = vunpack.c.l.b16 %v4085
    %v4638 = vunpack.c.h.b16 %v4085
    %v4639 = vunpack.c.l.b16 %v4086
    %v4640 = vunpack.c.l.b16 %v4087
    %v4641 = vunpack.c.h.b16 %v4087
    %v4642 = vunpack.c.l.b16 %v4088
    %v4643 = vunpack.c.l.b16 %v4089
    %v4644 = vunpack.c.h.b16 %v4089
    %v4645 = vunpack.c.l.b16 %v4090
    %v4646 = vunpack.c.l.b16 %v4091
    %v4647 = vunpack.c.h.b16 %v4091
    %v4648 = vunpack.c.l.b16 %v4092
    %v4649 = vunpack.c.l.b16 %v4093
    %v4650 = vunpack.c.h.b16 %v4093
    %v4651 = vunpack.c.l.b16 %v4094
    %v4652 = vunpack.c.l.b16 %v4095
    %v4653 = vunpack.c.h.b16 %v4095
    %v4654 = vunpack.c.l.b16 %v4096
    %v4655 = vunpack.c.l.b16 %v4097
    %v4656 = vunpack.c.h.b16 %v4097
    %v4657 = vunpack.c.l.b16 %v4098
    %v4658 = vunpack.c.l.b16 %v4099
    %v4659 = vunpack.c.h.b16 %v4099
    %v4660 = vunpack.c.l.b16 %v4100
    %v4661 = vunpack.c.l.b16 %v4101
    %v4662 = vunpack.c.h.b16 %v4101
    %v4663 = vunpack.c.l.b16 %v4102
    %v4664 = vunpack.c.l.b16 %v4103
    %v4665 = vunpack.c.h.b16 %v4103
    %v4666 = vunpack.c.l.b16 %v4104
    %v4667 = vunpack.c.l.b16 %v4105
    %v4668 = vunpack.c.h.b16 %v4105
    %v4669 = vunpack.c.l.b16 %v4106
    %v4670 = vunpack.c.l.b16 %v4107
    %v4671 = vunpack.c.h.b16 %v4107
    %v4672 = vunpack.c.l.b16 %v4108
    %v4673 = vunpack.c.l.b16 %v4109
    %v4674 = vunpack.c.h.b16 %v4109
    %v4675 = vunpack.c.l.b16 %v4110
    %v4676 = vunpack.c.l.b16 %v4111
    %v4677 = vunpack.c.h.b16 %v4111
    %v4678 = vunpack.c.l.b16 %v4112
    %v4679 = vunpack.c.l.b16 %v4113
    %v4680 = vunpack.c.h.b16 %v4113
    %v4681 = vunpack.c.l.b16 %v4114
    %v4682 = vunpack.c.l.b16 %v4115
    %v4683 = vunpack.c.h.b16 %v4115
    %v4684 = vunpack.c.l.b16 %v4116
    %v4685 = vunpack.c.l.b16 %v4117
    %v4686 = vunpack.c.h.b16 %v4117
    %v4687 = vunpack.c.l.b16 %v4118
    %v4688 = vunpack.c.l.b16 %v4119
    %v4689 = vunpack.c.h.b16 %v4119
    %v4690 = vunpack.c.l.b16 %v4120
    %v4691 = vunpack.c.l.b16 %v4121
    %v4692 = vunpack.c.h.b16 %v4121
    %v4693 = vunpack.c.l.b16 %v4122
    %v4694 = vunpack.c.l.b16 %v4123
    %v4695 = vunpack.c.h.b16 %v4123
    %v4696 = vunpack.c.l.b16 %v4124
    %v4697 = vunpack.c.l.b16 %v4125
    %v4698 = vunpack.c.h.b16 %v4125
    %v4699 = vunpack.c.l.b16 %v4126
    %v4700 = vunpack.c.l.b16 %v4127
    %v4701 = vunpack.c.h.b16 %v4127
    %v4702 = vunpack.c.l.b16 %v4128
    %v4703 = vunpack.c.l.b16 %v4129
    %v4704 = vunpack.c.h.b16 %v4129
    %v4705 = vunpack.c.l.b16 %v4130
    %v4706 = vunpack.c.l.b16 %v4131
    %v4707 = vunpack.c.h.b16 %v4131
    %v4708 = vunpack.c.l.b16 %v4132
    %v4709 = vunpack.c.l.b16 %v4133
    %v4710 = vunpack.c.h.b16 %v4133
    %v4711 = vunpack.c.l.b16 %v4134
    %v4712 = vunpack.c.l.b16 %v4135
    %v4713 = vunpack.c.h.b16 %v4135
    %v4714 = vunpack.c.l.b16 %v4136
    %v4715 = vunpack.c.l.b16 %v4137
    %v4716 = vunpack.c.h.b16 %v4137
    %v4717 = vunpack.c.l.b16 %v4138
    %v4718 = vunpack.c.l.b16 %v4139
    %v4719 = vunpack.c.h.b16 %v4139
    %v4720 = vunpack.c.l.b16 %v4140
    %v4721 = vunpack.c.l.b16 %v4141
    %v4722 = vunpack.c.h.b16 %v4141
    %v4723 = vunpack.c.l.b16 %v4142
    %v4724 = vunpack.c.l.b16 %v4143
    %v4725 = vunpack.c.h.b16 %v4143
    %v4726 = vunpack.c.l.b16 %v4144
    %v4727 = vunpack.c.l.b16 %v4145
    %v4728 = vunpack.c.h.b16 %v4145
    %v4729 = vunpack.c.l.b16 %v4146
    %v4730 = vunpack.c.l.b16 %v4147
    %v4731 = vunpack.c.h.b16 %v4147
    %v4732 = vunpack.c.l.b16 %v4148
    %v4733 = vunpack.c.l.b16 %v4149
    %v4734 = vunpack.c.h.b16 %v4149
    %v4735 = vunpack.c.l.b16 %v4150
    %v4736 = vunpack.c.l.b16 %v4151
    %v4737 = vunpack.c.h.b16 %v4151
    %v4738 = vunpack.c.l.b16 %v4152
    %v4739 = vunpack.c.l.b16 %v4153
    %v4740 = vunpack.c.h.b16 %v4153
    %v4741 = vunpack.c.l.b16 %v4154
    %v4742 = vunpack.c.l.b16 %v4155
    %v4743 = vunpack.c.h.b16 %v4155
    %v4744 = vunpack.c.l.b16 %v4156
    %v4745 = vunpack.c.l.b16 %v4157
    %v4746 = vunpack.c.h.b16 %v4157
    %v4747 = vunpack.c.l.b16 %v4158
    %v4748 = vunpack.c.l.b16 %v4159
    %v4749 = vunpack.c.h.b16 %v4159
    %v4750 = vunpack.c.l.b16 %v4160
    %v4751 = vunpack.c.l.b16 %v4161
    %v4752 = vunpack.c.h.b16 %v4161
    %v4753 = vunpack.c.l.b16 %v4162
    %v4754 = vunpack.c.l.b16 %v4163
    %v4755 = vunpack.c.h.b16 %v4163
    %v4756 = vunpack.c.l.b16 %v4164
    %v4757 = vunpack.c.l.b16 %v4165
    %v4758 = vunpack.c.h.b16 %v4165
    %v4759 = vunpack.c.l.b16 %v4166
    %v4760 = vunpack.c.l.b16 %v4167
    %v4761 = vunpack.c.h.b16 %v4167
    %v4762 = vunpack.c.l.b16 %v4168
    %v4763 = vunpack.c.l.b16 %v4169
    %v4764 = vunpack.c.h.b16 %v4169
    %v4765 = vunpack.c.l.b16 %v4170
    %v4766 = vunpack.c.l.b16 %v4171
    %v4767 = vunpack.c.h.b16 %v4171
    %v4768 = vunpack.c.l.b16 %v4172
    %v4769 = vunpack.c.l.b16 %v4173
    %v4770 = vunpack.c.h.b16 %v4173
    %v4771 = vunpack.c.l.b16 %v4174
    %v4772 = vunpack.c.l.b16 %v4175
    %v4773 = vunpack.c.h.b16 %v4175
    %v4774 = vunpack.c.l.b16 %v4176
    %v4775 = vunpack.c.l.b16 %v4177
    %v4776 = vunpack.c.h.b16 %v4177
    %v4777 = vunpack.c.l.b16 %v4178
    %v4778 = vunpack.c.l.b16 %v4179
    %v4779 = vunpack.c.h.b16 %v4179
    %v4780 = vunpack.c.l.b16 %v4180
    %v4781 = vunpack.c.l.b16 %v4181
    %v4782 = vunpack.c.h.b16 %v4181
    %v4783 = vunpack.c.l.b16 %v4182
    %v4784 = vunpack.c.l.b16 %v4183
    %v4785 = vunpack.c.h.b16 %v4183
    %v4786 = vunpack.c.l.b16 %v4184
    %v4787 = vunpack.c.l.b16 %v4185
    %v4788 = vunpack.c.h.b16 %v4185
    %v4789 = vunpack.c.l.b16 %v4186
    %v4790 = vunpack.c.l.b16 %v4187
    %v4791 = vunpack.c.h.b16 %v4187
    %v4792 = vunpack.c.l.b16 %v4188
    %v4793 = vunpack.c.l.b16 %v4189
    %v4794 = vunpack.c.h.b16 %v4189
    %v4795 = vunpack.c.l.b16 %v4190
    %v4796 = vunpack.c.l.b16 %v4191
    %v4797 = vunpack.c.h.b16 %v4191
    %v4798 = vunpack.c.l.b16 %v4192
    %v4799 = vunpack.c.l.b16 %v4193
    %v4800 = vunpack.c.h.b16 %v4193
    %v4801 = vunpack.c.l.b16 %v4194
    %v4802 = vunpack.c.l.b16 %v4195
    %v4803 = vunpack.c.h.b16 %v4195
    %v4804 = vunpack.c.l.b16 %v4196
    %v4805 = vunpack.c.l.b16 %v4197
    %v4806 = vunpack.c.h.b16 %v4197
    %v4807 = vunpack.c.l.b16 %v4198
    %v4808 = vunpack.c.l.b16 %v4199
    %v4809 = vunpack.c.h.b16 %v4199
    %v4810 = vunpack.c.l.b16 %v4200
    %v4811 = vunpack.c.l.b16 %v4201
    %v4812 = vunpack.c.h.b16 %v4201
    %v4813 = vunpack.c.l.b16 %v4202
    %v4814 = vunpack.c.l.b16 %v4203
    %v4815 = vunpack.c.h.b16 %v4203
    %v4816 = vunpack.c.l.b16 %v4204
    %v4817 = vunpack.c.l.b16 %v4205
    %v4818 = vunpack.c.h.b16 %v4205
    %v4819 = vunpack.c.l.b16 %v4206
    %v4820 = vunpack.c.l.b16 %v4207
    %v4821 = vunpack.c.h.b16 %v4207
    %v4822 = vunpack.c.l.b16 %v4208
    %v4823 = vunpack.c.l.b16 %v4209
    %v4824 = vunpack.c.h.b16 %v4209
    %v4825 = vunpack.c.l.b16 %v4210
    %v4826 = vunpack.c.l.b16 %v4211
    %v4827 = vunpack.c.h.b16 %v4211
    %v4828 = vunpack.c.l.b16 %v4212
    %v4829 = vunpack.c.l.b16 %v4213
    %v4830 = vunpack.c.h.b16 %v4213
    %v4831 = vunpack.c.l.b16 %v4214
    %v4832 = vunpack.c.l.b16 %v4215
    %v4833 = vunpack.c.h.b16 %v4215
    %v4834 = vunpack.c.l.b16 %v4216
    %v4835 = vunpack.c.l.b16 %v4217
    %v4836 = vunpack.c.h.b16 %v4217
    %v4837 = vunpack.c.l.b16 %v4218
    %v4838 = vunpack.c.l.b16 %v4219
    %v4839 = vunpack.c.h.b16 %v4219
    %v4840 = vunpack.c.l.b16 %v4220
    %v4841 = vunpack.c.l.b16 %v4221
    %v4842 = vunpack.c.h.b16 %v4221
    %v4843 = vunpack.c.l.b16 %v4222
    %v4844 = vunpack.c.l.b16 %v4223
    %v4845 = vunpack.c.h.b16 %v4223
    %v4846 = vunpack.c.l.b16 %v4224
    %v4847 = vunpack.c.l.b16 %v4225
    %v4848 = vunpack.c.h.b16 %v4225
    %v4849 = vunpack.c.l.b16 %v4226
    %v4850 = vunpack.c.l.b16 %v4227
    %v4851 = vunpack.c.h.b16 %v4227
    %v4852 = vunpack.c.l.b16 %v4228
    %v4853 = vunpack.c.l.b16 %v4229
    %v4854 = vunpack.c.h.b16 %v4229
    %v4855 = vunpack.c.l.b16 %v4230
    %v4856 = vunpack.c.l.b16 %v4231
    %v4857 = vunpack.c.h.b16 %v4231
    %v4858 = vunpack.c.l.b16 %v4232
    %v4859 = vunpack.c.l.b16 %v4233
    %v4860 = vunpack.c.h.b16 %v4233
    %v4861 = vunpack.c.l.b16 %v4234
    %v4862 = vunpack.c.l.b16 %v4235
    %v4863 = vunpack.c.h.b16 %v4235
    %v4864 = vunpack.c.l.b16 %v4236
    %v4865 = vunpack.c.l.b16 %v4237
    %v4866 = vunpack.c.h.b16 %v4237
    %v4867 = vunpack.c.l.b16 %v4238
    %v4868 = vunpack.c.l.b16 %v4239
    %v4869 = vunpack.c.h.b16 %v4239
    %v4870 = vunpack.c.l.b16 %v4240
    %v4871 = vunpack.c.l.b16 %v4241
    %v4872 = vunpack.c.h.b16 %v4241
    %v4873 = vunpack.c.l.b16 %v4242
    %v4874 = vunpack.c.l.b16 %v4243
    %v4875 = vunpack.c.h.b16 %v4243
    %v4876 = vunpack.c.l.b16 %v4244
    %v4877 = vunpack.c.l.b16 %v4245
    %v4878 = vunpack.c.h.b16 %v4245
    %v4879 = vunpack.c.l.b16 %v4246
    %v4880 = vunpack.c.l.b16 %v4247
    %v4881 = vunpack.c.h.b16 %v4247
    %v4882 = vunpack.c.l.b16 %v4248
    %v4883 = vunpack.c.l.b16 %v4249
    %v4884 = vunpack.c.h.b16 %v4249
    %v4885 = vunpack.c.l.b16 %v4250
    %v4886 = vunpack.c.l.b16 %v4251
    %v4887 = vunpack.c.h.b16 %v4251
    %v4888 = vunpack.c.l.b16 %v4252
    %v4889 = vunpack.c.l.b16 %v4253
    %v4890 = vunpack.c.h.b16 %v4253
    %v4891 = vunpack.c.l.b16 %v4254
    %v4892 = vunpack.c.l.b16 %v4255
    %v4893 = vunpack.c.h.b16 %v4255
    %v4894 = vunpack.c.l.b16 %v4256
    %v4895 = vunpack.c.l.b16 %v4257
    %v4896 = vunpack.c.h.b16 %v4257
    %v4897 = vunpack.c.l.b16 %v4258
    %v4898 = vunpack.c.l.b16 %v4259
    %v4899 = vunpack.c.h.b16 %v4259
    %v4900 = vunpack.c.l.b16 %v4260
    %v4901 = vunpack.c.l.b16 %v4261
    %v4902 = vunpack.c.h.b16 %v4261
    %v4903 = vunpack.c.l.b16 %v4262
    %v4904 = vunpack.c.l.b16 %v4263
    %v4905 = vunpack.c.h.b16 %v4263
    %v4906 = vunpack.c.l.b16 %v4264
    %v4907 = vunpack.c.l.b16 %v4265
    %v4908 = vunpack.c.h.b16 %v4265
    %v4909 = vunpack.c.l.b16 %v4266
    %v4910 = vunpack.c.l.b16 %v4267
    %v4911 = vunpack.c.h.b16 %v4267
    %v4912 = vunpack.c.l.b16 %v4268
    %v4913 = vunpack.c.l.b16 %v4269
    %v4914 = vunpack.c.h.b16 %v4269
    %v4915 = vunpack.c.l.b16 %v4270
    %v4916 = vunpack.c.l.b16 %v4271
    %v4917 = vunpack.c.h.b16 %v4271
    %v4918 = vunpack.c.l.b16 %v4272
    %v4919 = vunpack.c.l.b16 %v4273
    %v4920 = vunpack.c.h.b16 %v4273
    %v4921 = vunpack.c.l.b16 %v4274
    %v4922 = vunpack.c.l.b16 %v4275
    %v4923 = vunpack.c.h.b16 %v4275
    %v4924 = vunpack.c.l.b16 %v4276
    %v4925 = vunpack.c.l.b16 %v4277
    %v4926 = vunpack.c.h.b16 %v4277
    %v4927 = vunpack.c.l.b16 %v4278
    %v4928 = vunpack.c.l.b16 %v4279
    %v4929 = vunpack.c.h.b16 %v4279
    %v4930 = vunpack.c.l.b16 %v4280
    %v4931 = vunpack.c.l.b16 %v4281
    %v4932 = vunpack.c.h.b16 %v4281
    %v4933 = vunpack.c.l.b16 %v4282
    %v4934 = vunpack.c.l.b16 %v4283
    %v4935 = vunpack.c.h.b16 %v4283
    %v4936 = vunpack.c.l.b16 %v4284
    %v4937 = vunpack.c.l.b16 %v4285
    %v4938 = vunpack.c.h.b16 %v4285
    %v4939 = vunpack.c.l.b16 %v4286
    %v4940 = vunpack.c.l.b16 %v4287
    %v4941 = vunpack.c.h.b16 %v4287
    %v4942 = vunpack.c.l.b16 %v4288
    %v4943 = vunpack.c.l.b16 %v4289
    %v4944 = vunpack.c.h.b16 %v4289
    %v4945 = vunpack.c.l.b16 %v4290
    %v4946 = vunpack.c.l.b16 %v4291
    %v4947 = vunpack.c.h.b16 %v4291
    %v4948 = vunpack.c.l.b16 %v4292
    %v4949 = vunpack.c.l.b16 %v4293
    %v4950 = vunpack.c.h.b16 %v4293
    %v4951 = vunpack.c.l.b16 %v4294
    %v4952 = vpack.c.b16 %v4571, %v4568
    %v4953 = vpack.c.b16 %v4572, %v4569
    %v4954 = vpack.c.b16 %v4573, %v4570
    %v4955 = vpack.c.b16 %v4577, %v4574
    %v4956 = vpack.c.b16 %v4578, %v4575
    %v4957 = vpack.c.b16 %v4579, %v4576
    %v4958 = vpack.c.b16 %v4583, %v4580
    %v4959 = vpack.c.b16 %v4584, %v4581
    %v4960 = vpack.c.b16 %v4585, %v4582
    %v4961 = vpack.c.b16 %v4589, %v4586
    %v4962 = vpack.c.b16 %v4590, %v4587
    %v4963 = vpack.c.b16 %v4591, %v4588
    %v4964 = vpack.c.b16 %v4595, %v4592
    %v4965 = vpack.c.b16 %v4596, %v4593
    %v4966 = vpack.c.b16 %v4597, %v4594
    %v4967 = vpack.c.b16 %v4601, %v4598
    %v4968 = vpack.c.b16 %v4602, %v4599
    %v4969 = vpack.c.b16 %v4603, %v4600
    %v4970 = vpack.c.b16 %v4607, %v4604
    %v4971 = vpack.c.b16 %v4608, %v4605
    %v4972 = vpack.c.b16 %v4609, %v4606
    %v4973 = vpack.c.b16 %v4613, %v4610
    %v4974 = vpack.c.b16 %v4614, %v4611
    %v4975 = vpack.c.b16 %v4615, %v4612
    %v4976 = vpack.c.b16 %v4619, %v4616
    %v4977 = vpack.c.b16 %v4620, %v4617
    %v4978 = vpack.c.b16 %v4621, %v4618
    %v4979 = vpack.c.b16 %v4625, %v4622
    %v4980 = vpack.c.b16 %v4626, %v4623
    %v4981 = vpack.c.b16 %v4627, %v4624
    %v4982 = vpack.c.b16 %v4631, %v4628
    %v4983 = vpack.c.b16 %v4632, %v4629
    %v4984 = vpack.c.b16 %v4633, %v4630
    %v4985 = vpack.c.b16 %v4637, %v4634
    %v4986 = vpack.c.b16 %v4638, %v4635
    %v4987 = vpack.c.b16 %v4639, %v4636
    %v4988 = vpack.c.b16 %v4643, %v4640
    %v4989 = vpack.c.b16 %v4644, %v4641
    %v4990 = vpack.c.b16 %v4645, %v4642
    %v4991 = vpack.c.b16 %v4649, %v4646
    %v4992 = vpack.c.b16 %v4650, %v4647
    %v4993 = vpack.c.b16 %v4651, %v4648
    %v4994 = vpack.c.b16 %v4655, %v4652
    %v4995 = vpack.c.b16 %v4656, %v4653
    %v4996 = vpack.c.b16 %v4657, %v4654
    %v4997 = vpack.c.b16 %v4661, %v4658
    %v4998 = vpack.c.b16 %v4662, %v4659
    %v4999 = vpack.c.b16 %v4663, %v4660
    %v5000 = vpack.c.b16 %v4667, %v4664
    %v5001 = vpack.c.b16 %v4668, %v4665
    %v5002 = vpack.c.b16 %v4669, %v4666
    %v5003 = vpack.c.b16 %v4673, %v4670
    %v5004 = vpack.c.b16 %v4674, %v4671
    %v5005 = vpack.c.b16 %v4675, %v4672
    %v5006 = vpack.c.b16 %v4679, %v4676
    %v5007 = vpack.c.b16 %v4680, %v4677
    %v5008 = vpack.c.b16 %v4681, %v4678
    %v5009 = vpack.c.b16 %v4685, %v4682
    %v5010 = vpack.c.b16 %v4686, %v4683
    %v5011 = vpack.c.b16 %v4687, %v4684
    %v5012 = vpack.c.b16 %v4691, %v4688
    %v5013 = vpack.c.b16 %v4692, %v4689
    %v5014 = vpack.c.b16 %v4693, %v4690
    %v5015 = vpack.c.b16 %v4697, %v4694
    %v5016 = vpack.c.b16 %v4698, %v4695
    %v5017 = vpack.c.b16 %v4699, %v4696
    %v5018 = vpack.c.b16 %v4703, %v4700
    %v5019 = vpack.c.b16 %v4704, %v4701
    %v5020 = vpack.c.b16 %v4705, %v4702
    %v5021 = vpack.c.b16 %v4709, %v4706
    %v5022 = vpack.c.b16 %v4710, %v4707
    %v5023 = vpack.c.b16 %v4711, %v4708
    %v5024 = vpack.c.b16 %v4715, %v4712
    %v5025 = vpack.c.b16 %v4716, %v4713
    %v5026 = vpack.c.b16 %v4717, %v4714
    %v5027 = vpack.c.b16 %v4721, %v4718
    %v5028 = vpack.c.b16 %v4722, %v4719
    %v5029 = vpack.c.b16 %v4723, %v4720
    %v5030 = vpack.c.b16 %v4727, %v4724
    %v5031 = vpack.c.b16 %v4728, %v4725
    %v5032 = vpack.c.b16 %v4729, %v4726
    %v5033 = vpack.c.b16 %v4733, %v4730
    %v5034 = vpack.c.b16 %v4734, %v4731
    %v5035 = vpack.c.b16 %v4735, %v4732
    %v5036 = vpack.c.b16 %v4739, %v4736
    %v5037 = vpack.c.b16 %v4740, %v4737
    %v5038 = vpack.c.b16 %v4741, %v4738
    %v5039 = vpack.c.b16 %v4745, %v4742
    %v5040 = vpack.c.b16 %v4746, %v4743
    %v5041 = vpack.c.b16 %v4747, %v4744
    %v5042 = vpack.c.b16 %v4751, %v4748
    %v5043 = vpack.c.b16 %v4752, %v4749
    %v5044 = vpack.c.b16 %v4753, %v4750
    %v5045 = vpack.c.b16 %v4757, %v4754
    %v5046 = vpack.c.b16 %v4758, %v4755
    %v5047 = vpack.c.b16 %v4759, %v4756
    %v5048 = vpack.c.b16 %v4763, %v4760
    %v5049 = vpack.c.b16 %v4764, %v4761
    %v5050 = vpack.c.b16 %v4765, %v4762
    %v5051 = vpack.c.b16 %v4769, %v4766
    %v5052 = vpack.c.b16 %v4770, %v4767
    %v5053 = vpack.c.b16 %v4771, %v4768
    %v5054 = vpack.c.b16 %v4775, %v4772
    %v5055 = vpack.c.b16 %v4776, %v4773
    %v5056 = vpack.c.b16 %v4777, %v4774
    %v5057 = vpack.c.b16 %v4781, %v4778
    %v5058 = vpack.c.b16 %v4782, %v4779
    %v5059 = vpack.c.b16 %v4783, %v4780
    %v5060 = vpack.c.b16 %v4787, %v4784
    %v5061 = vpack.c.b16 %v4788, %v4785
    %v5062 = vpack.c.b16 %v4789, %v4786
    %v5063 = vpack.c.b16 %v4793, %v4790
    %v5064 = vpack.c.b16 %v4794, %v4791
    %v5065 = vpack.c.b16 %v4795, %v4792
    %v5066 = vpack.c.b16 %v4799, %v4796
    %v5067 = vpack.c.b16 %v4800, %v4797
    %v5068 = vpack.c.b16 %v4801, %v4798
    %v5069 = vpack.c.b16 %v4805, %v4802
    %v5070 = vpack.c.b16 %v4806, %v4803
    %v5071 = vpack.c.b16 %v4807, %v4804
    %v5072 = vpack.c.b16 %v4811, %v4808
    %v5073 = vpack.c.b16 %v4812, %v4809
    %v5074 = vpack.c.b16 %v4813, %v4810
    %v5075 = vpack.c.b16 %v4817, %v4814
    %v5076 = vpack.c.b16 %v4818, %v4815
    %v5077 = vpack.c.b16 %v4819, %v4816
    %v5078 = vpack.c.b16 %v4823, %v4820
    %v5079 = vpack.c.b16 %v4824, %v4821
    %v5080 = vpack.c.b16 %v4825, %v4822
    %v5081 = vpack.c.b16 %v4829, %v4826
    %v5082 = vpack.c.b16 %v4830, %v4827
    %v5083 = vpack.c.b16 %v4831, %v4828
    %v5084 = vpack.c.b16 %v4835, %v4832
    %v5085 = vpack.c.b16 %v4836, %v4833
    %v5086 = vpack.c.b16 %v4837, %v4834
    %v5087 = vpack.c.b16 %v4841, %v4838
    %v5088 = vpack.c.b16 %v4842, %v4839
    %v5089 = vpack.c.b16 %v4843, %v4840
    %v5090 = vpack.c.b16 %v4847, %v4844
    %v5091 = vpack.c.b16 %v4848, %v4845
    %v5092 = vpack.c.b16 %v4849, %v4846
    %v5093 = vpack.c.b16 %v4853, %v4850
    %v5094 = vpack.c.b16 %v4854, %v4851
    %v5095 = vpack.c.b16 %v4855, %v4852
    %v5096 = vpack.c.b16 %v4859, %v4856
    %v5097 = vpack.c.b16 %v4860, %v4857
    %v5098 = vpack.c.b16 %v4861, %v4858
    %v5099 = vpack.c.b16 %v4865, %v4862
    %v5100 = vpack.c.b16 %v4866, %v4863
    %v5101 = vpack.c.b16 %v4867, %v4864
    %v5102 = vpack.c.b16 %v4871, %v4868
    %v5103 = vpack.c.b16 %v4872, %v4869
    %v5104 = vpack.c.b16 %v4873, %v4870
    %v5105 = vpack.c.b16 %v4877, %v4874
    %v5106 = vpack.c.b16 %v4878, %v4875
    %v5107 = vpack.c.b16 %v4879, %v4876
    %v5108 = vpack.c.b16 %v4883, %v4880
    %v5109 = vpack.c.b16 %v4884, %v4881
    %v5110 = vpack.c.b16 %v4885, %v4882
    %v5111 = vpack.c.b16 %v4889, %v4886
    %v5112 = vpack.c.b16 %v4890, %v4887
    %v5113 = vpack.c.b16 %v4891, %v4888
    %v5114 = vpack.c.b16 %v4895, %v4892
    %v5115 = vpack.c.b16 %v4896, %v4893
    %v5116 = vpack.c.b16 %v4897, %v4894
    %v5117 = vpack.c.b16 %v4901, %v4898
    %v5118 = vpack.c.b16 %v4902, %v4899
    %v5119 = vpack.c.b16 %v4903, %v4900
    %v5120 = vpack.c.b16 %v4907, %v4904
    %v5121 = vpack.c.b16 %v4908, %v4905
    %v5122 = vpack.c.b16 %v4909, %v4906
    %v5123 = vpack.c.b16 %v4913, %v4910
    %v5124 = vpack.c.b16 %v4914, %v4911
    %v5125 = vpack.c.b16 %v4915, %v4912
    %v5126 = vpack.c.b16 %v4919, %v4916
    %v5127 = vpack.c.b16 %v4920, %v4917
    %v5128 = vpack.c.b16 %v4921, %v4918
    %v5129 = vpack.c.b16 %v4925, %v4922
    %v5130 = vpack.c.b16 %v4926, %v4923
    %v5131 = vpack.c.b16 %v4927, %v4924
    %v5132 = vpack.c.b16 %v4931, %v4928
    %v5133 = vpack.c.b16 %v4932, %v4929
    %v5134 = vpack.c.b16 %v4933, %v4930
    %v5135 = vpack.c.b16 %v4937, %v4934
    %v5136 = vpack.c.b16 %v4938, %v4935
    %v5137 = vpack.c.b16 %v4939, %v4936
    %v5138 = vpack.c.b16 %v4943, %v4940
    %v5139 = vpack.c.b16 %v4944, %v4941
    %v5140 = vpack.c.b16 %v4945, %v4942
    %v5141 = vpack.c.b16 %v4949, %v4946
    %v5142 = vpack.c.b16 %v4950, %v4947
    %v5143 = vpack.c.b16 %v4951, %v4948
    %5336 = vmatprep.subr.bf16.mxu0 %v4974
    %5337 = vmatpush1.bf16.msra.mxu0 %v4973
    %5338 = vmatprep.subr.bf16.mxu0 %v4971
    %5339 = vmatpush1.bf16.msra.mxu0 %v4970
    %5340 = vmatprep.subr.bf16.mxu0 %v4968
    %5341 = vmatpush1.bf16.msra.mxu0 %v4967
    %5342 = vmatprep.subr.bf16.mxu0 %v4965
    %5343 = vmatpush1.bf16.msra.mxu0 %v4964
    %5344 = vmatprep.subr.bf16.mxu0 %v4962
    %5345 = vmatpush1.bf16.msra.mxu0 %v4961
    %5346 = vmatprep.subr.bf16.mxu0 %v4959
    %5347 = vmatpush1.bf16.msra.mxu0 %v4958
    %5348 = vmatprep.subr.bf16.mxu0 %v4956
    %5349 = vmatpush1.bf16.msra.mxu0 %v4955
    %5350 = vmatprep.subr.bf16.mxu0 %v4953
    %5351 = vmatpush1.bf16.msra.mxu0 %v4952
    %5352 = vmatprep.subr.bf16.mxu0 %v4998
    %5353 = vmatpush2.bf16.msra.mxu0 %v4997
    %5354 = vmatprep.subr.bf16.mxu0 %v4995
    %5355 = vmatpush2.bf16.msra.mxu0 %v4994
    %5356 = vmatprep.subr.bf16.mxu0 %v4992
    %5357 = vmatpush2.bf16.msra.mxu0 %v4991
    %5358 = vmatprep.subr.bf16.mxu0 %v4989
    %5359 = vmatpush2.bf16.msra.mxu0 %v4988
    %5360 = vmatprep.subr.bf16.mxu0 %v4986
    %5361 = vmatpush2.bf16.msra.mxu0 %v4985
    %5362 = vmatprep.subr.bf16.mxu0 %v4983
    %5363 = vmatpush2.bf16.msra.mxu0 %v4982
    %5364 = vmatprep.subr.bf16.mxu0 %v4980
    %5365 = vmatpush2.bf16.msra.mxu0 %v4979
    %5366 = vmatprep.subr.bf16.mxu0 %v4977
    %5367 = vmatpush2.bf16.msra.mxu0 %v4976
    %5368 = vmatprep.mubr.bf16.mxu0 %v4032
    %5369 = vmatmul.mubr.bf16.gmra.mxu0 %v4031
    %v5370 = vpop.f32.mrf.mxu0
    %v5371 = vadd.f32 %v4300, %v5370
    %v5372 = vpop.f32.mrf.mxu0
    %v5373 = vadd.f32 %v4304, %v5372
    %v5374 = vpop.f32.mrf.mxu0
    %v5375 = vadd.f32 %v4300, %v5374
    %v5376 = vpop.f32.mrf.mxu0
    %v5377 = vadd.f32 %v4304, %v5376
    %5378 = vdwg.mxu0
    %5379 = vmatprep.subr.bf16.mxu0 %v5022
    %5380 = vmatpush1.bf16.msra.mxu0 %v5021
    %5381 = vmatprep.subr.bf16.mxu0 %v5019
    %5382 = vmatpush1.bf16.msra.mxu0 %v5018
    %5383 = vmatprep.subr.bf16.mxu0 %v5016
    %5384 = vmatpush1.bf16.msra.mxu0 %v5015
    %5385 = vmatprep.subr.bf16.mxu0 %v5013
    %5386 = vmatpush1.bf16.msra.mxu0 %v5012
    %5387 = vmatprep.subr.bf16.mxu0 %v5010
    %5388 = vmatpush1.bf16.msra.mxu0 %v5009
    %5389 = vmatprep.subr.bf16.mxu0 %v5007
    %5390 = vmatpush1.bf16.msra.mxu0 %v5006
    %5391 = vmatprep.subr.bf16.mxu0 %v5004
    %5392 = vmatpush1.bf16.msra.mxu0 %v5003
    %5393 = vmatprep.subr.bf16.mxu0 %v5001
    %5394 = vmatpush1.bf16.msra.mxu0 %v5000
    %5395 = vmatprep.subr.bf16.mxu0 %v5046
    %5396 = vmatpush2.bf16.msra.mxu0 %v5045
    %5397 = vmatprep.subr.bf16.mxu0 %v5043
    %5398 = vmatpush2.bf16.msra.mxu0 %v5042
    %5399 = vmatprep.subr.bf16.mxu0 %v5040
    %5400 = vmatpush2.bf16.msra.mxu0 %v5039
    %5401 = vmatprep.subr.bf16.mxu0 %v5037
    %5402 = vmatpush2.bf16.msra.mxu0 %v5036
    %5403 = vmatprep.subr.bf16.mxu0 %v5034
    %5404 = vmatpush2.bf16.msra.mxu0 %v5033
    %5405 = vmatprep.subr.bf16.mxu0 %v5031
    %5406 = vmatpush2.bf16.msra.mxu0 %v5030
    %5407 = vmatprep.subr.bf16.mxu0 %v5028
    %5408 = vmatpush2.bf16.msra.mxu0 %v5027
    %5409 = vmatprep.subr.bf16.mxu0 %v5025
    %5410 = vmatpush2.bf16.msra.mxu0 %v5024
    %5411 = vmatprep.mubr.bf16.mxu0 %v4034
    %5412 = vmatmul.mubr.bf16.gmra.mxu0 %v4033
    %v5413 = vpop.f32.mrf.mxu0
    %v5414 = vadd.f32 %v5371, %v5413
    %v5415 = vpop.f32.mrf.mxu0
    %v5416 = vadd.f32 %v5373, %v5415
    %v5417 = vpop.f32.mrf.mxu0
    %v5418 = vadd.f32 %v5375, %v5417
    %v5419 = vpop.f32.mrf.mxu0
    %v5420 = vadd.f32 %v5377, %v5419
    %5421 = vdwg.mxu0
    %5422 = vmatprep.subr.bf16.mxu0 %v5070
    %5423 = vmatpush1.bf16.msra.mxu0 %v5069
    %5424 = vmatprep.subr.bf16.mxu0 %v5067
    %5425 = vmatpush1.bf16.msra.mxu0 %v5066
    %5426 = vmatprep.subr.bf16.mxu0 %v5064
    %5427 = vmatpush1.bf16.msra.mxu0 %v5063
    %5428 = vmatprep.subr.bf16.mxu0 %v5061
    %5429 = vmatpush1.bf16.msra.mxu0 %v5060
    %5430 = vmatprep.subr.bf16.mxu0 %v5058
    %5431 = vmatpush1.bf16.msra.mxu0 %v5057
    %5432 = vmatprep.subr.bf16.mxu0 %v5055
    %5433 = vmatpush1.bf16.msra.mxu0 %v5054
    %5434 = vmatprep.subr.bf16.mxu0 %v5052
    %5435 = vmatpush1.bf16.msra.mxu0 %v5051
    %5436 = vmatprep.subr.bf16.mxu0 %v5049
    %5437 = vmatpush1.bf16.msra.mxu0 %v5048
    %5438 = vmatprep.subr.bf16.mxu0 %v5094
    %5439 = vmatpush2.bf16.msra.mxu0 %v5093
    %5440 = vmatprep.subr.bf16.mxu0 %v5091
    %5441 = vmatpush2.bf16.msra.mxu0 %v5090
    %5442 = vmatprep.subr.bf16.mxu0 %v5088
    %5443 = vmatpush2.bf16.msra.mxu0 %v5087
    %5444 = vmatprep.subr.bf16.mxu0 %v5085
    %5445 = vmatpush2.bf16.msra.mxu0 %v5084
    %5446 = vmatprep.subr.bf16.mxu0 %v5082
    %5447 = vmatpush2.bf16.msra.mxu0 %v5081
    %5448 = vmatprep.subr.bf16.mxu0 %v5079
    %5449 = vmatpush2.bf16.msra.mxu0 %v5078
    %5450 = vmatprep.subr.bf16.mxu0 %v5076
    %5451 = vmatpush2.bf16.msra.mxu0 %v5075
    %5452 = vmatprep.subr.bf16.mxu0 %v5073
    %5453 = vmatpush2.bf16.msra.mxu0 %v5072
    %5454 = vmatprep.mubr.bf16.mxu0 %v4036
    %5455 = vmatmul.mubr.bf16.gmra.mxu0 %v4035
    %v5456 = vpop.f32.mrf.mxu0
    %v5457 = vadd.f32 %v5414, %v5456
    %v5458 = vpop.f32.mrf.mxu0
    %v5459 = vadd.f32 %v5416, %v5458
    %v5460 = vpop.f32.mrf.mxu0
    %v5461 = vadd.f32 %v5418, %v5460
    %v5462 = vpop.f32.mrf.mxu0
    %v5463 = vadd.f32 %v5420, %v5462
    %5464 = vdwg.mxu0
    %5465 = vmatprep.subr.bf16.mxu0 %v5118
    %5466 = vmatpush1.bf16.msra.mxu0 %v5117
    %5467 = vmatprep.subr.bf16.mxu0 %v5115
    %5468 = vmatpush1.bf16.msra.mxu0 %v5114
    %5469 = vmatprep.subr.bf16.mxu0 %v5112
    %5470 = vmatpush1.bf16.msra.mxu0 %v5111
    %5471 = vmatprep.subr.bf16.mxu0 %v5109
    %5472 = vmatpush1.bf16.msra.mxu0 %v5108
    %5473 = vmatprep.subr.bf16.mxu0 %v5106
    %5474 = vmatpush1.bf16.msra.mxu0 %v5105
    %5475 = vmatprep.subr.bf16.mxu0 %v5103
    %5476 = vmatpush1.bf16.msra.mxu0 %v5102
    %5477 = vmatprep.subr.bf16.mxu0 %v5100
    %5478 = vmatpush1.bf16.msra.mxu0 %v5099
    %5479 = vmatprep.subr.bf16.mxu0 %v5097
    %5480 = vmatpush1.bf16.msra.mxu0 %v5096
    %5481 = vmatprep.subr.bf16.mxu0 %v5142
    %5482 = vmatpush2.bf16.msra.mxu0 %v5141
    %5483 = vmatprep.subr.bf16.mxu0 %v5139
    %5484 = vmatpush2.bf16.msra.mxu0 %v5138
    %5485 = vmatprep.subr.bf16.mxu0 %v5136
    %5486 = vmatpush2.bf16.msra.mxu0 %v5135
    %5487 = vmatprep.subr.bf16.mxu0 %v5133
    %5488 = vmatpush2.bf16.msra.mxu0 %v5132
    %5489 = vmatprep.subr.bf16.mxu0 %v5130
    %5490 = vmatpush2.bf16.msra.mxu0 %v5129
    %5491 = vmatprep.subr.bf16.mxu0 %v5127
    %5492 = vmatpush2.bf16.msra.mxu0 %v5126
    %5493 = vmatprep.subr.bf16.mxu0 %v5124
    %5494 = vmatpush2.bf16.msra.mxu0 %v5123
    %5495 = vmatprep.subr.bf16.mxu0 %v5121
    %5496 = vmatpush2.bf16.msra.mxu0 %v5120
    %5497 = vmatprep.mubr.bf16.mxu0 %v4038
    %5498 = vmatmul.mubr.bf16.gmra.mxu0 %v4037
    %v5499 = vpop.f32.mrf.mxu0
    %v5500 = vadd.f32 %v5457, %v5499
    %v5501 = vpop.f32.mrf.mxu0
    %v5502 = vadd.f32 %v5459, %v5501
    %v5503 = vpop.f32.mrf.mxu0
    %v5504 = vadd.f32 %v5461, %v5503
    %v5505 = vpop.f32.mrf.mxu0
    %v5506 = vadd.f32 %v5463, %v5505
    %5507 = vdwg.mxu0
    %5508 = vmatprep.subr.bf16.mxu0 0
    %5509 = vmatpush1.bf16.msra.mxu0 %v4975
    %5510 = vmatprep.subr.bf16.mxu0 0
    %5511 = vmatpush1.bf16.msra.mxu0 %v4972
    %5512 = vmatprep.subr.bf16.mxu0 0
    %5513 = vmatpush1.bf16.msra.mxu0 %v4969
    %5514 = vmatprep.subr.bf16.mxu0 0
    %5515 = vmatpush1.bf16.msra.mxu0 %v4966
    %5516 = vmatprep.subr.bf16.mxu0 0
    %5517 = vmatpush1.bf16.msra.mxu0 %v4963
    %5518 = vmatprep.subr.bf16.mxu0 0
    %5519 = vmatpush1.bf16.msra.mxu0 %v4960
    %5520 = vmatprep.subr.bf16.mxu0 0
    %5521 = vmatpush1.bf16.msra.mxu0 %v4957
    %5522 = vmatprep.subr.bf16.mxu0 0
    %5523 = vmatpush1.bf16.msra.mxu0 %v4954
    %5524 = vmatprep.subr.bf16.mxu0 0
    %5525 = vmatpush2.bf16.msra.mxu0 %v4999
    %5526 = vmatprep.subr.bf16.mxu0 0
    %5527 = vmatpush2.bf16.msra.mxu0 %v4996
    %5528 = vmatprep.subr.bf16.mxu0 0
    %5529 = vmatpush2.bf16.msra.mxu0 %v4993
    %5530 = vmatprep.subr.bf16.mxu0 0
    %5531 = vmatpush2.bf16.msra.mxu0 %v4990
    %5532 = vmatprep.subr.bf16.mxu0 0
    %5533 = vmatpush2.bf16.msra.mxu0 %v4987
    %5534 = vmatprep.subr.bf16.mxu0 0
    %5535 = vmatpush2.bf16.msra.mxu0 %v4984
    %5536 = vmatprep.subr.bf16.mxu0 0
    %5537 = vmatpush2.bf16.msra.mxu0 %v4981
    %5538 = vmatprep.subr.bf16.mxu0 0
    %5539 = vmatpush2.bf16.msra.mxu0 %v4978
    %5540 = vmatprep.mubr.bf16.mxu0 %v4032
    %5541 = vmatmul.mubr.bf16.gmra.mxu0 %v4031
    %v5542 = vpop.f32.mrf.mxu0
    %v5543 = vadd.f32 %v4308, %v5542
    %v5544 = vpop.f32.mrf.mxu0
    %v5545 = vpop.f32.mrf.mxu0
    %v5546 = vadd.f32 %v4308, %v5545
    %v5547 = vpop.f32.mrf.mxu0
    %5548 = vdwg.mxu0
    %5549 = vmatprep.subr.bf16.mxu0 0
    %5550 = vmatpush1.bf16.msra.mxu0 %v5023
    %5551 = vmatprep.subr.bf16.mxu0 0
    %5552 = vmatpush1.bf16.msra.mxu0 %v5020
    %5553 = vmatprep.subr.bf16.mxu0 0
    %5554 = vmatpush1.bf16.msra.mxu0 %v5017
    %5555 = vmatprep.subr.bf16.mxu0 0
    %5556 = vmatpush1.bf16.msra.mxu0 %v5014
    %5557 = vmatprep.subr.bf16.mxu0 0
    %5558 = vmatpush1.bf16.msra.mxu0 %v5011
    %5559 = vmatprep.subr.bf16.mxu0 0
    %5560 = vmatpush1.bf16.msra.mxu0 %v5008
    %5561 = vmatprep.subr.bf16.mxu0 0
    %5562 = vmatpush1.bf16.msra.mxu0 %v5005
    %5563 = vmatprep.subr.bf16.mxu0 0
    %5564 = vmatpush1.bf16.msra.mxu0 %v5002
    %5565 = vmatprep.subr.bf16.mxu0 0
    %5566 = vmatpush2.bf16.msra.mxu0 %v5047
    %5567 = vmatprep.subr.bf16.mxu0 0
    %5568 = vmatpush2.bf16.msra.mxu0 %v5044
    %5569 = vmatprep.subr.bf16.mxu0 0
    %5570 = vmatpush2.bf16.msra.mxu0 %v5041
    %5571 = vmatprep.subr.bf16.mxu0 0
    %5572 = vmatpush2.bf16.msra.mxu0 %v5038
    %5573 = vmatprep.subr.bf16.mxu0 0
    %5574 = vmatpush2.bf16.msra.mxu0 %v5035
    %5575 = vmatprep.subr.bf16.mxu0 0
    %5576 = vmatpush2.bf16.msra.mxu0 %v5032
    %5577 = vmatprep.subr.bf16.mxu0 0
    %5578 = vmatpush2.bf16.msra.mxu0 %v5029
    %5579 = vmatprep.subr.bf16.mxu0 0
    %5580 = vmatpush2.bf16.msra.mxu0 %v5026
    %5581 = vmatprep.mubr.bf16.mxu0 %v4034
    %5582 = vmatmul.mubr.bf16.gmra.mxu0 %v4033
    %v5583 = vpop.f32.mrf.mxu0
    %v5584 = vadd.f32 %v5543, %v5583
    %v5585 = vpop.f32.mrf.mxu0
    %v5586 = vpop.f32.mrf.mxu0
    %v5587 = vadd.f32 %v5546, %v5586
    %v5588 = vpop.f32.mrf.mxu0
    %5589 = vdwg.mxu0
    %5590 = vmatprep.subr.bf16.mxu0 0
    %5591 = vmatpush1.bf16.msra.mxu0 %v5071
    %5592 = vmatprep.subr.bf16.mxu0 0
    %5593 = vmatpush1.bf16.msra.mxu0 %v5068
    %5594 = vmatprep.subr.bf16.mxu0 0
    %5595 = vmatpush1.bf16.msra.mxu0 %v5065
    %5596 = vmatprep.subr.bf16.mxu0 0
    %5597 = vmatpush1.bf16.msra.mxu0 %v5062
    %5598 = vmatprep.subr.bf16.mxu0 0
    %5599 = vmatpush1.bf16.msra.mxu0 %v5059
    %5600 = vmatprep.subr.bf16.mxu0 0
    %5601 = vmatpush1.bf16.msra.mxu0 %v5056
    %5602 = vmatprep.subr.bf16.mxu0 0
    %5603 = vmatpush1.bf16.msra.mxu0 %v5053
    %5604 = vmatprep.subr.bf16.mxu0 0
    %5605 = vmatpush1.bf16.msra.mxu0 %v5050
    %5606 = vmatprep.subr.bf16.mxu0 0
    %5607 = vmatpush2.bf16.msra.mxu0 %v5095
    %5608 = vmatprep.subr.bf16.mxu0 0
    %5609 = vmatpush2.bf16.msra.mxu0 %v5092
    %5610 = vmatprep.subr.bf16.mxu0 0
    %5611 = vmatpush2.bf16.msra.mxu0 %v5089
    %5612 = vmatprep.subr.bf16.mxu0 0
    %5613 = vmatpush2.bf16.msra.mxu0 %v5086
    %5614 = vmatprep.subr.bf16.mxu0 0
    %5615 = vmatpush2.bf16.msra.mxu0 %v5083
    %5616 = vmatprep.subr.bf16.mxu0 0
    %5617 = vmatpush2.bf16.msra.mxu0 %v5080
    %5618 = vmatprep.subr.bf16.mxu0 0
    %5619 = vmatpush2.bf16.msra.mxu0 %v5077
    %5620 = vmatprep.subr.bf16.mxu0 0
    %5621 = vmatpush2.bf16.msra.mxu0 %v5074
    %5622 = vmatprep.mubr.bf16.mxu0 %v4036
    %5623 = vmatmul.mubr.bf16.gmra.mxu0 %v4035
    %v5624 = vpop.f32.mrf.mxu0
    %v5625 = vadd.f32 %v5584, %v5624
    %v5626 = vpop.f32.mrf.mxu0
    %v5627 = vpop.f32.mrf.mxu0
    %v5628 = vadd.f32 %v5587, %v5627
    %v5629 = vpop.f32.mrf.mxu0
    %5630 = vdwg.mxu0
    %5631 = vmatprep.subr.bf16.mxu0 0
    %5632 = vmatpush1.bf16.msra.mxu0 %v5119
    %5633 = vmatprep.subr.bf16.mxu0 0
    %5634 = vmatpush1.bf16.msra.mxu0 %v5116
    %5635 = vmatprep.subr.bf16.mxu0 0
    %5636 = vmatpush1.bf16.msra.mxu0 %v5113
    %5637 = vmatprep.subr.bf16.mxu0 0
    %5638 = vmatpush1.bf16.msra.mxu0 %v5110
    %5639 = vmatprep.subr.bf16.mxu0 0
    %5640 = vmatpush1.bf16.msra.mxu0 %v5107
    %5641 = vmatprep.subr.bf16.mxu0 0
    %5642 = vmatpush1.bf16.msra.mxu0 %v5104
    %5643 = vmatprep.subr.bf16.mxu0 0
    %5644 = vmatpush1.bf16.msra.mxu0 %v5101
    %5645 = vmatprep.subr.bf16.mxu0 0
    %5646 = vmatpush1.bf16.msra.mxu0 %v5098
    %5647 = vmatprep.subr.bf16.mxu0 0
    %5648 = vmatpush2.bf16.msra.mxu0 %v5143
    %5649 = vmatprep.subr.bf16.mxu0 0
    %5650 = vmatpush2.bf16.msra.mxu0 %v5140
    %5651 = vmatprep.subr.bf16.mxu0 0
    %5652 = vmatpush2.bf16.msra.mxu0 %v5137
    %5653 = vmatprep.subr.bf16.mxu0 0
    %5654 = vmatpush2.bf16.msra.mxu0 %v5134
    %5655 = vmatprep.subr.bf16.mxu0 0
    %5656 = vmatpush2.bf16.msra.mxu0 %v5131
    %5657 = vmatprep.subr.bf16.mxu0 0
    %5658 = vmatpush2.bf16.msra.mxu0 %v5128
    %5659 = vmatprep.subr.bf16.mxu0 0
    %5660 = vmatpush2.bf16.msra.mxu0 %v5125
    %5661 = vmatprep.subr.bf16.mxu0 0
    %5662 = vmatpush2.bf16.msra.mxu0 %v5122
    %5663 = vmatprep.mubr.bf16.mxu0 %v4038
    %5664 = vmatmul.mubr.bf16.gmra.mxu0 %v4037
    %v5665 = vpop.f32.mrf.mxu0
    %v5666 = vadd.f32 %v5625, %v5665
    %v5667 = vpop.f32.mrf.mxu0
    %v5668 = vpop.f32.mrf.mxu0
    %v5669 = vadd.f32 %v5628, %v5668
    %v5670 = vpop.f32.mrf.mxu0
    %5671 = vdwg.mxu0
    %v5672 = vmul.f32 %v5500, 0.5
    %v5673 = vmul.f32 %v5502, 0.5
    %v5674 = vmul.f32 %v5666, 0.5
    %v5675 = vmul.f32 %v5504, 0.5
    %v5676 = vmul.f32 %v5506, 0.5
    %v5677 = vmul.f32 %v5669, 0.5
    %v5678 = vtanh.pop %v5672
    %v5679 = vtanh.pop %v5673
    %v5680 = vtanh.pop %v5674
    %v5681 = vtanh.pop %v5675
    %v5682 = vtanh.pop %v5676
    %v5683 = vtanh.pop %v5677
    %v5684 = vadd.f32 %v5678, 1.0
    %v5685 = vadd.f32 %v5679, 1.0
    %v5686 = vadd.f32 %v5680, 1.0
    %v5687 = vadd.f32 %v5681, 1.0
    %v5688 = vadd.f32 %v5682, 1.0
    %v5689 = vadd.f32 %v5683, 1.0
    %v5690 = vmul.f32 %v5684, 0.5
    %v5691 = vmul.f32 %v5685, 0.5
    %v5692 = vmul.f32 %v5686, 0.5
    %v5693 = vmul.f32 %v5687, 0.5
    %v5694 = vmul.f32 %v5688, 0.5
    %v5695 = vmul.f32 %v5689, 0.5
    %v5696 = vpack.c.bf16 %v5693, %v5690
    %v5697 = vpack.c.bf16 %v5694, %v5691
    %v5698 = vpack.c.bf16 %v5695, %v5692
    %v5699 = vld [vmem:[#allocation11] sm:$0xf]
    %v5700 = vld [vmem:[#allocation11 + $0x4] sm:$0xf]
    %v5701 = vld [vmem:[#allocation11 + $0x8] sm:$0xf]
    %v5702 = vld [vmem:[#allocation11 + $0xc] sm:$0xf]
    %v5703 = vld [vmem:[#allocation11 + $0x10] sm:$0xf]
    %v5704 = vld [vmem:[#allocation11 + $0x14] sm:$0xf]
    %v5705 = vld [vmem:[#allocation11 + $0x18] sm:$0xf]
    %v5706 = vld [vmem:[#allocation11 + $0x1c] sm:$0xf]
    %v5707 = vld [vmem:[#allocation11 + $0x20] sm:$0xf]
    %v5708 = vld [vmem:[#allocation11 + $0x24] sm:$0xf]
    %v5709 = vld [vmem:[#allocation11 + $0x28] sm:$0xf]
    %v5710 = vld [vmem:[#allocation11 + $0x2c] sm:$0xf]
    %v5711 = vld [vmem:[#allocation11 + $0x30] sm:$0xf]
    %v5712 = vld [vmem:[#allocation11 + $0x34] sm:$0xf]
    %v5713 = vld [vmem:[#allocation11 + $0x38] sm:$0xf]
    %v5714 = vld [vmem:[#allocation11 + $0x3c] sm:$0xf]
    %v5715 = vld [vmem:[#allocation11 + $0x40] sm:$0xf]
    %v5716 = vld [vmem:[#allocation11 + $0x44] sm:$0xf]
    %v5717 = vld [vmem:[#allocation11 + $0x48] sm:$0xf]
    %v5718 = vld [vmem:[#allocation11 + $0x4c] sm:$0xf]
    %v5719 = vld [vmem:[#allocation11 + $0x50] sm:$0xf]
    %v5720 = vld [vmem:[#allocation11 + $0x54] sm:$0xf]
    %v5721 = vld [vmem:[#allocation11 + $0x58] sm:$0xf]
    %v5722 = vld [vmem:[#allocation11 + $0x5c] sm:$0xf]
    %v5723 = vld [vmem:[#allocation11 + $0x60] sm:$0xf]
    %v5724 = vld [vmem:[#allocation11 + $0x64] sm:$0xf]
    %v5725 = vld [vmem:[#allocation11 + $0x68] sm:$0xf]
    %v5726 = vld [vmem:[#allocation11 + $0x6c] sm:$0xf]
    %v5727 = vld [vmem:[#allocation11 + $0x70] sm:$0xf]
    %v5728 = vld [vmem:[#allocation11 + $0x74] sm:$0xf]
    %v5729 = vld [vmem:[#allocation11 + $0x78] sm:$0xf]
    %v5730 = vld [vmem:[#allocation11 + $0x7c] sm:$0xf]
    %v5731 = vld [vmem:[#allocation11 + $0x80] sm:$0xf]
    %v5732 = vld [vmem:[#allocation11 + $0x84] sm:$0xf]
    %v5733 = vld [vmem:[#allocation11 + $0x88] sm:$0xf]
    %v5734 = vld [vmem:[#allocation11 + $0x8c] sm:$0xf]
    %v5735 = vld [vmem:[#allocation11 + $0x90] sm:$0xf]
    %v5736 = vld [vmem:[#allocation11 + $0x94] sm:$0xf]
    %v5737 = vld [vmem:[#allocation11 + $0x98] sm:$0xf]
    %v5738 = vld [vmem:[#allocation11 + $0x9c] sm:$0xf]
    %v5739 = vld [vmem:[#allocation11 + $0xa0] sm:$0xf]
    %v5740 = vld [vmem:[#allocation11 + $0xa4] sm:$0xf]
    %v5741 = vld [vmem:[#allocation11 + $0xa8] sm:$0xf]
    %v5742 = vld [vmem:[#allocation11 + $0xac] sm:$0xf]
    %v5743 = vld [vmem:[#allocation11 + $0xb0] sm:$0xf]
    %v5744 = vld [vmem:[#allocation11 + $0xb4] sm:$0xf]
    %v5745 = vld [vmem:[#allocation11 + $0xb8] sm:$0xf]
    %v5746 = vld [vmem:[#allocation11 + $0xbc] sm:$0xf]
    %v5747 = vld [vmem:[#allocation13] sm:$0x1]
    %v5749 = vlaneseq
    %v5750 = vshrl.u32 %v5749, 7
    %v5751 = vsub.s32 0, %v5750
    %v5752 = vrot.slane %v5747, %v5751
    %v5802 = vunpack.c.l.b16 %v5699
    %v5803 = vunpack.c.l.b16 %v5700
    %v5804 = vunpack.c.l.b16 %v5701
    %v5805 = vunpack.c.l.b16 %v5702
    %v5806 = vunpack.c.l.b16 %v5703
    %v5807 = vunpack.c.l.b16 %v5704
    %v5808 = vunpack.c.l.b16 %v5705
    %v5809 = vunpack.c.l.b16 %v5706
    %v5810 = vunpack.c.l.b16 %v5707
    %v5811 = vunpack.c.l.b16 %v5708
    %v5812 = vunpack.c.l.b16 %v5709
    %v5813 = vunpack.c.l.b16 %v5710
    %v5814 = vunpack.c.l.b16 %v5711
    %v5815 = vunpack.c.l.b16 %v5712
    %v5816 = vunpack.c.l.b16 %v5713
    %v5817 = vunpack.c.l.b16 %v5714
    %v5818 = vunpack.c.l.b16 %v5715
    %v5819 = vunpack.c.l.b16 %v5716
    %v5820 = vunpack.c.l.b16 %v5717
    %v5821 = vunpack.c.l.b16 %v5718
    %v5822 = vunpack.c.l.b16 %v5719
    %v5823 = vunpack.c.l.b16 %v5720
    %v5824 = vunpack.c.l.b16 %v5721
    %v5825 = vunpack.c.l.b16 %v5722
    %v5826 = vunpack.c.l.b16 %v5723
    %v5827 = vunpack.c.l.b16 %v5724
    %v5828 = vunpack.c.l.b16 %v5725
    %v5829 = vunpack.c.l.b16 %v5726
    %v5830 = vunpack.c.l.b16 %v5727
    %v5831 = vunpack.c.l.b16 %v5728
    %v5832 = vunpack.c.l.b16 %v5729
    %v5833 = vunpack.c.l.b16 %v5730
    %v5834 = vunpack.c.l.b16 %v5731
    %v5835 = vunpack.c.l.b16 %v5732
    %v5836 = vunpack.c.l.b16 %v5733
    %v5837 = vunpack.c.l.b16 %v5734
    %v5838 = vunpack.c.l.b16 %v5735
    %v5839 = vunpack.c.l.b16 %v5736
    %v5840 = vunpack.c.l.b16 %v5737
    %v5841 = vunpack.c.l.b16 %v5738
    %v5842 = vunpack.c.l.b16 %v5739
    %v5843 = vunpack.c.l.b16 %v5740
    %v5844 = vunpack.c.l.b16 %v5741
    %v5845 = vunpack.c.l.b16 %v5742
    %v5846 = vunpack.c.l.b16 %v5743
    %v5847 = vunpack.c.l.b16 %v5744
    %v5848 = vunpack.c.l.b16 %v5745
    %v5849 = vunpack.c.l.b16 %v5746
    %v5850 = vpack.c.b16 %v5803, %v5802
    %v5851 = vpack.c.b16 %v5805, %v5804
    %v5852 = vpack.c.b16 %v5807, %v5806
    %v5853 = vpack.c.b16 %v5809, %v5808
    %v5854 = vpack.c.b16 %v5811, %v5810
    %v5855 = vpack.c.b16 %v5813, %v5812
    %v5856 = vpack.c.b16 %v5815, %v5814
    %v5857 = vpack.c.b16 %v5817, %v5816
    %v5858 = vpack.c.b16 %v5819, %v5818
    %v5859 = vpack.c.b16 %v5821, %v5820
    %v5860 = vpack.c.b16 %v5823, %v5822
    %v5861 = vpack.c.b16 %v5825, %v5824
    %v5862 = vpack.c.b16 %v5827, %v5826
    %v5863 = vpack.c.b16 %v5829, %v5828
    %v5864 = vpack.c.b16 %v5831, %v5830
    %v5865 = vpack.c.b16 %v5833, %v5832
    %v5866 = vpack.c.b16 %v5835, %v5834
    %v5867 = vpack.c.b16 %v5837, %v5836
    %v5868 = vpack.c.b16 %v5839, %v5838
    %v5869 = vpack.c.b16 %v5841, %v5840
    %v5870 = vpack.c.b16 %v5843, %v5842
    %v5871 = vpack.c.b16 %v5845, %v5844
    %v5872 = vpack.c.b16 %v5847, %v5846
    %v5873 = vpack.c.b16 %v5849, %v5848
    %5898 = vmatprep.subr.bf16.mxu0 0
    %5899 = vmatpush1.bf16.msra.mxu0 %v5857
    %5900 = vmatprep.subr.bf16.mxu0 0
    %5901 = vmatpush1.bf16.msra.mxu0 %v5856
    %5902 = vmatprep.subr.bf16.mxu0 0
    %5903 = vmatpush1.bf16.msra.mxu0 %v5855
    %5904 = vmatprep.subr.bf16.mxu0 0
    %5905 = vmatpush1.bf16.msra.mxu0 %v5854
    %5906 = vmatprep.subr.bf16.mxu0 0
    %5907 = vmatpush1.bf16.msra.mxu0 %v5853
    %5908 = vmatprep.subr.bf16.mxu0 0
    %5909 = vmatpush1.bf16.msra.mxu0 %v5852
    %5910 = vmatprep.subr.bf16.mxu0 0
    %5911 = vmatpush1.bf16.msra.mxu0 %v5851
    %5912 = vmatprep.subr.bf16.mxu0 0
    %5913 = vmatpush1.bf16.msra.mxu0 %v5850
    %5914 = vmatprep.subr.bf16.mxu0 0
    %5915 = vmatpush2.bf16.msra.mxu0 %v5865
    %5916 = vmatprep.subr.bf16.mxu0 0
    %5917 = vmatpush2.bf16.msra.mxu0 %v5864
    %5918 = vmatprep.subr.bf16.mxu0 0
    %5919 = vmatpush2.bf16.msra.mxu0 %v5863
    %5920 = vmatprep.subr.bf16.mxu0 0
    %5921 = vmatpush2.bf16.msra.mxu0 %v5862
    %5922 = vmatprep.subr.bf16.mxu0 0
    %5923 = vmatpush2.bf16.msra.mxu0 %v5861
    %5924 = vmatprep.subr.bf16.mxu0 0
    %5925 = vmatpush2.bf16.msra.mxu0 %v5860
    %5926 = vmatprep.subr.bf16.mxu0 0
    %5927 = vmatpush2.bf16.msra.mxu0 %v5859
    %5928 = vmatprep.subr.bf16.mxu0 0
    %5929 = vmatpush2.bf16.msra.mxu0 %v5858
    %5930 = vmatprep.mubr.bf16.mxu0 %v5697
    %5931 = vmatmul.mubr.bf16.gmra.mxu0 %v5696
    %v5932 = vpop.f32.mrf.mxu0
    %v5933 = vadd.f32 %v5752, %v5932
    %v5934 = vpop.f32.mrf.mxu0
    %v5935 = vpop.f32.mrf.mxu0
    %v5936 = vadd.f32 %v5752, %v5935
    %v5937 = vpop.f32.mrf.mxu0
    %5938 = vdwg.mxu0
    %5939 = vmatprep.subr.bf16.mxu0 0
    %5940 = vmatpush1.bf16.msra.mxu0 %v5873
    %5941 = vmatprep.subr.bf16.mxu0 0
    %5942 = vmatpush1.bf16.msra.mxu0 %v5872
    %5943 = vmatprep.subr.bf16.mxu0 0
    %5944 = vmatpush1.bf16.msra.mxu0 %v5871
    %5945 = vmatprep.subr.bf16.mxu0 0
    %5946 = vmatpush1.bf16.msra.mxu0 %v5870
    %5947 = vmatprep.subr.bf16.mxu0 0
    %5948 = vmatpush1.bf16.msra.mxu0 %v5869
    %5949 = vmatprep.subr.bf16.mxu0 0
    %5950 = vmatpush1.bf16.msra.mxu0 %v5868
    %5951 = vmatprep.subr.bf16.mxu0 0
    %5952 = vmatpush1.bf16.msra.mxu0 %v5867
    %5953 = vmatprep.subr.bf16.mxu0 0
    %5954 = vmatpush1.bf16.msra.mxu0 %v5866
    %5955 = vmatprep.subr.bf16.mxu0 0
    %5956 = vmatpush2.bf16.msra.mxu0 0
    %5957 = vmatprep.subr.bf16.mxu0 0
    %5958 = vmatpush2.bf16.msra.mxu0 0
    %5959 = vmatprep.subr.bf16.mxu0 0
    %5960 = vmatpush2.bf16.msra.mxu0 0
    %5961 = vmatprep.subr.bf16.mxu0 0
    %5962 = vmatpush2.bf16.msra.mxu0 0
    %5963 = vmatprep.subr.bf16.mxu0 0
    %5964 = vmatpush2.bf16.msra.mxu0 0
    %5965 = vmatprep.subr.bf16.mxu0 0
    %5966 = vmatpush2.bf16.msra.mxu0 0
    %5967 = vmatprep.subr.bf16.mxu0 0
    %5968 = vmatpush2.bf16.msra.mxu0 0
    %5969 = vmatprep.subr.bf16.mxu0 0
    %5970 = vmatpush2.bf16.msra.mxu0 0
    %5971 = vmatprep.mubr.bf16.mxu0 0
    %5972 = vmatmul.mubr.bf16.gmra.mxu0 %v5698
    %v5973 = vpop.f32.mrf.mxu0
    %v5974 = vadd.f32 %v5933, %v5973
    %v5975 = vpop.f32.mrf.mxu0
    %v5976 = vpop.f32.mrf.mxu0
    %v5977 = vadd.f32 %v5936, %v5976
    %v5978 = vpop.f32.mrf.mxu0
    %5979 = vdwg.mxu0
    %5980 = vst [vmem:[#allocation14] sm:$0xff] %v5974
    %5981 = vst [vmem:[#allocation14 + $0x8] sm:$0xff] %v5977
    // Predicated region
    $region58: #{tpu_custom_call.1} parent=1 // pred_check
      _
    $region59: #{tpu_custom_call.1} parent=1 // pred_check_branch
      %5983 = sbr.rel (0) target = $region61
    $region60: #{tpu_custom_call.1} parent=1 // pred_region
      %s5985 = ssub.s32 256, 256
      %5986 = vsyncadd [#allocation4], %s5985
      %s5987 = sshll.u32 [#allocation14], 4
      %s5988 = int_to_ptr.vmem [resolvable:$true] %s5987
      %5993 = dma.vmem_to_hbm [thread:$0]  %s5988, 256, %s7, [#allocation4], 128, 128, 8
    $region61: #{tpu_custom_call.1} parent=1 // pred_fallthru
      _
    // Predicated region
    $region62: #{tpu_custom_call.1} parent=1 // pred_check
      _
    $region63: #{tpu_custom_call.1} parent=1 // pred_check_branch
      %5995 = sbr.rel (0) target = $region65
    $region64: #{tpu_custom_call.1} parent=1 // pred_region
      %5996 = dma.done [#allocation4], 256
    $region65: #{tpu_custom_call.1} parent=1 // pred_fallthru
      _
    %5997 = vsyncpa [#allocation3], 1
    %5998 = vsyncpa [#allocation6], 1
    %5999 = vsyncpa [#allocation9], 1
    %6000 = vsyncpa [#allocation12], 1
    %6001 = vsyncpa [#allocation4], 1

</llo_original>
